<compile_context>
chip_gen: v7x
topology: tpu7x:2x2x1
jax: 0.10.0
libtpu: 0.0.40
codegen_flags: <defaults>
</compile_context>

<pallas_src>
import functools
import math

import jax
import jax.numpy as jnp
from jax import lax
from jax.experimental import pallas as pl
from jax.experimental.pallas import tpu as pltpu

V_THRESHOLD = 1.0   # global_thres
BN_EPS = 1e-5
KS = 3              # conv kernel size
PAD_L = 128         # left halo of the flat spike scratch (lane-aligned center)
PAD_R = 128         # right halo (needs >= W+1; 128 keeps total length 128-aligned)


# ------------------------------------------------------------------
# Fused kernel: IF neuron + (nearest-2x upsample o 3x3 conv) + affine
# ------------------------------------------------------------------
def _fused_kernel(x_ref, w_ref, shift_ref, cmask_ref, scat_ref, o_ref,
                  v_ref, sext_ref, win_ref, *, C, H, W, B_tile, v_threshold):
    """One (b_block, t) grid step.

    x_ref     : (1, B_tile, C, HW)   input currents for this (t, b-block)
    w_ref     : (T, 4C, 9C)          merged parity conv weights, TSM/BN scale folded
    shift_ref : (T, C, 1)            per-(t, c) affine shift (bias/BN folded)
    cmask_ref : (3, 1, HW)           column-wrap masks for flat shifted windows
    scat_ref  : (4, HW, 4HW)         0/1 parity->spatial scatter matrices
    o_ref     : (1, B_tile, C, 4HW)  fully interleaved output rows (C, (2H)*(2W))
    v_ref     : (B_tile, C, HW)      membrane potential carry (VMEM scratch)
    sext_ref  : (C, PAD_L+HW+PAD_R)  zero-extended flat spike map (VMEM scratch)
    win_ref   : (9C, HW)             stacked shifted windows (VMEM scratch)
    """
    t = pl.program_id(1)
    HW = H * W

    @pl.when(t == 0)
    def _():
        v_ref[...] = jnp.zeros_like(v_ref)        # reset carry for this b-block
        sext_ref[...] = jnp.zeros_like(sext_ref)  # zero halo; stays zero afterwards

    # ---- IF neuron (spikingjelly IFNode, hard reset to 0), whole block ----
    h = v_ref[...] + x_ref[0]                               # (B_tile, C, HW)
    spike = (h >= v_threshold).astype(jnp.float32)
    v_ref[...] = jnp.where(spike > 0.0, 0.0, h)

    w_t = w_ref[t]                                          # (4C, 9C)
    shift_t = shift_ref[t]                                  # (C, 1)

    for b in range(B_tile):
        # spikes into the zero-extended flat scratch (store aligned at lane 128)
        sext_ref[:, PAD_L:PAD_L + HW] = spike[b]

        # 9 shifted windows s[i+r, j+c] stacked along the contraction dim (9C, HW)
        for widx in range(9):
            r, c = widx // 3 - 1, widx % 3 - 1
            s0 = PAD_L + r * W + c
            wv = sext_ref[:, s0:s0 + HW]                    # (C, HW)
            if c != 0:
                wv = wv * cmask_ref[c + 1]                  # zero column wrap-around
            win_ref[widx * C:(widx + 1) * C, :] = wv

        # ---- one MXU dot for all 4 output parities (scale pre-folded into w_t) ----
        acc = jnp.dot(w_t, win_ref[...],
                      preferred_element_type=jnp.float32)   # (4C, HW)

        # ---- parity -> spatial scatter (0/1 matrices): interleaved (C, 4HW) ----
        res = jnp.dot(acc[0:C], scat_ref[0], preferred_element_type=jnp.float32)
        for p in range(1, 4):
            res = res + jnp.dot(acc[p * C:(p + 1) * C], scat_ref[p],
                                preferred_element_type=jnp.float32)

        # fused (conv + bias) * tsmp[t] then BN -> per-(t, c) affine shift
        o_ref[0, b] = res + shift_t                         # lane-dense store


# ------------------------------------------------------------------
# Host-side constant builders
# ------------------------------------------------------------------
def _effective_subkernels(w_oihw):
    """Collapse the 3x3 kernel applied to a nearest-2x input into 4 parity
    2x2 sub-kernels (adjacent taps hitting the same source pixel are summed)."""
    C_out, C_in, _, _ = w_oihw.shape
    taps = {0: [(0,), (1, 2)], 1: [(0, 1), (2,)]}   # taps[parity][a] -> dy (or dx) set
    ws = []
    for py in range(2):
        for px in range(2):
            for a in range(2):
                for bb in range(2):
                    acc = jnp.zeros((C_out, C_in), jnp.float32)
                    for dy in taps[py][a]:
                        for dx in taps[px][bb]:
                            acc = acc + w_oihw[:, :, dy, dx]
                    ws.append(acc)
    return jnp.stack(ws, axis=0)                    # (16, C_out, C_in)


def _merged_block_weight(w_oihw):
    """(4C, 9C) block weight: rows = (parity p=2*py+px, c_out),
    cols = (window widx=(r+1)*3+(c+1), c_in); unused window blocks are zero."""
    C = w_oihw.shape[0]
    weff = _effective_subkernels(w_oihw)
    blocks = [[jnp.zeros((C, C), jnp.float32) for _ in range(9)] for _ in range(4)]
    for py in range(2):
        for px in range(2):
            p = 2 * py + px
            for a in range(2):
                for bb in range(2):
                    r, c = py + a - 1, px + bb - 1
                    widx = (r + 1) * 3 + (c + 1)
                    blocks[p][widx] = weff[(p * 2 + a) * 2 + bb]
    rows = [jnp.concatenate(blocks[p], axis=1) for p in range(4)]
    return jnp.concatenate(rows, axis=0)            # (4C, 9C)


def _scatter_mats(H, W):
    """0/1 matrices S_p (HW, 4HW): S_p[k, n]=1 iff flat output position n is the
    parity-p image of flat source position k under nearest-2x upsampling."""
    HW = H * W
    k = jnp.arange(HW, dtype=jnp.int32)
    i, j = k // W, k % W
    mats = []
    for py in range(2):
        for px in range(2):
            n = (2 * i + py) * (2 * W) + 2 * j + px
            mats.append(jax.nn.one_hot(n, 4 * HW, dtype=jnp.float32))
    return jnp.stack(mats, axis=0)                  # (4, HW, 4HW)


# ------------------------------------------------------------------
# Forward wrapper
# ------------------------------------------------------------------
def _forward_impl(params, x, temb=None):
    # x: (T, B, C, H, W); temb is unused by the PyTorch forward (kept for parity)
    del temb
    T, B, C, H, W = x.shape
    HW = H * W
    assert W + 1 <= PAD_L and W + 1 <= PAD_R
    x4 = x.reshape(T, B, C, HW).astype(jnp.float32)           # free, lane-dense

    # conv weight merged per parity, with per-timestep TSM scale & BN scale folded
    wblk = _merged_block_weight(params["w_oihw"].astype(jnp.float32))   # (4C, 9C)
    rstd = 1.0 / jnp.sqrt(params["bn_var"] + BN_EPS)
    g = params["bn_gamma"] * rstd
    scale = params["tsmp"][:, None] * g[None, :]                        # (T, C)
    shift = (scale * params["bias"][None, :]
             + (params["bn_beta"] - g * params["bn_mean"])[None, :])    # (T, C)
    w_scaled = (jnp.tile(scale, (1, 4))[:, :, None] * wblk[None]
                ).astype(jnp.float32)                                   # (T, 4C, 9C)
    shift3 = shift.reshape(T, C, 1).astype(jnp.float32)

    # column-wrap masks for the flat shifted windows (index 0: c=-1, 2: c=+1)
    j = jnp.arange(HW, dtype=jnp.int32) % W
    cmask = jnp.stack([(j != 0), jnp.ones((HW,), jnp.bool_), (j != W - 1)],
                      axis=0).astype(jnp.float32).reshape(3, 1, HW)

    scat = _scatter_mats(H, W)                                          # (4, HW, 4HW)

    # keep a 2-way "parallel" axis for v7x megacore; fold the rest of B into the block
    NB = 2 if (B >= 2 and B % 2 == 0) else 1
    B_tile = B // NB

    kernel = functools.partial(_fused_kernel, C=C, H=H, W=W, B_tile=B_tile,
                               v_threshold=V_THRESHOLD)
    out = pl.pallas_call(
        kernel,
        out_shape=jax.ShapeDtypeStruct((T, B, C, 4 * HW), jnp.float32),
        grid_spec=pltpu.PrefetchScalarGridSpec(
            num_scalar_prefetch=0,
            grid=(NB, T),                    # b-blocks outer ("parallel"), t inner (carry)
            in_specs=[
                pl.BlockSpec((1, B_tile, C, HW), lambda b, t: (t, b, 0, 0)),
                pl.BlockSpec((T, 4 * C, 9 * C), lambda b, t: (0, 0, 0)),   # constant
                pl.BlockSpec((T, C, 1), lambda b, t: (0, 0, 0)),           # constant
                pl.BlockSpec((3, 1, HW), lambda b, t: (0, 0, 0)),          # constant
                pl.BlockSpec((4, HW, 4 * HW), lambda b, t: (0, 0, 0)),     # constant
            ],
            out_specs=pl.BlockSpec((1, B_tile, C, 4 * HW),
                                   lambda b, t: (t, b, 0, 0)),
            scratch_shapes=[
                pltpu.VMEM((B_tile, C, HW), jnp.float32),             # membrane potential
                pltpu.VMEM((C, PAD_L + HW + PAD_R), jnp.float32),     # zero-extended spikes
                pltpu.VMEM((9 * C, HW), jnp.float32),                 # stacked windows
            ],
        ),
        compiler_params=pltpu.CompilerParams(
            dimension_semantics=("parallel", "arbitrary"),
            vmem_limit_bytes=32 * 1024 * 1024),
    )(x4, w_scaled, shift3, cmask, scat)

    # stride-free reshape: (T,B,C,(2H)*(2W)) -> (T,B,C,2H,2W); no HBM transpose
    return out.reshape(T, B, C, 2 * H, 2 * W)


spk_upsample_forward = jax.jit(_forward_impl)


# ------------------------------------------------------------------
# Parameter init (deterministic, matches module __init__ shapes)
# ------------------------------------------------------------------
def init_params(key, in_ch, timestep):
    fan_in = in_ch * KS * KS
    fan_out = in_ch * KS * KS
    bound = math.sqrt(6.0 / (fan_in + fan_out))        # xavier_uniform_
    w_oihw = jax.random.uniform(key, (in_ch, in_ch, KS, KS),
                                minval=-bound, maxval=bound,
                                dtype=jnp.float32)
    return dict(
        w_oihw=w_oihw,
        bias=jnp.zeros((in_ch,), jnp.float32),          # init.zeros_
        tsmp=jnp.ones((timestep,), jnp.float32),        # torch.ones(T,1,1,1,1)
        bn_gamma=jnp.ones((in_ch,), jnp.float32),
        bn_beta=jnp.zeros((in_ch,), jnp.float32),
        bn_mean=jnp.zeros((in_ch,), jnp.float32),
        bn_var=jnp.ones((in_ch,), jnp.float32),
    )


# ------------------------------------------------------------------
# Pure-JAX reference (for verification)
# ------------------------------------------------------------------
def reference_forward(params, x):
    T, B, C, H, W = x.shape
    v = jnp.zeros((B, C, H, W), jnp.float32)
    spikes = []
    for _t in range(T):
        h = v + x[_t]
        s = (h >= V_THRESHOLD).astype(jnp.float32)
        v = jnp.where(s > 0, 0.0, h)
        spikes.append(s)
    s = jnp.stack(spikes, axis=0).reshape(T * B, C, H, W)
    s = jnp.repeat(jnp.repeat(s, 2, axis=-2), 2, axis=-1)
    y = lax.conv_general_dilated(
        s, params["w_oihw"], window_strides=(1, 1), padding=((1, 1), (1, 1)),
        dimension_numbers=("NCHW", "OIHW", "NCHW"),
        precision=lax.Precision.HIGHEST)
    y = y + params["bias"][None, :, None, None]
    y = y.reshape(T, B, C, 2 * H, 2 * W) * params["tsmp"][:, None, None, None, None]
    rstd = 1.0 / jnp.sqrt(params["bn_var"] + BN_EPS)
    y = ((params["bn_gamma"] * rstd)[None, None, :, None, None]
         * (y - params["bn_mean"][None, None, :, None, None])
         + params["bn_beta"][None, None, :, None, None])
    return y


if __name__ == "__main__":
    T, B, C, H, W = 4, 2, 4, 16, 16
    key = jax.random.PRNGKey(0)
    kx, kp, kt = jax.random.split(key, 3)
    x = jax.random.normal(kx, (T, B, C, H, W), dtype=jnp.float32)
    temb = jax.random.normal(kt, (B, 32), dtype=jnp.float32)  # unused by forward
    params = init_params(kp, C, T)

    out = jax.block_until_ready(spk_upsample_forward(params, x, temb))
    assert out.shape == (T, B, C, 2 * H, 2 * W), out.shape

    ref = jax.block_until_ready(reference_forward(params, x))
    err = float(jnp.max(jnp.abs(out - ref)))
    # margin covers possible reduced-precision MXU passes; real bugs are O(0.1+)
    assert err < 1e-2, err
    print("KERNEL_OK")
</pallas_src>

<mosaic_0001>
module attributes {stable_mosaic.version = 11 : i64} {
  func.func @_fused_kernel(%arg0: i32, %arg1: i32, %arg2: memref<1x1x4x256xf32, #tpu.memory_space<vmem>>, %arg3: memref<4x16x36xf32, #tpu.memory_space<vmem>>, %arg4: memref<4x4x1xf32, #tpu.memory_space<vmem>>, %arg5: memref<3x1x256xf32, #tpu.memory_space<vmem>>, %arg6: memref<4x256x1024xf32, #tpu.memory_space<vmem>>, %arg7: memref<1x1x4x1024xf32, #tpu.memory_space<vmem>>, %arg8: memref<1x4x256xf32, #tpu.memory_space<vmem>>, %arg9: memref<4x512xf32, #tpu.memory_space<vmem>>, %arg10: memref<36x256xf32, #tpu.memory_space<vmem>>) attributes {dimension_semantics = [#tpu.dimension_semantics<parallel>, #tpu.dimension_semantics<arbitrary>], iteration_bounds = array<i64: 2, 4>, scalar_prefetch = 0 : i64, scratch_operands = 3 : i64, tpu.core_type = #tpu.core_type<tc>, window_params = [{transform_indices = @transform_0, window_bounds = array<i64: 1, 1, 4, 256>}, {pipeline_mode = #tpu.pipeline_mode<synchronous>, transform_indices = @transform_1, window_bounds = array<i64: 4, 16, 36>}, {pipeline_mode = #tpu.pipeline_mode<synchronous>, transform_indices = @transform_2, window_bounds = array<i64: 4, 4, 1>}, {pipeline_mode = #tpu.pipeline_mode<synchronous>, transform_indices = @transform_3, window_bounds = array<i64: 3, 1, 256>}, {pipeline_mode = #tpu.pipeline_mode<synchronous>, transform_indices = @transform_4, window_bounds = array<i64: 4, 256, 1024>}, {transform_indices = @transform_5, window_bounds = array<i64: 1, 1, 4, 1024>}]} {
    %c0_i32 = arith.constant 0 : i32
    %0 = arith.cmpi eq, %arg1, %c0_i32 : i32
    %1 = arith.extui %0 : i1 to i32
    %c0_i32_0 = arith.constant 0 : i32
    %2 = arith.cmpi ne, %1, %c0_i32_0 : i32
    scf.if %2 {
      %cst_75 = arith.constant 0.000000e+00 : f32
      %92 = vector.broadcast %cst_75 : f32 to vector<1x4x256xf32>
      %c0_76 = arith.constant 0 : index
      %c0_77 = arith.constant 0 : index
      %c0_78 = arith.constant 0 : index
      %93 = vector.load %arg8[%c0_76, %c0_77, %c0_78] : memref<1x4x256xf32, #tpu.memory_space<vmem>>, vector<1x4x256xf32>
      tpu.vector_store %arg8[%c0_76, %c0_77, %c0_78], %92 {strides = array<i32>} : memref<1x4x256xf32, #tpu.memory_space<vmem>>, vector<1x4x256xf32>,
      %cst_79 = arith.constant 0.000000e+00 : f32
      %94 = vector.broadcast %cst_79 : f32 to vector<4x512xf32>
      %c0_80 = arith.constant 0 : index
      %c0_81 = arith.constant 0 : index
      %95 = vector.load %arg9[%c0_80, %c0_81] : memref<4x512xf32, #tpu.memory_space<vmem>>, vector<4x512xf32>
      tpu.vector_store %arg9[%c0_80, %c0_81], %94 {strides = array<i32>} : memref<4x512xf32, #tpu.memory_space<vmem>>, vector<4x512xf32>,
    } else {
    }
    %c0 = arith.constant 0 : index
    %c0_1 = arith.constant 0 : index
    %c0_2 = arith.constant 0 : index
    %3 = vector.load %arg8[%c0, %c0_1, %c0_2] : memref<1x4x256xf32, #tpu.memory_space<vmem>>, vector<1x4x256xf32>
    %c0_3 = arith.constant 0 : index
    %c0_4 = arith.constant 0 : index
    %c0_5 = arith.constant 0 : index
    %c0_6 = arith.constant 0 : index
    %4 = vector.load %arg2[%c0_3, %c0_4, %c0_5, %c0_6] : memref<1x1x4x256xf32, #tpu.memory_space<vmem>>, vector<1x1x4x256xf32>
    %5 = vector.shape_cast %4 : vector<1x1x4x256xf32> to vector<1x4x256xf32>
    %6 = arith.addf %3, %5 : vector<1x4x256xf32>
    %cst = arith.constant 1.000000e+00 : f32
    %7 = vector.broadcast %cst : f32 to vector<1x4x256xf32>
    %8 = arith.cmpf oge, %6, %7 : vector<1x4x256xf32>
    %9 = arith.extui %8 : vector<1x4x256xi1> to vector<1x4x256xi32>
    %10 = arith.sitofp %9 : vector<1x4x256xi32> to vector<1x4x256xf32>
    %cst_7 = arith.constant 0.000000e+00 : f32
    %11 = vector.broadcast %cst_7 : f32 to vector<1x4x256xf32>
    %12 = arith.cmpf ogt, %10, %11 : vector<1x4x256xf32>
    %cst_8 = arith.constant 0.000000e+00 : f32
    %13 = vector.broadcast %cst_8 : f32 to vector<1x4x256xf32>
    %14 = arith.select %12, %13, %6 : vector<1x4x256xi1>, vector<1x4x256xf32>
    %c0_9 = arith.constant 0 : index
    %c0_10 = arith.constant 0 : index
    %c0_11 = arith.constant 0 : index
    %15 = vector.load %arg8[%c0_9, %c0_10, %c0_11] : memref<1x4x256xf32, #tpu.memory_space<vmem>>, vector<1x4x256xf32>
    tpu.vector_store %arg8[%c0_9, %c0_10, %c0_11], %14 {strides = array<i32>} : memref<1x4x256xf32, #tpu.memory_space<vmem>>, vector<1x4x256xf32>,
    %16 = arith.index_cast %arg1 : i32 to index
    %c0_12 = arith.constant 0 : index
    %c0_13 = arith.constant 0 : index
    %17 = vector.load %arg3[%16, %c0_12, %c0_13] : memref<4x16x36xf32, #tpu.memory_space<vmem>>, vector<1x16x36xf32>
    %18 = vector.shape_cast %17 : vector<1x16x36xf32> to vector<16x36xf32>
    %19 = arith.index_cast %arg1 : i32 to index
    %c0_14 = arith.constant 0 : index
    %c0_15 = arith.constant 0 : index
    %20 = vector.load %arg4[%19, %c0_14, %c0_15] : memref<4x4x1xf32, #tpu.memory_space<vmem>>, vector<1x4x1xf32>
    %21 = vector.shape_cast %20 : vector<1x4x1xf32> to vector<4x1xf32>
    %22 = vector.shape_cast %10 : vector<1x4x256xf32> to vector<4x256xf32>
    %c0_16 = arith.constant 0 : index
    %c128 = arith.constant 128 : index
    %23 = vector.load %arg9[%c0_16, %c128] : memref<4x512xf32, #tpu.memory_space<vmem>>, vector<4x256xf32>
    tpu.vector_store %arg9[%c0_16, %c128], %22 {strides = array<i32>} : memref<4x512xf32, #tpu.memory_space<vmem>>, vector<4x256xf32>,
    %c0_17 = arith.constant 0 : index
    %c111 = arith.constant 111 : index
    %24 = vector.load %arg9[%c0_17, %c111] : memref<4x512xf32, #tpu.memory_space<vmem>>, vector<4x256xf32>
    %c0_18 = arith.constant 0 : index
    %c0_19 = arith.constant 0 : index
    %c0_20 = arith.constant 0 : index
    %25 = vector.load %arg5[%c0_18, %c0_19, %c0_20] : memref<3x1x256xf32, #tpu.memory_space<vmem>>, vector<1x1x256xf32>
    %26 = vector.shape_cast %25 : vector<1x1x256xf32> to vector<1x256xf32>
    %27 = vector.broadcast %26 : vector<1x256xf32> to vector<4x256xf32>
    %28 = arith.mulf %24, %27 : vector<4x256xf32>
    %c0_21 = arith.constant 0 : index
    %c0_22 = arith.constant 0 : index
    %29 = vector.load %arg10[%c0_21, %c0_22] : memref<36x256xf32, #tpu.memory_space<vmem>>, vector<4x256xf32>
    tpu.vector_store %arg10[%c0_21, %c0_22], %28 {strides = array<i32>} : memref<36x256xf32, #tpu.memory_space<vmem>>, vector<4x256xf32>,
    %c0_23 = arith.constant 0 : index
    %c112 = arith.constant 112 : index
    %30 = vector.load %arg9[%c0_23, %c112] : memref<4x512xf32, #tpu.memory_space<vmem>>, vector<4x256xf32>
    %c4 = arith.constant 4 : index
    %c0_24 = arith.constant 0 : index
    %31 = vector.load %arg10[%c4, %c0_24] : memref<36x256xf32, #tpu.memory_space<vmem>>, vector<4x256xf32>
    tpu.vector_store %arg10[%c4, %c0_24], %30 {strides = array<i32>} : memref<36x256xf32, #tpu.memory_space<vmem>>, vector<4x256xf32>,
    %c0_25 = arith.constant 0 : index
    %c113 = arith.constant 113 : index
    %32 = vector.load %arg9[%c0_25, %c113] : memref<4x512xf32, #tpu.memory_space<vmem>>, vector<4x256xf32>
    %c2 = arith.constant 2 : index
    %c0_26 = arith.constant 0 : index
    %c0_27 = arith.constant 0 : index
    %33 = vector.load %arg5[%c2, %c0_26, %c0_27] : memref<3x1x256xf32, #tpu.memory_space<vmem>>, vector<1x1x256xf32>
    %34 = vector.shape_cast %33 : vector<1x1x256xf32> to vector<1x256xf32>
    %35 = vector.broadcast %34 : vector<1x256xf32> to vector<4x256xf32>
    %36 = arith.mulf %32, %35 : vector<4x256xf32>
    %c8 = arith.constant 8 : index
    %c0_28 = arith.constant 0 : index
    %37 = vector.load %arg10[%c8, %c0_28] : memref<36x256xf32, #tpu.memory_space<vmem>>, vector<4x256xf32>
    tpu.vector_store %arg10[%c8, %c0_28], %36 {strides = array<i32>} : memref<36x256xf32, #tpu.memory_space<vmem>>, vector<4x256xf32>,
    %c0_29 = arith.constant 0 : index
    %c127 = arith.constant 127 : index
    %38 = vector.load %arg9[%c0_29, %c127] : memref<4x512xf32, #tpu.memory_space<vmem>>, vector<4x256xf32>
    %c0_30 = arith.constant 0 : index
    %c0_31 = arith.constant 0 : index
    %c0_32 = arith.constant 0 : index
    %39 = vector.load %arg5[%c0_30, %c0_31, %c0_32] : memref<3x1x256xf32, #tpu.memory_space<vmem>>, vector<1x1x256xf32>
    %40 = vector.shape_cast %39 : vector<1x1x256xf32> to vector<1x256xf32>
    %41 = vector.broadcast %40 : vector<1x256xf32> to vector<4x256xf32>
    %42 = arith.mulf %38, %41 : vector<4x256xf32>
    %c12 = arith.constant 12 : index
    %c0_33 = arith.constant 0 : index
    %43 = vector.load %arg10[%c12, %c0_33] : memref<36x256xf32, #tpu.memory_space<vmem>>, vector<4x256xf32>
    tpu.vector_store %arg10[%c12, %c0_33], %42 {strides = array<i32>} : memref<36x256xf32, #tpu.memory_space<vmem>>, vector<4x256xf32>,
    %c0_34 = arith.constant 0 : index
    %c128_35 = arith.constant 128 : index
    %44 = vector.load %arg9[%c0_34, %c128_35] : memref<4x512xf32, #tpu.memory_space<vmem>>, vector<4x256xf32>
    %c16 = arith.constant 16 : index
    %c0_36 = arith.constant 0 : index
    %45 = vector.load %arg10[%c16, %c0_36] : memref<36x256xf32, #tpu.memory_space<vmem>>, vector<4x256xf32>
    tpu.vector_store %arg10[%c16, %c0_36], %44 {strides = array<i32>} : memref<36x256xf32, #tpu.memory_space<vmem>>, vector<4x256xf32>,
    %c0_37 = arith.constant 0 : index
    %c129 = arith.constant 129 : index
    %46 = vector.load %arg9[%c0_37, %c129] : memref<4x512xf32, #tpu.memory_space<vmem>>, vector<4x256xf32>
    %c2_38 = arith.constant 2 : index
    %c0_39 = arith.constant 0 : index
    %c0_40 = arith.constant 0 : index
    %47 = vector.load %arg5[%c2_38, %c0_39, %c0_40] : memref<3x1x256xf32, #tpu.memory_space<vmem>>, vector<1x1x256xf32>
    %48 = vector.shape_cast %47 : vector<1x1x256xf32> to vector<1x256xf32>
    %49 = vector.broadcast %48 : vector<1x256xf32> to vector<4x256xf32>
    %50 = arith.mulf %46, %49 : vector<4x256xf32>
    %c20 = arith.constant 20 : index
    %c0_41 = arith.constant 0 : index
    %51 = vector.load %arg10[%c20, %c0_41] : memref<36x256xf32, #tpu.memory_space<vmem>>, vector<4x256xf32>
    tpu.vector_store %arg10[%c20, %c0_41], %50 {strides = array<i32>} : memref<36x256xf32, #tpu.memory_space<vmem>>, vector<4x256xf32>,
    %c0_42 = arith.constant 0 : index
    %c143 = arith.constant 143 : index
    %52 = vector.load %arg9[%c0_42, %c143] : memref<4x512xf32, #tpu.memory_space<vmem>>, vector<4x256xf32>
    %c0_43 = arith.constant 0 : index
    %c0_44 = arith.constant 0 : index
    %c0_45 = arith.constant 0 : index
    %53 = vector.load %arg5[%c0_43, %c0_44, %c0_45] : memref<3x1x256xf32, #tpu.memory_space<vmem>>, vector<1x1x256xf32>
    %54 = vector.shape_cast %53 : vector<1x1x256xf32> to vector<1x256xf32>
    %55 = vector.broadcast %54 : vector<1x256xf32> to vector<4x256xf32>
    %56 = arith.mulf %52, %55 : vector<4x256xf32>
    %c24 = arith.constant 24 : index
    %c0_46 = arith.constant 0 : index
    %57 = vector.load %arg10[%c24, %c0_46] : memref<36x256xf32, #tpu.memory_space<vmem>>, vector<4x256xf32>
    tpu.vector_store %arg10[%c24, %c0_46], %56 {strides = array<i32>} : memref<36x256xf32, #tpu.memory_space<vmem>>, vector<4x256xf32>,
    %c0_47 = arith.constant 0 : index
    %c144 = arith.constant 144 : index
    %58 = vector.load %arg9[%c0_47, %c144] : memref<4x512xf32, #tpu.memory_space<vmem>>, vector<4x256xf32>
    %c28 = arith.constant 28 : index
    %c0_48 = arith.constant 0 : index
    %59 = vector.load %arg10[%c28, %c0_48] : memref<36x256xf32, #tpu.memory_space<vmem>>, vector<4x256xf32>
    tpu.vector_store %arg10[%c28, %c0_48], %58 {strides = array<i32>} : memref<36x256xf32, #tpu.memory_space<vmem>>, vector<4x256xf32>,
    %c0_49 = arith.constant 0 : index
    %c145 = arith.constant 145 : index
    %60 = vector.load %arg9[%c0_49, %c145] : memref<4x512xf32, #tpu.memory_space<vmem>>, vector<4x256xf32>
    %c2_50 = arith.constant 2 : index
    %c0_51 = arith.constant 0 : index
    %c0_52 = arith.constant 0 : index
    %61 = vector.load %arg5[%c2_50, %c0_51, %c0_52] : memref<3x1x256xf32, #tpu.memory_space<vmem>>, vector<1x1x256xf32>
    %62 = vector.shape_cast %61 : vector<1x1x256xf32> to vector<1x256xf32>
    %63 = vector.broadcast %62 : vector<1x256xf32> to vector<4x256xf32>
    %64 = arith.mulf %60, %63 : vector<4x256xf32>
    %c32 = arith.constant 32 : index
    %c0_53 = arith.constant 0 : index
    %65 = vector.load %arg10[%c32, %c0_53] : memref<36x256xf32, #tpu.memory_space<vmem>>, vector<4x256xf32>
    tpu.vector_store %arg10[%c32, %c0_53], %64 {strides = array<i32>} : memref<36x256xf32, #tpu.memory_space<vmem>>, vector<4x256xf32>,
    %c0_54 = arith.constant 0 : index
    %c0_55 = arith.constant 0 : index
    %66 = vector.load %arg10[%c0_54, %c0_55] : memref<36x256xf32, #tpu.memory_space<vmem>>, vector<36x256xf32>
    %cst_56 = arith.constant dense<0.000000e+00> : vector<16x256xf32>
    %67 = tpu.matmul %18, %66, %cst_56 {dimension_numbers = #tpu.dot_dimension_numbers<[1], [0], [0], [1], [0, 0, 1, 1], [], []>} : vector<16x36xf32>, vector<36x256xf32>, vector<16x256xf32> -> vector<16x256xf32>
    %68 = vector.extract_strided_slice %67 {offsets = [0, 0], sizes = [4, 256], strides = [1, 1]} : vector<16x256xf32> to vector<4x256xf32>
    %c0_57 = arith.constant 0 : index
    %c0_58 = arith.constant 0 : index
    %c0_59 = arith.constant 0 : index
    %69 = vector.load %arg6[%c0_57, %c0_58, %c0_59] : memref<4x256x1024xf32, #tpu.memory_space<vmem>>, vector<1x256x1024xf32>
    %70 = vector.shape_cast %69 : vector<1x256x1024xf32> to vector<256x1024xf32>
    %cst_60 = arith.constant dense<0.000000e+00> : vector<4x1024xf32>
    %71 = tpu.matmul %68, %70, %cst_60 {dimension_numbers = #tpu.dot_dimension_numbers<[1], [0], [0], [1], [0, 0, 1, 1], [], []>} : vector<4x256xf32>, vector<256x1024xf32>, vector<4x1024xf32> -> vector<4x1024xf32>
    %72 = vector.extract_strided_slice %67 {offsets = [4, 0], sizes = [4, 256], strides = [1, 1]} : vector<16x256xf32> to vector<4x256xf32>
    %c1 = arith.constant 1 : index
    %c0_61 = arith.constant 0 : index
    %c0_62 = arith.constant 0 : index
    %73 = vector.load %arg6[%c1, %c0_61, %c0_62] : memref<4x256x1024xf32, #tpu.memory_space<vmem>>, vector<1x256x1024xf32>
    %74 = vector.shape_cast %73 : vector<1x256x1024xf32> to vector<256x1024xf32>
    %cst_63 = arith.constant dense<0.000000e+00> : vector<4x1024xf32>
    %75 = tpu.matmul %72, %74, %cst_63 {dimension_numbers = #tpu.dot_dimension_numbers<[1], [0], [0], [1], [0, 0, 1, 1], [], []>} : vector<4x256xf32>, vector<256x1024xf32>, vector<4x1024xf32> -> vector<4x1024xf32>
    %76 = arith.addf %71, %75 : vector<4x1024xf32>
    %77 = vector.extract_strided_slice %67 {offsets = [8, 0], sizes = [4, 256], strides = [1, 1]} : vector<16x256xf32> to vector<4x256xf32>
    %c2_64 = arith.constant 2 : index
    %c0_65 = arith.constant 0 : index
    %c0_66 = arith.constant 0 : index
    %78 = vector.load %arg6[%c2_64, %c0_65, %c0_66] : memref<4x256x1024xf32, #tpu.memory_space<vmem>>, vector<1x256x1024xf32>
    %79 = vector.shape_cast %78 : vector<1x256x1024xf32> to vector<256x1024xf32>
    %cst_67 = arith.constant dense<0.000000e+00> : vector<4x1024xf32>
    %80 = tpu.matmul %77, %79, %cst_67 {dimension_numbers = #tpu.dot_dimension_numbers<[1], [0], [0], [1], [0, 0, 1, 1], [], []>} : vector<4x256xf32>, vector<256x1024xf32>, vector<4x1024xf32> -> vector<4x1024xf32>
    %81 = arith.addf %76, %80 : vector<4x1024xf32>
    %82 = vector.extract_strided_slice %67 {offsets = [12, 0], sizes = [4, 256], strides = [1, 1]} : vector<16x256xf32> to vector<4x256xf32>
    %c3 = arith.constant 3 : index
    %c0_68 = arith.constant 0 : index
    %c0_69 = arith.constant 0 : index
    %83 = vector.load %arg6[%c3, %c0_68, %c0_69] : memref<4x256x1024xf32, #tpu.memory_space<vmem>>, vector<1x256x1024xf32>
    %84 = vector.shape_cast %83 : vector<1x256x1024xf32> to vector<256x1024xf32>
    %cst_70 = arith.constant dense<0.000000e+00> : vector<4x1024xf32>
    %85 = tpu.matmul %82, %84, %cst_70 {dimension_numbers = #tpu.dot_dimension_numbers<[1], [0], [0], [1], [0, 0, 1, 1], [], []>} : vector<4x256xf32>, vector<256x1024xf32>, vector<4x1024xf32> -> vector<4x1024xf32>
    %86 = arith.addf %81, %85 : vector<4x1024xf32>
    %87 = vector.broadcast %21 : vector<4x1xf32> to vector<4x1024xf32>
    %88 = arith.addf %86, %87 : vector<4x1024xf32>
    %c0_71 = arith.constant 0 : index
    %c0_72 = arith.constant 0 : index
    %c0_73 = arith.constant 0 : index
    %c0_74 = arith.constant 0 : index
    %89 = vector.load %arg7[%c0_71, %c0_72, %c0_73, %c0_74] : memref<1x1x4x1024xf32, #tpu.memory_space<vmem>>, vector<1x1x4x1024xf32>
    %90 = vector.shape_cast %89 : vector<1x1x4x1024xf32> to vector<4x1024xf32>
    %91 = vector.shape_cast %88 : vector<4x1024xf32> to vector<1x1x4x1024xf32>
    tpu.vector_store %arg7[%c0_71, %c0_72, %c0_73, %c0_74], %91 {strides = array<i32>} : memref<1x1x4x1024xf32, #tpu.memory_space<vmem>>, vector<1x1x4x1024xf32>,
    return
  }
  func.func @transform_0(%arg0: i32, %arg1: i32) -> (i32, i32, i32, i32) {
    %c0_i32 = arith.constant 0 : i32
    %c0_i32_0 = arith.constant 0 : i32
    %c0_i32_1 = arith.constant 0 : i32
    return %arg1, %arg0, %c0_i32, %c0_i32_0 : i32, i32, i32, i32
  }
  func.func @transform_1(%arg0: i32, %arg1: i32) -> (i32, i32, i32) {
    %c0_i32 = arith.constant 0 : i32
    %c0_i32_0 = arith.constant 0 : i32
    %c0_i32_1 = arith.constant 0 : i32
    %c0_i32_2 = arith.constant 0 : i32
    return %c0_i32, %c0_i32_0, %c0_i32_1 : i32, i32, i32
  }
  func.func @transform_2(%arg0: i32, %arg1: i32) -> (i32, i32, i32) {
    %c0_i32 = arith.constant 0 : i32
    %c0_i32_0 = arith.constant 0 : i32
    %c0_i32_1 = arith.constant 0 : i32
    %c0_i32_2 = arith.constant 0 : i32
    return %c0_i32, %c0_i32_0, %c0_i32_1 : i32, i32, i32
  }
  func.func @transform_3(%arg0: i32, %arg1: i32) -> (i32, i32, i32) {
    %c0_i32 = arith.constant 0 : i32
    %c0_i32_0 = arith.constant 0 : i32
    %c0_i32_1 = arith.constant 0 : i32
    %c0_i32_2 = arith.constant 0 : i32
    return %c0_i32, %c0_i32_0, %c0_i32_1 : i32, i32, i32
  }
  func.func @transform_4(%arg0: i32, %arg1: i32) -> (i32, i32, i32) {
    %c0_i32 = arith.constant 0 : i32
    %c0_i32_0 = arith.constant 0 : i32
    %c0_i32_1 = arith.constant 0 : i32
    %c0_i32_2 = arith.constant 0 : i32
    return %c0_i32, %c0_i32_0, %c0_i32_1 : i32, i32, i32
  }
  func.func @transform_5(%arg0: i32, %arg1: i32) -> (i32, i32, i32, i32) {
    %c0_i32 = arith.constant 0 : i32
    %c0_i32_0 = arith.constant 0 : i32
    %c0_i32_1 = arith.constant 0 : i32
    return %arg1, %arg0, %c0_i32, %c0_i32_0 : i32, i32, i32, i32
  }
}

</mosaic_0001>

<llo_original>
// kernel: _forward_impl.1
$region0: #{_forward_impl.1}
  #allocation0 [shape = 'u32[]', space=smem, size = 0x4, offset = 0x4, fixed_abs, tag = 'smem constant byte address 0x4 - core index']
  #allocation1 [shape = 'u32[144,128]{1,0:T(1,128)}', space=vmem, size = 0x12000, scoped, tag = 'internal scratch']
  #allocation2 [shape = 'f32[1,4,256]{2,1,0:T(4,128)}', space=vmem, size = 0x1000, scoped, tag = 'scratch operand']
  #allocation3 [shape = 'f32[4,512]{1,0:T(4,128)}', space=vmem, size = 0x2000, scoped, tag = 'scratch operand']
  #allocation4 [shape = 'f32[36,256]{1,0:T(8,128)}', space=vmem, size = 0xa000, scoped, tag = 'scratch operand']
  %s0 = inlined_call_operand.vmem [shape: f32[4,2,4,256], index: 0, kind: input, shape index: {}]
  %s1 = inlined_call_operand.vmem [shape: f32[4,16,36], index: 1, kind: input, shape index: {}]
  %s2 = inlined_call_operand.vmem [shape: f32[4,4,1], index: 2, kind: input, shape index: {}]
  %s3 = inlined_call_operand.vmem [shape: f32[3,1,256], index: 3, kind: input, shape index: {}]
  %s4 = inlined_call_operand.vmem [shape: f32[4,256,1024], index: 4, kind: input, shape index: {}]
  %s5 = inlined_call_operand.vmem [shape: f32[4,2,4,1024], index: 5, kind: output, shape index: {}]
  %s6 = sld [smem:[#allocation0]]
  $region57: #{_forward_impl.1} parent=0
    _
  %s8 = ssub.s32 1, %s6
  %s9 = scalar_select 0, %s8, %s6
  loop: start=0, step=1, limit=10
  $region2: #{_forward_impl.1} parent=0 // loop_pre_header
    _
  $region3: #{_forward_impl.1} parent=0 // loop_header
    %s11 = sphi 0, %s15
    %p12 = scmp.ge.s32.totalorder %s11, 10
    %s18 = sphi 0, %s30
    %s19 = sphi 0, %s26
    %s20 = sphi 0, %s18
    %s21 = sphi 0, %s19
    %s22 = sphi 0, %s20
    %s23 = sphi 0, %s21
    %s35 = sphi 0, %s37
    %s38 = sphi 0, %s35
    %s39 = sphi 0, %s38
    %s55 = sphi 0, %s39
    %s59 = sphi 0, %s59
    %s61 = sphi 0, %s59
    %s62 = sphi 0, %s61
    %s76 = sphi 0, %s62
    %s80 = sphi 0, %s80
    %s82 = sphi 0, %s80
    %s83 = sphi 0, %s82
    %s97 = sphi 0, %s83
    %s101 = sphi 0, %s101
    %s103 = sphi 0, %s101
    %s104 = sphi 0, %s103
    %s118 = sphi 0, %s104
    %s122 = sphi 0, %s122
    %s124 = sphi 0, %s122
    %s125 = sphi 0, %s124
    %s139 = sphi 0, %s125
    %s147 = sphi 0, %s149
    %s150 = sphi 0, %s147
    %s151 = sphi 0, %s150
    %s167 = sphi 0, %s151
  $region4: #{_forward_impl.1} parent=0 // loop_header_branch
    %14 = sbr.rel (%p12) target = $region8
  $region5: #{_forward_impl.1} parent=0 // loop_body
    %s16 = ssub.s32 %s11, 1
    %s17 = ssub.s32 %s11, 2
    %s24 = sadd.s32 1, %s19
    %p25 = scmp.ge.s32.totalorder %s24, 4
    %s26 = scalar_select %p25, 0, %s24
    %s27 = sadd.s32 1, %s18
    %s28 = scalar_select %p25, %s27, %s18
    %p29 = scmp.ge.s32.totalorder %s28, 2
    %s30 = scalar_select %p29, 0, %s28
    %s31 = ssub.s32 %s19, %s26
    %s32 = ssub.s32 %s18, %s30
    %s33 = sor.u32 %s31, %s32
    %p34 = scmp.eq.s32.totalorder %s33, 0
    %s36 = sadd.s32 %s35, 1
    %s37 = scalar_select %p34, %s35, %s36
    %p40 = pneg %p34
    %p41 = scmp.eq.s32.totalorder %s11, 7
    %p42 = por %p40, %p41
    %p43 = scmp.ne.s32.totalorder %s35, %s38
    %p44 = scmp.eq.s32.totalorder %s11, 0
    %p45 = por %p43, %p44
    %p46 = scmp.ne.s32.totalorder %s35, %s38
    %p47 = scmp.eq.s32.totalorder %s16, 7
    %p48 = por %p46, %p47
    %p49 = scmp.ne.s32.totalorder %s38, %s39
    %p50 = scmp.eq.s32.totalorder %s16, 0
    %p51 = por %p49, %p50
    %p52 = scmp.ne.s32.totalorder %s38, %s39
    %p53 = scmp.eq.s32.totalorder %s17, 7
    %p54 = por %p52, %p53
    %p56 = scmp.ne.s32.totalorder %s39, %s55
    %p57 = scmp.eq.s32.totalorder %s17, 0
    %p58 = por %p56, %p57
    %s60 = sadd.s32 %s59, 1
    %p63 = scmp.eq.s32.totalorder %s11, 7
    %p64 = scmp.ne.s32.totalorder %s59, %s61
    %p65 = scmp.eq.s32.totalorder %s11, 0
    %p66 = por %p64, %p65
    %p67 = scmp.ne.s32.totalorder %s59, %s61
    %p68 = scmp.eq.s32.totalorder %s16, 7
    %p69 = por %p67, %p68
    %p70 = scmp.ne.s32.totalorder %s61, %s62
    %p71 = scmp.eq.s32.totalorder %s16, 0
    %p72 = por %p70, %p71
    %p73 = scmp.ne.s32.totalorder %s61, %s62
    %p74 = scmp.eq.s32.totalorder %s17, 7
    %p75 = por %p73, %p74
    %p77 = scmp.ne.s32.totalorder %s62, %s76
    %p78 = scmp.eq.s32.totalorder %s17, 0
    %p79 = por %p77, %p78
    %s81 = sadd.s32 %s80, 1
    %p84 = scmp.eq.s32.totalorder %s11, 7
    %p85 = scmp.ne.s32.totalorder %s80, %s82
    %p86 = scmp.eq.s32.totalorder %s11, 0
    %p87 = por %p85, %p86
    %p88 = scmp.ne.s32.totalorder %s80, %s82
    %p89 = scmp.eq.s32.totalorder %s16, 7
    %p90 = por %p88, %p89
    %p91 = scmp.ne.s32.totalorder %s82, %s83
    %p92 = scmp.eq.s32.totalorder %s16, 0
    %p93 = por %p91, %p92
    %p94 = scmp.ne.s32.totalorder %s82, %s83
    %p95 = scmp.eq.s32.totalorder %s17, 7
    %p96 = por %p94, %p95
    %p98 = scmp.ne.s32.totalorder %s83, %s97
    %p99 = scmp.eq.s32.totalorder %s17, 0
    %p100 = por %p98, %p99
    %s102 = sadd.s32 %s101, 1
    %p105 = scmp.eq.s32.totalorder %s11, 7
    %p106 = scmp.ne.s32.totalorder %s101, %s103
    %p107 = scmp.eq.s32.totalorder %s11, 0
    %p108 = por %p106, %p107
    %p109 = scmp.ne.s32.totalorder %s101, %s103
    %p110 = scmp.eq.s32.totalorder %s16, 7
    %p111 = por %p109, %p110
    %p112 = scmp.ne.s32.totalorder %s103, %s104
    %p113 = scmp.eq.s32.totalorder %s16, 0
    %p114 = por %p112, %p113
    %p115 = scmp.ne.s32.totalorder %s103, %s104
    %p116 = scmp.eq.s32.totalorder %s17, 7
    %p117 = por %p115, %p116
    %p119 = scmp.ne.s32.totalorder %s104, %s118
    %p120 = scmp.eq.s32.totalorder %s17, 0
    %p121 = por %p119, %p120
    %s123 = sadd.s32 %s122, 1
    %p126 = scmp.eq.s32.totalorder %s11, 7
    %p127 = scmp.ne.s32.totalorder %s122, %s124
    %p128 = scmp.eq.s32.totalorder %s11, 0
    %p129 = por %p127, %p128
    %p130 = scmp.ne.s32.totalorder %s122, %s124
    %p131 = scmp.eq.s32.totalorder %s16, 7
    %p132 = por %p130, %p131
    %p133 = scmp.ne.s32.totalorder %s124, %s125
    %p134 = scmp.eq.s32.totalorder %s16, 0
    %p135 = por %p133, %p134
    %p136 = scmp.ne.s32.totalorder %s124, %s125
    %p137 = scmp.eq.s32.totalorder %s17, 7
    %p138 = por %p136, %p137
    %p140 = scmp.ne.s32.totalorder %s125, %s139
    %p141 = scmp.eq.s32.totalorder %s17, 0
    %p142 = por %p140, %p141
    %s143 = ssub.s32 %s19, %s26
    %s144 = ssub.s32 %s18, %s30
    %s145 = sor.u32 %s143, %s144
    %p146 = scmp.eq.s32.totalorder %s145, 0
    %s148 = sadd.s32 %s147, 1
    %s149 = scalar_select %p146, %s147, %s148
    %p152 = pneg %p146
    %p153 = scmp.eq.s32.totalorder %s11, 7
    %p154 = por %p152, %p153
    %p155 = scmp.ne.s32.totalorder %s147, %s150
    %p156 = scmp.eq.s32.totalorder %s11, 0
    %p157 = por %p155, %p156
    %p158 = scmp.ne.s32.totalorder %s147, %s150
    %p159 = scmp.eq.s32.totalorder %s16, 7
    %p160 = por %p158, %p159
    %p161 = scmp.ne.s32.totalorder %s150, %s151
    %p162 = scmp.eq.s32.totalorder %s16, 0
    %p163 = por %p161, %p162
    %p164 = scmp.ne.s32.totalorder %s150, %s151
    %p165 = scmp.eq.s32.totalorder %s17, 7
    %p166 = por %p164, %p165
    %p168 = scmp.ne.s32.totalorder %s151, %s167
    %p169 = scmp.eq.s32.totalorder %s17, 0
    %p170 = por %p168, %p169
    %p171 = scmp.le.s32.totalorder 1, %s11
    %p172 = scmp.lt.s32.totalorder %s11, 9
    %p173 = pnand %p171, %p172
    %p174 = pneg %p173
    // Predicated region
    $region9: #{_forward_impl.1} parent=5 // pred_check
      _
    $region10: #{_forward_impl.1} parent=5 // pred_check_branch
      %176 = sbr.rel (%p173) target = $region12
    $region11: #{_forward_impl.1} parent=5 // pred_region
      %s177 = ssub.s32 %s11, 1
      // Predicated region
      $region13: #{_forward_impl.1} parent=11 // pred_check
        %p178 = pneg %p72
      $region14: #{_forward_impl.1} parent=11 // pred_check_branch
        %180 = sbr.rel (%p178) target = $region16
      $region15: #{_forward_impl.1} parent=11 // pred_region
        _
      $region16: #{_forward_impl.1} parent=11 // pred_fallthru
        _
      // Predicated region
      $region17: #{_forward_impl.1} parent=11 // pred_check
        %p181 = pneg %p93
      $region18: #{_forward_impl.1} parent=11 // pred_check_branch
        %183 = sbr.rel (%p181) target = $region20
      $region19: #{_forward_impl.1} parent=11 // pred_region
        _
      $region20: #{_forward_impl.1} parent=11 // pred_fallthru
        _
      // Predicated region
      $region21: #{_forward_impl.1} parent=11 // pred_check
        %p184 = pneg %p114
      $region22: #{_forward_impl.1} parent=11 // pred_check_branch
        %186 = sbr.rel (%p184) target = $region24
      $region23: #{_forward_impl.1} parent=11 // pred_region
        _
      $region24: #{_forward_impl.1} parent=11 // pred_fallthru
        _
      // Predicated region
      $region25: #{_forward_impl.1} parent=11 // pred_check
        %p187 = pneg %p135
      $region26: #{_forward_impl.1} parent=11 // pred_check_branch
        %189 = sbr.rel (%p187) target = $region28
      $region27: #{_forward_impl.1} parent=11 // pred_region
        _
      $region28: #{_forward_impl.1} parent=11 // pred_fallthru
        _
    $region12: #{_forward_impl.1} parent=5 // pred_fallthru
      _
    %p190 = scmp.lt.s32.totalorder %s11, 8
    // Predicated region
    $region29: #{_forward_impl.1} parent=5 // pred_check
      %p191 = pneg %p190
    $region30: #{_forward_impl.1} parent=5 // pred_check_branch
      %193 = sbr.rel (%p191) target = $region32
    $region31: #{_forward_impl.1} parent=5 // pred_region
      // Predicated region
      $region33: #{_forward_impl.1} parent=31 // pred_check
        %p194 = pneg %p45
      $region34: #{_forward_impl.1} parent=31 // pred_check_branch
        %196 = sbr.rel (%p194) target = $region36
      $region35: #{_forward_impl.1} parent=31 // pred_region
        %p197 = scmp.lt.s32.totalorder %s19, 3
        %s198 = scalar_select %p197, %s19, 3
        %p199 = scmp.lt.s32.totalorder %s18, 1
        %s200 = scalar_select %p199, %s18, 1
        %s201 = smul.addr %s200, 2
        %s202 = smul.addr %s198, 4
        %s203 = sadd.s32 %s201, %s202
        %s204 = smul.addr %s203, 4
        %s205 = scalar_lea.vmem %s0, %s204
      $region36: #{_forward_impl.1} parent=31 // pred_fallthru
        _
    $region32: #{_forward_impl.1} parent=5 // pred_fallthru
      _
    %p206 = scmp.le.s32.totalorder 1, %s11
    %p207 = scmp.lt.s32.totalorder %s11, 9
    %p208 = pnand %p206, %p207
    %p209 = pneg %p208
    // Predicated region
    $region37: #{_forward_impl.1} parent=5 // pred_check
      _
    $region38: #{_forward_impl.1} parent=5 // pred_check_branch
      %211 = sbr.rel (%p208) target = $region40
    $region39: #{_forward_impl.1} parent=5 // pred_region
      %s212 = ssub.s32 %s11, 1
      %p213 = scmp.lt.s32.totalorder %s21, 3
      %s214 = scalar_select %p213, %s21, 3
      %p215 = scmp.lt.s32.totalorder %s20, 1
      %s216 = scalar_select %p215, %s20, 1
      %s217 = smul.addr %s216, 2
      %s218 = smul.addr %s214, 4
      %s219 = sadd.s32 %s217, %s218
      %s220 = smul.addr %s219, 4
      %s221 = scalar_lea.vmem %s0, %s220
      %p222 = pneg %p51
      %p223 = pneg %p48
      %p224 = pneg %p72
      %p225 = pneg %p69
      %p226 = pneg %p93
      %p227 = pneg %p90
      %p228 = pneg %p114
      %p229 = pneg %p111
      %p230 = pneg %p135
      %p231 = pneg %p132
      %p232 = pneg %p163
      %p233 = pneg %p160
      %p234 = scmp.lt.s32.totalorder %s21, 3
      %s235 = scalar_select %p234, %s21, 3
      %p236 = scmp.lt.s32.totalorder %s20, 1
      %s237 = scalar_select %p236, %s20, 1
      %s238 = smul.addr %s237, 8
      %s239 = smul.addr %s235, 16
      %s240 = sadd.s32 %s238, %s239
      %s241 = smul.addr %s240, 4
      %s242 = scalar_lea.vmem %s5, %s241
      %p243 = scmp.lt.s32.totalorder %s21, 3
      %s244 = scalar_select %p243, %s21, 3
      %p245 = scmp.lt.s32.totalorder %s20, 1
      %s246 = scalar_select %p245, %s20, 1
      %s247 = smul.addr %s246, 2
      %s248 = smul.addr %s244, 4
      %s249 = sadd.s32 %s247, %s248
      %s250 = smul.addr %s249, 4
      %s251 = scalar_lea.vmem %s0, %s250
      %p252 = scmp.lt.s32.totalorder %s21, 3
      %s253 = scalar_select %p252, %s21, 3
      %p254 = scmp.lt.s32.totalorder %s20, 1
      %s255 = scalar_select %p254, %s20, 1
      %s256 = smul.addr %s255, 8
      %s257 = smul.addr %s253, 16
      %s258 = sadd.s32 %s256, %s257
      %s259 = smul.addr %s258, 4
      %s260 = scalar_lea.vmem %s5, %s259
      %p261 = scmp.eq.s32.totalorder %s21, 0
      // Predicated region
      $region41: #{_forward_impl.1} parent=39 // pred_check
        %p262 = pneg %p261
      $region42: #{_forward_impl.1} parent=39 // pred_check_branch
        %264 = sbr.rel (%p262) target = $region44
      $region43: #{_forward_impl.1} parent=39 // pred_region
        %265 = vst [vmem:[#allocation2] sm:$0xff] 0.0
        %266 = vst [vmem:[#allocation3] sm:$0xff] 0.0
        %267 = vst [vmem:[#allocation3 + $0x8] sm:$0xff] 0.0
      $region44: #{_forward_impl.1} parent=39 // pred_fallthru
        _
      %v268 = vld [vmem:[#allocation2] sm:$0xff]
      %v269 = vld [vmem:[%s251] sm:$0xff]
      %v270 = vadd.f32 %v268, %v269
      %vm271 = vcmp.ge.f32.partialorder %v270, 1.0
      %v272 = vsel %vm271, 1, 0
      %v273 = vcvt.s32.f32 %v272
      %vm274 = vcmp.gt.f32.partialorder %v273, 0.0
      %v275 = vsel %vm274, 0.0, %v270
      %276 = vst [vmem:[#allocation2] sm:$0xff] %v275
      %s277 = smul.u32 %s21, 16
      %s278 = scalar_lea.vmem %s1, %s277
      %v279 = vld [vmem:[%s278] sm:$0xff]
      %v280 = vld [vmem:[%s278 + $0x8] sm:$0xff]
      %s281 = smul.u32 %s21, 4
      %s282 = scalar_lea.vmem %s2, %s281
      %v283 = vld [vmem:[%s282] sm:$0xf]
      %284 = vst [vmem:[#allocation3 + $0x4] sm:$0xff] %v273
      %v285 = vld [vmem:[#allocation3] sm:$0xff]
      %v286 = vld [vmem:[#allocation3 + $0x8] sm:$0xf]
      %v287 = vld [vmem:[%s3] sm:$0x3]
      %v289 = vlaneseq
      %v290 = vshrl.u32 %v289, 7
      %v291 = vsub.s32 0, %v290
      %v292 = vrot.slane %v287, %v291
      %v293 = vlaneseq
      %v294 = vshrl.u32 %v293, 7
      %v295 = vsub.s32 1, %v294
      %v296 = vrot.slane %v287, %v295
      %v297 = vcombine.low %v292, %v296
      %298 = vrot.lane.b32.xlu0 %v297, 111
      %v299 = vpop.permute.xlu0 %298
      %v300 = vrot.slane %v299, 4
      %vm301 = vcmask 908288
      %v302 = vsel %vm301, %v300, %v299
      %v305 = vmul.f32 %v285, %v302
      %v306 = vmul.f32 %v286, %v300
      %v309 = vcombine.high %v305, %v305
      %310 = vrot.lane.b32.xlu0 %v305, 17
      %v311 = vpop.permute.xlu0 %310
      %312 = vrot.lane.b32.xlu0 %v309, 17
      %v313 = vpop.permute.xlu0 %312
      %314 = vrot.lane.b32.xlu0 %v306, 17
      %v315 = vpop.permute.xlu0 %314
      %vm316 = vcmask 138240
      %v317 = vsel %vm316, %v311, %v313
      %v318 = vsel %vm316, %v313, %v315
      %321 = vst [vmem:[#allocation4] sm:$0xf] %v317
      %322 = vst [vmem:[#allocation4 + $0x8] sm:$0xf] %v318
      %v323 = vld [vmem:[#allocation3] sm:$0xff]
      %v324 = vld [vmem:[#allocation3 + $0x8] sm:$0xf]
      %v327 = vcombine.low %v323, %v323
      %v328 = vcombine.low %v324, %v324
      %329 = vrot.lane.b32.xlu0 %v327, 16
      %v330 = vpop.permute.xlu0 %329
      %331 = vrot.lane.b32.xlu0 %v323, 16
      %v332 = vpop.permute.xlu0 %331
      %333 = vrot.lane.b32.xlu0 %v328, 16
      %v334 = vpop.permute.xlu0 %333
      %vm335 = vcmask 130048
      %v336 = vsel %vm335, %v330, %v332
      %v337 = vsel %vm335, %v332, %v334
      %340 = vst [vmem:[#allocation4] sm:$0xf0] %v336
      %341 = vst [vmem:[#allocation4 + $0x8] sm:$0xf0] %v337
      %v342 = vld [vmem:[#allocation3] sm:$0xff]
      %v343 = vld [vmem:[#allocation3 + $0x8] sm:$0xf]
      %s344 = scalar_lea.vmem %s3, 4
      %v345 = vld [vmem:[%s344] sm:$0x3]
      %v347 = vlaneseq
      %v348 = vshrl.u32 %v347, 7
      %v349 = vsub.s32 0, %v348
      %v350 = vrot.slane %v345, %v349
      %v351 = vlaneseq
      %v352 = vshrl.u32 %v351, 7
      %v353 = vsub.s32 1, %v352
      %v354 = vrot.slane %v345, %v353
      %v355 = vcombine.low %v350, %v354
      %356 = vrot.lane.b32.xlu0 %v355, 113
      %v357 = vpop.permute.xlu0 %356
      %v358 = vrot.slane %v357, 4
      %vm359 = vcmask 924672
      %v360 = vsel %vm359, %v358, %v357
      %v363 = vmul.f32 %v342, %v360
      %v364 = vmul.f32 %v343, %v358
      %v367 = vcombine.high %v363, %v363
      %368 = vrot.lane.b32.xlu0 %v363, 15
      %v369 = vpop.permute.xlu0 %368
      %370 = vrot.lane.b32.xlu0 %v367, 15
      %v371 = vpop.permute.xlu0 %370
      %372 = vrot.lane.b32.xlu0 %v364, 15
      %v373 = vpop.permute.xlu0 %372
      %vm374 = vcmask 121856
      %v375 = vsel %vm374, %v369, %v371
      %v376 = vsel %vm374, %v371, %v373
      %379 = vst [vmem:[#allocation4 + $0x10] sm:$0xf] %v375
      %380 = vst [vmem:[#allocation4 + $0x18] sm:$0xf] %v376
      %v381 = vld [vmem:[#allocation3] sm:$0xff]
      %v382 = vld [vmem:[#allocation3 + $0x8] sm:$0xf]
      %v383 = vld [vmem:[%s3] sm:$0x3]
      %v385 = vlaneseq
      %v386 = vshrl.u32 %v385, 7
      %v387 = vsub.s32 0, %v386
      %v388 = vrot.slane %v383, %v387
      %v389 = vlaneseq
      %v390 = vshrl.u32 %v389, 7
      %v391 = vsub.s32 1, %v390
      %v392 = vrot.slane %v383, %v391
      %v393 = vcombine.low %v388, %v392
      %394 = vrot.lane.b32.xlu0 %v393, 127
      %v395 = vpop.permute.xlu0 %394
      %v396 = vrot.slane %v395, 4
      %vm397 = vcmask 1039360
      %v398 = vsel %vm397, %v396, %v395
      %v401 = vmul.f32 %v381, %v398
      %v402 = vmul.f32 %v382, %v396
      %v405 = vcombine.low %v401, %v401
      %v406 = vcombine.low %v402, %v402
      %407 = vrot.lane.b32.xlu0 %v405, 1
      %v408 = vpop.permute.xlu0 %407
      %409 = vrot.lane.b32.xlu0 %v401, 1
      %v410 = vpop.permute.xlu0 %409
      %411 = vrot.lane.b32.xlu0 %v406, 1
      %v412 = vpop.permute.xlu0 %411
      %vm413 = vcmask 7168
      %v414 = vsel %vm413, %v408, %v410
      %v415 = vsel %vm413, %v410, %v412
      %418 = vst [vmem:[#allocation4 + $0x10] sm:$0xf0] %v414
      %419 = vst [vmem:[#allocation4 + $0x18] sm:$0xf0] %v415
      %v420 = vld [vmem:[#allocation3 + $0x4] sm:$0xff]
      %v422 = vcombine.high %v420, %v420
      %424 = vst [vmem:[#allocation4 + $0x20] sm:$0xf] %v420
      %425 = vst [vmem:[#allocation4 + $0x28] sm:$0xf] %v422
      %v426 = vld [vmem:[#allocation3 + $0x4] sm:$0xff]
      %v427 = vld [vmem:[#allocation3 + $0xc] sm:$0xf]
      %v428 = vld [vmem:[%s344] sm:$0x3]
      %v430 = vlaneseq
      %v431 = vshrl.u32 %v430, 7
      %v432 = vsub.s32 0, %v431
      %v433 = vrot.slane %v428, %v432
      %v434 = vlaneseq
      %v435 = vshrl.u32 %v434, 7
      %v436 = vsub.s32 1, %v435
      %v437 = vrot.slane %v428, %v436
      %v438 = vcombine.low %v433, %v437
      %439 = vrot.lane.b32.xlu0 %v438, 1
      %v440 = vpop.permute.xlu0 %439
      %v441 = vrot.slane %v440, 4
      %v442 = vsel %vm413, %v441, %v440
      %v445 = vmul.f32 %v426, %v442
      %v446 = vmul.f32 %v427, %v441
      %v449 = vcombine.low %v445, %v445
      %v450 = vcombine.low %v446, %v446
      %451 = vrot.lane.b32.xlu0 %v449, 127
      %v452 = vpop.permute.xlu0 %451
      %453 = vrot.lane.b32.xlu0 %v445, 127
      %v454 = vpop.permute.xlu0 %453
      %455 = vrot.lane.b32.xlu0 %v450, 127
      %v456 = vpop.permute.xlu0 %455
      %v457 = vsel %vm397, %v452, %v454
      %v458 = vsel %vm397, %v454, %v456
      %461 = vst [vmem:[#allocation4 + $0x20] sm:$0xf0] %v457
      %462 = vst [vmem:[#allocation4 + $0x28] sm:$0xf0] %v458
      %v463 = vld [vmem:[#allocation3 + $0x4] sm:$0xff]
      %v464 = vld [vmem:[#allocation3 + $0xc] sm:$0xf]
      %v465 = vld [vmem:[%s3] sm:$0x3]
      %v467 = vlaneseq
      %v468 = vshrl.u32 %v467, 7
      %v469 = vsub.s32 0, %v468
      %v470 = vrot.slane %v465, %v469
      %v471 = vlaneseq
      %v472 = vshrl.u32 %v471, 7
      %v473 = vsub.s32 1, %v472
      %v474 = vrot.slane %v465, %v473
      %v475 = vcombine.low %v470, %v474
      %476 = vrot.lane.b32.xlu0 %v475, 15
      %v477 = vpop.permute.xlu0 %476
      %v478 = vrot.slane %v477, 4
      %v479 = vsel %vm374, %v478, %v477
      %v482 = vmul.f32 %v463, %v479
      %v483 = vmul.f32 %v464, %v478
      %v486 = vcombine.high %v482, %v482
      %487 = vrot.lane.b32.xlu0 %v482, 113
      %v488 = vpop.permute.xlu0 %487
      %489 = vrot.lane.b32.xlu0 %v486, 113
      %v490 = vpop.permute.xlu0 %489
      %491 = vrot.lane.b32.xlu0 %v483, 113
      %v492 = vpop.permute.xlu0 %491
      %v493 = vsel %vm359, %v488, %v490
      %v494 = vsel %vm359, %v490, %v492
      %497 = vst [vmem:[#allocation4 + $0x30] sm:$0xf] %v493
      %498 = vst [vmem:[#allocation4 + $0x38] sm:$0xf] %v494
      %v499 = vld [vmem:[#allocation3 + $0x4] sm:$0xff]
      %v500 = vld [vmem:[#allocation3 + $0xc] sm:$0xf]
      %v503 = vcombine.low %v499, %v499
      %v504 = vcombine.low %v500, %v500
      %505 = vrot.lane.b32.xlu0 %v503, 112
      %v506 = vpop.permute.xlu0 %505
      %507 = vrot.lane.b32.xlu0 %v499, 112
      %v508 = vpop.permute.xlu0 %507
      %509 = vrot.lane.b32.xlu0 %v504, 112
      %v510 = vpop.permute.xlu0 %509
      %vm511 = vcmask 916480
      %v512 = vsel %vm511, %v506, %v508
      %v513 = vsel %vm511, %v508, %v510
      %516 = vst [vmem:[#allocation4 + $0x30] sm:$0xf0] %v512
      %517 = vst [vmem:[#allocation4 + $0x38] sm:$0xf0] %v513
      %v518 = vld [vmem:[#allocation3 + $0x4] sm:$0xff]
      %v519 = vld [vmem:[#allocation3 + $0xc] sm:$0xf]
      %v520 = vld [vmem:[%s344] sm:$0x3]
      %v522 = vlaneseq
      %v523 = vshrl.u32 %v522, 7
      %v524 = vsub.s32 0, %v523
      %v525 = vrot.slane %v520, %v524
      %v526 = vlaneseq
      %v527 = vshrl.u32 %v526, 7
      %v528 = vsub.s32 1, %v527
      %v529 = vrot.slane %v520, %v528
      %v530 = vcombine.low %v525, %v529
      %531 = vrot.lane.b32.xlu0 %v530, 17
      %v532 = vpop.permute.xlu0 %531
      %v533 = vrot.slane %v532, 4
      %v534 = vsel %vm316, %v533, %v532
      %v537 = vmul.f32 %v518, %v534
      %v538 = vmul.f32 %v519, %v533
      %v541 = vcombine.high %v537, %v537
      %542 = vrot.lane.b32.xlu0 %v537, 111
      %v543 = vpop.permute.xlu0 %542
      %544 = vrot.lane.b32.xlu0 %v541, 111
      %v545 = vpop.permute.xlu0 %544
      %546 = vrot.lane.b32.xlu0 %v538, 111
      %v547 = vpop.permute.xlu0 %546
      %v548 = vsel %vm301, %v543, %v545
      %v549 = vsel %vm301, %v545, %v547
      %552 = vst [vmem:[#allocation4 + $0x40] sm:$0xf] %v548
      %553 = vst [vmem:[#allocation4 + $0x48] sm:$0xf] %v549
      %v554 = vld [vmem:[#allocation4] sm:$0xff]
      %v555 = vld [vmem:[#allocation4 + $0x8] sm:$0xff]
      %v556 = vld [vmem:[#allocation4 + $0x10] sm:$0xff]
      %v557 = vld [vmem:[#allocation4 + $0x18] sm:$0xff]
      %v558 = vld [vmem:[#allocation4 + $0x20] sm:$0xff]
      %v559 = vld [vmem:[#allocation4 + $0x28] sm:$0xff]
      %v560 = vld [vmem:[#allocation4 + $0x30] sm:$0xff]
      %v561 = vld [vmem:[#allocation4 + $0x38] sm:$0xff]
      %v562 = vld [vmem:[#allocation4 + $0x40] sm:$0xf]
      %v563 = vld [vmem:[#allocation4 + $0x48] sm:$0xf]
      %vm564 = vcmask 293888
      %v566 = vsel %vm564, %v279, 0
      %v569 = vsel %vm564, %v280, 0
      %vm571 = vcmask 1043456
      %v573 = vsel %vm571, %v562, 0
      %v576 = vsel %vm571, %v563, 0
      %578 = vmatprep.subr.mxu0 %v555
      %579 = vmatpush1.msra.mxu0 %v554
      %580 = vmatprep.subr.mxu0 %v557
      %581 = vmatpush1.msra.mxu0 %v556
      %582 = vmatprep.subr.mxu0 %v559
      %583 = vmatpush1.msra.mxu0 %v558
      %584 = vmatprep.subr.mxu0 %v561
      %585 = vmatpush1.msra.mxu0 %v560
      %586 = vmatprep.subr.mxu0 %v576
      %587 = vmatpush1.msra.mxu0 %v573
      %588 = vmatprep.subr.mxu0 0.0
      %589 = vmatpush1.msra.mxu0 0.0
      %590 = vmatprep.subr.mxu0 0.0
      %591 = vmatpush1.msra.mxu0 0.0
      %592 = vmatprep.subr.mxu0 0.0
      %593 = vmatpush1.msra.mxu0 0.0
      %594 = vmatprep.subr.mxu0 0.0
      %595 = vmatpush1.msra.mxu0 0.0
      %596 = vmatprep.subr.mxu0 0.0
      %597 = vmatpush1.msra.mxu0 0.0
      %598 = vmatprep.subr.mxu0 0.0
      %599 = vmatpush1.msra.mxu0 0.0
      %600 = vmatprep.subr.mxu0 0.0
      %601 = vmatpush1.msra.mxu0 0.0
      %602 = vmatprep.subr.mxu0 0.0
      %603 = vmatpush1.msra.mxu0 0.0
      %604 = vmatprep.subr.mxu0 0.0
      %605 = vmatpush1.msra.mxu0 0.0
      %606 = vmatprep.subr.mxu0 0.0
      %607 = vmatpush1.msra.mxu0 0.0
      %608 = vmatprep.subr.mxu0 0.0
      %609 = vmatpush1.msra.mxu0 0.0
      %610 = vmatprep.subr.mxu0 0.0
      %611 = vmatpush1.msra.mxu0 0.0
      %612 = vmatprep.subr.mxu0 0.0
      %613 = vmatpush1.msra.mxu0 0.0
      %614 = vmatprep.subr.mxu0 0.0
      %615 = vmatpush1.msra.mxu0 0.0
      %616 = vmatprep.subr.mxu0 0.0
      %617 = vmatpush1.msra.mxu0 0.0
      %618 = vmatprep.subr.mxu0 0.0
      %619 = vmatpush1.msra.mxu0 0.0
      %620 = vmatprep.subr.mxu0 0.0
      %621 = vmatpush1.msra.mxu0 0.0
      %622 = vmatprep.subr.mxu0 0.0
      %623 = vmatpush1.msra.mxu0 0.0
      %624 = vmatprep.subr.mxu0 0.0
      %625 = vmatpush1.msra.mxu0 0.0
      %626 = vmatprep.subr.mxu0 0.0
      %627 = vmatpush1.msra.mxu0 0.0
      %628 = vmatprep.subr.mxu0 0.0
      %629 = vmatpush1.msra.mxu0 0.0
      %630 = vmatprep.subr.mxu0 0.0
      %631 = vmatpush1.msra.mxu0 0.0
      %632 = vmatprep.subr.mxu0 0.0
      %633 = vmatpush1.msra.mxu0 0.0
      %634 = vmatprep.subr.mxu0 0.0
      %635 = vmatpush1.msra.mxu0 0.0
      %636 = vmatprep.subr.mxu0 0.0
      %637 = vmatpush1.msra.mxu0 0.0
      %638 = vmatprep.subr.mxu0 0.0
      %639 = vmatpush1.msra.mxu0 0.0
      %640 = vmatprep.subr.mxu0 0.0
      %641 = vmatpush1.msra.mxu0 0.0
      %642 = vmatprep.mubr.f32.mxu0 0.0
      %643 = vmatmul.mubr.f32.gmra.mrb[0].mxu0 %v566
      %v644 = vpop.f32.mrb[0].mxu0
      %v645 = vadd.f32 0.0, %v644
      %v646 = vpop.f32.mrb[0].mxu0
      %v647 = vadd.f32 0.0, %v646
      %648 = vmatprep.mubr.f32.mxu0 0.0
      %649 = vmatmul.mubr.f32.gmra.mrb[0].mxu0 %v569
      %v650 = vpop.f32.mrb[0].mxu0
      %v651 = vadd.f32 0.0, %v650
      %v652 = vpop.f32.mrb[0].mxu0
      %v653 = vadd.f32 0.0, %v652
      %654 = vdwg.mxu0
      %v655 = vld [vmem:[%s4] sm:$0xff]
      %v656 = vld [vmem:[%s4 + $0x8] sm:$0xff]
      %v657 = vld [vmem:[%s4 + $0x10] sm:$0xff]
      %v658 = vld [vmem:[%s4 + $0x18] sm:$0xff]
      %v659 = vld [vmem:[%s4 + $0x20] sm:$0xff]
      %v660 = vld [vmem:[%s4 + $0x28] sm:$0xff]
      %v661 = vld [vmem:[%s4 + $0x30] sm:$0xff]
      %v662 = vld [vmem:[%s4 + $0x38] sm:$0xff]
      %v663 = vld [vmem:[%s4 + $0x40] sm:$0xff]
      %v664 = vld [vmem:[%s4 + $0x48] sm:$0xff]
      %v665 = vld [vmem:[%s4 + $0x50] sm:$0xff]
      %v666 = vld [vmem:[%s4 + $0x58] sm:$0xff]
      %v667 = vld [vmem:[%s4 + $0x60] sm:$0xff]
      %v668 = vld [vmem:[%s4 + $0x68] sm:$0xff]
      %v669 = vld [vmem:[%s4 + $0x70] sm:$0xff]
      %v670 = vld [vmem:[%s4 + $0x78] sm:$0xff]
      %v671 = vld [vmem:[%s4 + $0x80] sm:$0xff]
      %v672 = vld [vmem:[%s4 + $0x88] sm:$0xff]
      %v673 = vld [vmem:[%s4 + $0x90] sm:$0xff]
      %v674 = vld [vmem:[%s4 + $0x98] sm:$0xff]
      %v675 = vld [vmem:[%s4 + $0xa0] sm:$0xff]
      %v676 = vld [vmem:[%s4 + $0xa8] sm:$0xff]
      %v677 = vld [vmem:[%s4 + $0xb0] sm:$0xff]
      %v678 = vld [vmem:[%s4 + $0xb8] sm:$0xff]
      %v679 = vld [vmem:[%s4 + $0xc0] sm:$0xff]
      %v680 = vld [vmem:[%s4 + $0xc8] sm:$0xff]
      %v681 = vld [vmem:[%s4 + $0xd0] sm:$0xff]
      %v682 = vld [vmem:[%s4 + $0xd8] sm:$0xff]
      %v683 = vld [vmem:[%s4 + $0xe0] sm:$0xff]
      %v684 = vld [vmem:[%s4 + $0xe8] sm:$0xff]
      %v685 = vld [vmem:[%s4 + $0xf0] sm:$0xff]
      %v686 = vld [vmem:[%s4 + $0xf8] sm:$0xff]
      %v687 = vld [vmem:[%s4 + $0x100] sm:$0xff]
      %v688 = vld [vmem:[%s4 + $0x108] sm:$0xff]
      %v689 = vld [vmem:[%s4 + $0x110] sm:$0xff]
      %v690 = vld [vmem:[%s4 + $0x118] sm:$0xff]
      %v691 = vld [vmem:[%s4 + $0x120] sm:$0xff]
      %v692 = vld [vmem:[%s4 + $0x128] sm:$0xff]
      %v693 = vld [vmem:[%s4 + $0x130] sm:$0xff]
      %v694 = vld [vmem:[%s4 + $0x138] sm:$0xff]
      %v695 = vld [vmem:[%s4 + $0x140] sm:$0xff]
      %v696 = vld [vmem:[%s4 + $0x148] sm:$0xff]
      %v697 = vld [vmem:[%s4 + $0x150] sm:$0xff]
      %v698 = vld [vmem:[%s4 + $0x158] sm:$0xff]
      %v699 = vld [vmem:[%s4 + $0x160] sm:$0xff]
      %v700 = vld [vmem:[%s4 + $0x168] sm:$0xff]
      %v701 = vld [vmem:[%s4 + $0x170] sm:$0xff]
      %v702 = vld [vmem:[%s4 + $0x178] sm:$0xff]
      %v703 = vld [vmem:[%s4 + $0x180] sm:$0xff]
      %v704 = vld [vmem:[%s4 + $0x188] sm:$0xff]
      %v705 = vld [vmem:[%s4 + $0x190] sm:$0xff]
      %v706 = vld [vmem:[%s4 + $0x198] sm:$0xff]
      %v707 = vld [vmem:[%s4 + $0x1a0] sm:$0xff]
      %v708 = vld [vmem:[%s4 + $0x1a8] sm:$0xff]
      %v709 = vld [vmem:[%s4 + $0x1b0] sm:$0xff]
      %v710 = vld [vmem:[%s4 + $0x1b8] sm:$0xff]
      %v711 = vld [vmem:[%s4 + $0x1c0] sm:$0xff]
      %v712 = vld [vmem:[%s4 + $0x1c8] sm:$0xff]
      %v713 = vld [vmem:[%s4 + $0x1d0] sm:$0xff]
      %v714 = vld [vmem:[%s4 + $0x1d8] sm:$0xff]
      %v715 = vld [vmem:[%s4 + $0x1e0] sm:$0xff]
      %v716 = vld [vmem:[%s4 + $0x1e8] sm:$0xff]
      %v717 = vld [vmem:[%s4 + $0x1f0] sm:$0xff]
      %v718 = vld [vmem:[%s4 + $0x1f8] sm:$0xff]
      %v719 = vld [vmem:[%s4 + $0x200] sm:$0xff]
      %v720 = vld [vmem:[%s4 + $0x208] sm:$0xff]
      %v721 = vld [vmem:[%s4 + $0x210] sm:$0xff]
      %v722 = vld [vmem:[%s4 + $0x218] sm:$0xff]
      %v723 = vld [vmem:[%s4 + $0x220] sm:$0xff]
      %v724 = vld [vmem:[%s4 + $0x228] sm:$0xff]
      %v725 = vld [vmem:[%s4 + $0x230] sm:$0xff]
      %v726 = vld [vmem:[%s4 + $0x238] sm:$0xff]
      %v727 = vld [vmem:[%s4 + $0x240] sm:$0xff]
      %v728 = vld [vmem:[%s4 + $0x248] sm:$0xff]
      %v729 = vld [vmem:[%s4 + $0x250] sm:$0xff]
      %v730 = vld [vmem:[%s4 + $0x258] sm:$0xff]
      %v731 = vld [vmem:[%s4 + $0x260] sm:$0xff]
      %v732 = vld [vmem:[%s4 + $0x268] sm:$0xff]
      %v733 = vld [vmem:[%s4 + $0x270] sm:$0xff]
      %v734 = vld [vmem:[%s4 + $0x278] sm:$0xff]
      %v735 = vld [vmem:[%s4 + $0x280] sm:$0xff]
      %v736 = vld [vmem:[%s4 + $0x288] sm:$0xff]
      %v737 = vld [vmem:[%s4 + $0x290] sm:$0xff]
      %v738 = vld [vmem:[%s4 + $0x298] sm:$0xff]
      %v739 = vld [vmem:[%s4 + $0x2a0] sm:$0xff]
      %v740 = vld [vmem:[%s4 + $0x2a8] sm:$0xff]
      %v741 = vld [vmem:[%s4 + $0x2b0] sm:$0xff]
      %v742 = vld [vmem:[%s4 + $0x2b8] sm:$0xff]
      %v743 = vld [vmem:[%s4 + $0x2c0] sm:$0xff]
      %v744 = vld [vmem:[%s4 + $0x2c8] sm:$0xff]
      %v745 = vld [vmem:[%s4 + $0x2d0] sm:$0xff]
      %v746 = vld [vmem:[%s4 + $0x2d8] sm:$0xff]
      %v747 = vld [vmem:[%s4 + $0x2e0] sm:$0xff]
      %v748 = vld [vmem:[%s4 + $0x2e8] sm:$0xff]
      %v749 = vld [vmem:[%s4 + $0x2f0] sm:$0xff]
      %v750 = vld [vmem:[%s4 + $0x2f8] sm:$0xff]
      %v751 = vld [vmem:[%s4 + $0x300] sm:$0xff]
      %v752 = vld [vmem:[%s4 + $0x308] sm:$0xff]
      %v753 = vld [vmem:[%s4 + $0x310] sm:$0xff]
      %v754 = vld [vmem:[%s4 + $0x318] sm:$0xff]
      %v755 = vld [vmem:[%s4 + $0x320] sm:$0xff]
      %v756 = vld [vmem:[%s4 + $0x328] sm:$0xff]
      %v757 = vld [vmem:[%s4 + $0x330] sm:$0xff]
      %v758 = vld [vmem:[%s4 + $0x338] sm:$0xff]
      %v759 = vld [vmem:[%s4 + $0x340] sm:$0xff]
      %v760 = vld [vmem:[%s4 + $0x348] sm:$0xff]
      %v761 = vld [vmem:[%s4 + $0x350] sm:$0xff]
      %v762 = vld [vmem:[%s4 + $0x358] sm:$0xff]
      %v763 = vld [vmem:[%s4 + $0x360] sm:$0xff]
      %v764 = vld [vmem:[%s4 + $0x368] sm:$0xff]
      %v765 = vld [vmem:[%s4 + $0x370] sm:$0xff]
      %v766 = vld [vmem:[%s4 + $0x378] sm:$0xff]
      %v767 = vld [vmem:[%s4 + $0x380] sm:$0xff]
      %v768 = vld [vmem:[%s4 + $0x388] sm:$0xff]
      %v769 = vld [vmem:[%s4 + $0x390] sm:$0xff]
      %v770 = vld [vmem:[%s4 + $0x398] sm:$0xff]
      %v771 = vld [vmem:[%s4 + $0x3a0] sm:$0xff]
      %v772 = vld [vmem:[%s4 + $0x3a8] sm:$0xff]
      %v773 = vld [vmem:[%s4 + $0x3b0] sm:$0xff]
      %v774 = vld [vmem:[%s4 + $0x3b8] sm:$0xff]
      %v775 = vld [vmem:[%s4 + $0x3c0] sm:$0xff]
      %v776 = vld [vmem:[%s4 + $0x3c8] sm:$0xff]
      %v777 = vld [vmem:[%s4 + $0x3d0] sm:$0xff]
      %v778 = vld [vmem:[%s4 + $0x3d8] sm:$0xff]
      %v779 = vld [vmem:[%s4 + $0x3e0] sm:$0xff]
      %v780 = vld [vmem:[%s4 + $0x3e8] sm:$0xff]
      %v781 = vld [vmem:[%s4 + $0x3f0] sm:$0xff]
      %v782 = vld [vmem:[%s4 + $0x3f8] sm:$0xff]
      %v783 = vld [vmem:[%s4 + $0x400] sm:$0xff]
      %v784 = vld [vmem:[%s4 + $0x408] sm:$0xff]
      %v785 = vld [vmem:[%s4 + $0x410] sm:$0xff]
      %v786 = vld [vmem:[%s4 + $0x418] sm:$0xff]
      %v787 = vld [vmem:[%s4 + $0x420] sm:$0xff]
      %v788 = vld [vmem:[%s4 + $0x428] sm:$0xff]
      %v789 = vld [vmem:[%s4 + $0x430] sm:$0xff]
      %v790 = vld [vmem:[%s4 + $0x438] sm:$0xff]
      %v791 = vld [vmem:[%s4 + $0x440] sm:$0xff]
      %v792 = vld [vmem:[%s4 + $0x448] sm:$0xff]
      %v793 = vld [vmem:[%s4 + $0x450] sm:$0xff]
      %v794 = vld [vmem:[%s4 + $0x458] sm:$0xff]
      %v795 = vld [vmem:[%s4 + $0x460] sm:$0xff]
      %v796 = vld [vmem:[%s4 + $0x468] sm:$0xff]
      %v797 = vld [vmem:[%s4 + $0x470] sm:$0xff]
      %v798 = vld [vmem:[%s4 + $0x478] sm:$0xff]
      %v799 = vld [vmem:[%s4 + $0x480] sm:$0xff]
      %v800 = vld [vmem:[%s4 + $0x488] sm:$0xff]
      %v801 = vld [vmem:[%s4 + $0x490] sm:$0xff]
      %v802 = vld [vmem:[%s4 + $0x498] sm:$0xff]
      %v803 = vld [vmem:[%s4 + $0x4a0] sm:$0xff]
      %v804 = vld [vmem:[%s4 + $0x4a8] sm:$0xff]
      %v805 = vld [vmem:[%s4 + $0x4b0] sm:$0xff]
      %v806 = vld [vmem:[%s4 + $0x4b8] sm:$0xff]
      %v807 = vld [vmem:[%s4 + $0x4c0] sm:$0xff]
      %v808 = vld [vmem:[%s4 + $0x4c8] sm:$0xff]
      %v809 = vld [vmem:[%s4 + $0x4d0] sm:$0xff]
      %v810 = vld [vmem:[%s4 + $0x4d8] sm:$0xff]
      %v811 = vld [vmem:[%s4 + $0x4e0] sm:$0xff]
      %v812 = vld [vmem:[%s4 + $0x4e8] sm:$0xff]
      %v813 = vld [vmem:[%s4 + $0x4f0] sm:$0xff]
      %v814 = vld [vmem:[%s4 + $0x4f8] sm:$0xff]
      %v815 = vld [vmem:[%s4 + $0x500] sm:$0xff]
      %v816 = vld [vmem:[%s4 + $0x508] sm:$0xff]
      %v817 = vld [vmem:[%s4 + $0x510] sm:$0xff]
      %v818 = vld [vmem:[%s4 + $0x518] sm:$0xff]
      %v819 = vld [vmem:[%s4 + $0x520] sm:$0xff]
      %v820 = vld [vmem:[%s4 + $0x528] sm:$0xff]
      %v821 = vld [vmem:[%s4 + $0x530] sm:$0xff]
      %v822 = vld [vmem:[%s4 + $0x538] sm:$0xff]
      %v823 = vld [vmem:[%s4 + $0x540] sm:$0xff]
      %v824 = vld [vmem:[%s4 + $0x548] sm:$0xff]
      %v825 = vld [vmem:[%s4 + $0x550] sm:$0xff]
      %v826 = vld [vmem:[%s4 + $0x558] sm:$0xff]
      %v827 = vld [vmem:[%s4 + $0x560] sm:$0xff]
      %v828 = vld [vmem:[%s4 + $0x568] sm:$0xff]
      %v829 = vld [vmem:[%s4 + $0x570] sm:$0xff]
      %v830 = vld [vmem:[%s4 + $0x578] sm:$0xff]
      %v831 = vld [vmem:[%s4 + $0x580] sm:$0xff]
      %v832 = vld [vmem:[%s4 + $0x588] sm:$0xff]
      %v833 = vld [vmem:[%s4 + $0x590] sm:$0xff]
      %v834 = vld [vmem:[%s4 + $0x598] sm:$0xff]
      %v835 = vld [vmem:[%s4 + $0x5a0] sm:$0xff]
      %v836 = vld [vmem:[%s4 + $0x5a8] sm:$0xff]
      %v837 = vld [vmem:[%s4 + $0x5b0] sm:$0xff]
      %v838 = vld [vmem:[%s4 + $0x5b8] sm:$0xff]
      %v839 = vld [vmem:[%s4 + $0x5c0] sm:$0xff]
      %v840 = vld [vmem:[%s4 + $0x5c8] sm:$0xff]
      %v841 = vld [vmem:[%s4 + $0x5d0] sm:$0xff]
      %v842 = vld [vmem:[%s4 + $0x5d8] sm:$0xff]
      %v843 = vld [vmem:[%s4 + $0x5e0] sm:$0xff]
      %v844 = vld [vmem:[%s4 + $0x5e8] sm:$0xff]
      %v845 = vld [vmem:[%s4 + $0x5f0] sm:$0xff]
      %v846 = vld [vmem:[%s4 + $0x5f8] sm:$0xff]
      %v847 = vld [vmem:[%s4 + $0x600] sm:$0xff]
      %v848 = vld [vmem:[%s4 + $0x608] sm:$0xff]
      %v849 = vld [vmem:[%s4 + $0x610] sm:$0xff]
      %v850 = vld [vmem:[%s4 + $0x618] sm:$0xff]
      %v851 = vld [vmem:[%s4 + $0x620] sm:$0xff]
      %v852 = vld [vmem:[%s4 + $0x628] sm:$0xff]
      %v853 = vld [vmem:[%s4 + $0x630] sm:$0xff]
      %v854 = vld [vmem:[%s4 + $0x638] sm:$0xff]
      %v855 = vld [vmem:[%s4 + $0x640] sm:$0xff]
      %v856 = vld [vmem:[%s4 + $0x648] sm:$0xff]
      %v857 = vld [vmem:[%s4 + $0x650] sm:$0xff]
      %v858 = vld [vmem:[%s4 + $0x658] sm:$0xff]
      %v859 = vld [vmem:[%s4 + $0x660] sm:$0xff]
      %v860 = vld [vmem:[%s4 + $0x668] sm:$0xff]
      %v861 = vld [vmem:[%s4 + $0x670] sm:$0xff]
      %v862 = vld [vmem:[%s4 + $0x678] sm:$0xff]
      %v863 = vld [vmem:[%s4 + $0x680] sm:$0xff]
      %v864 = vld [vmem:[%s4 + $0x688] sm:$0xff]
      %v865 = vld [vmem:[%s4 + $0x690] sm:$0xff]
      %v866 = vld [vmem:[%s4 + $0x698] sm:$0xff]
      %v867 = vld [vmem:[%s4 + $0x6a0] sm:$0xff]
      %v868 = vld [vmem:[%s4 + $0x6a8] sm:$0xff]
      %v869 = vld [vmem:[%s4 + $0x6b0] sm:$0xff]
      %v870 = vld [vmem:[%s4 + $0x6b8] sm:$0xff]
      %v871 = vld [vmem:[%s4 + $0x6c0] sm:$0xff]
      %v872 = vld [vmem:[%s4 + $0x6c8] sm:$0xff]
      %v873 = vld [vmem:[%s4 + $0x6d0] sm:$0xff]
      %v874 = vld [vmem:[%s4 + $0x6d8] sm:$0xff]
      %v875 = vld [vmem:[%s4 + $0x6e0] sm:$0xff]
      %v876 = vld [vmem:[%s4 + $0x6e8] sm:$0xff]
      %v877 = vld [vmem:[%s4 + $0x6f0] sm:$0xff]
      %v878 = vld [vmem:[%s4 + $0x6f8] sm:$0xff]
      %v879 = vld [vmem:[%s4 + $0x700] sm:$0xff]
      %v880 = vld [vmem:[%s4 + $0x708] sm:$0xff]
      %v881 = vld [vmem:[%s4 + $0x710] sm:$0xff]
      %v882 = vld [vmem:[%s4 + $0x718] sm:$0xff]
      %v883 = vld [vmem:[%s4 + $0x720] sm:$0xff]
      %v884 = vld [vmem:[%s4 + $0x728] sm:$0xff]
      %v885 = vld [vmem:[%s4 + $0x730] sm:$0xff]
      %v886 = vld [vmem:[%s4 + $0x738] sm:$0xff]
      %v887 = vld [vmem:[%s4 + $0x740] sm:$0xff]
      %v888 = vld [vmem:[%s4 + $0x748] sm:$0xff]
      %v889 = vld [vmem:[%s4 + $0x750] sm:$0xff]
      %v890 = vld [vmem:[%s4 + $0x758] sm:$0xff]
      %v891 = vld [vmem:[%s4 + $0x760] sm:$0xff]
      %v892 = vld [vmem:[%s4 + $0x768] sm:$0xff]
      %v893 = vld [vmem:[%s4 + $0x770] sm:$0xff]
      %v894 = vld [vmem:[%s4 + $0x778] sm:$0xff]
      %v895 = vld [vmem:[%s4 + $0x780] sm:$0xff]
      %v896 = vld [vmem:[%s4 + $0x788] sm:$0xff]
      %v897 = vld [vmem:[%s4 + $0x790] sm:$0xff]
      %v898 = vld [vmem:[%s4 + $0x798] sm:$0xff]
      %v899 = vld [vmem:[%s4 + $0x7a0] sm:$0xff]
      %v900 = vld [vmem:[%s4 + $0x7a8] sm:$0xff]
      %v901 = vld [vmem:[%s4 + $0x7b0] sm:$0xff]
      %v902 = vld [vmem:[%s4 + $0x7b8] sm:$0xff]
      %v903 = vld [vmem:[%s4 + $0x7c0] sm:$0xff]
      %v904 = vld [vmem:[%s4 + $0x7c8] sm:$0xff]
      %v905 = vld [vmem:[%s4 + $0x7d0] sm:$0xff]
      %v906 = vld [vmem:[%s4 + $0x7d8] sm:$0xff]
      %v907 = vld [vmem:[%s4 + $0x7e0] sm:$0xff]
      %v908 = vld [vmem:[%s4 + $0x7e8] sm:$0xff]
      %v909 = vld [vmem:[%s4 + $0x7f0] sm:$0xff]
      %v910 = vld [vmem:[%s4 + $0x7f8] sm:$0xff]
      %s911 = scalar_lea.vmem %s4, 2048
      %v912 = vld [vmem:[%s911] sm:$0xff]
      %v913 = vld [vmem:[%s911 + $0x8] sm:$0xff]
      %v914 = vld [vmem:[%s911 + $0x10] sm:$0xff]
      %v915 = vld [vmem:[%s911 + $0x18] sm:$0xff]
      %v916 = vld [vmem:[%s911 + $0x20] sm:$0xff]
      %v917 = vld [vmem:[%s911 + $0x28] sm:$0xff]
      %v918 = vld [vmem:[%s911 + $0x30] sm:$0xff]
      %v919 = vld [vmem:[%s911 + $0x38] sm:$0xff]
      %v920 = vld [vmem:[%s911 + $0x40] sm:$0xff]
      %v921 = vld [vmem:[%s911 + $0x48] sm:$0xff]
      %v922 = vld [vmem:[%s911 + $0x50] sm:$0xff]
      %v923 = vld [vmem:[%s911 + $0x58] sm:$0xff]
      %v924 = vld [vmem:[%s911 + $0x60] sm:$0xff]
      %v925 = vld [vmem:[%s911 + $0x68] sm:$0xff]
      %v926 = vld [vmem:[%s911 + $0x70] sm:$0xff]
      %v927 = vld [vmem:[%s911 + $0x78] sm:$0xff]
      %v928 = vld [vmem:[%s911 + $0x80] sm:$0xff]
      %v929 = vld [vmem:[%s911 + $0x88] sm:$0xff]
      %v930 = vld [vmem:[%s911 + $0x90] sm:$0xff]
      %v931 = vld [vmem:[%s911 + $0x98] sm:$0xff]
      %v932 = vld [vmem:[%s911 + $0xa0] sm:$0xff]
      %v933 = vld [vmem:[%s911 + $0xa8] sm:$0xff]
      %v934 = vld [vmem:[%s911 + $0xb0] sm:$0xff]
      %v935 = vld [vmem:[%s911 + $0xb8] sm:$0xff]
      %v936 = vld [vmem:[%s911 + $0xc0] sm:$0xff]
      %v937 = vld [vmem:[%s911 + $0xc8] sm:$0xff]
      %v938 = vld [vmem:[%s911 + $0xd0] sm:$0xff]
      %v939 = vld [vmem:[%s911 + $0xd8] sm:$0xff]
      %v940 = vld [vmem:[%s911 + $0xe0] sm:$0xff]
      %v941 = vld [vmem:[%s911 + $0xe8] sm:$0xff]
      %v942 = vld [vmem:[%s911 + $0xf0] sm:$0xff]
      %v943 = vld [vmem:[%s911 + $0xf8] sm:$0xff]
      %v944 = vld [vmem:[%s911 + $0x100] sm:$0xff]
      %v945 = vld [vmem:[%s911 + $0x108] sm:$0xff]
      %v946 = vld [vmem:[%s911 + $0x110] sm:$0xff]
      %v947 = vld [vmem:[%s911 + $0x118] sm:$0xff]
      %v948 = vld [vmem:[%s911 + $0x120] sm:$0xff]
      %v949 = vld [vmem:[%s911 + $0x128] sm:$0xff]
      %v950 = vld [vmem:[%s911 + $0x130] sm:$0xff]
      %v951 = vld [vmem:[%s911 + $0x138] sm:$0xff]
      %v952 = vld [vmem:[%s911 + $0x140] sm:$0xff]
      %v953 = vld [vmem:[%s911 + $0x148] sm:$0xff]
      %v954 = vld [vmem:[%s911 + $0x150] sm:$0xff]
      %v955 = vld [vmem:[%s911 + $0x158] sm:$0xff]
      %v956 = vld [vmem:[%s911 + $0x160] sm:$0xff]
      %v957 = vld [vmem:[%s911 + $0x168] sm:$0xff]
      %v958 = vld [vmem:[%s911 + $0x170] sm:$0xff]
      %v959 = vld [vmem:[%s911 + $0x178] sm:$0xff]
      %v960 = vld [vmem:[%s911 + $0x180] sm:$0xff]
      %v961 = vld [vmem:[%s911 + $0x188] sm:$0xff]
      %v962 = vld [vmem:[%s911 + $0x190] sm:$0xff]
      %v963 = vld [vmem:[%s911 + $0x198] sm:$0xff]
      %v964 = vld [vmem:[%s911 + $0x1a0] sm:$0xff]
      %v965 = vld [vmem:[%s911 + $0x1a8] sm:$0xff]
      %v966 = vld [vmem:[%s911 + $0x1b0] sm:$0xff]
      %v967 = vld [vmem:[%s911 + $0x1b8] sm:$0xff]
      %v968 = vld [vmem:[%s911 + $0x1c0] sm:$0xff]
      %v969 = vld [vmem:[%s911 + $0x1c8] sm:$0xff]
      %v970 = vld [vmem:[%s911 + $0x1d0] sm:$0xff]
      %v971 = vld [vmem:[%s911 + $0x1d8] sm:$0xff]
      %v972 = vld [vmem:[%s911 + $0x1e0] sm:$0xff]
      %v973 = vld [vmem:[%s911 + $0x1e8] sm:$0xff]
      %v974 = vld [vmem:[%s911 + $0x1f0] sm:$0xff]
      %v975 = vld [vmem:[%s911 + $0x1f8] sm:$0xff]
      %v976 = vld [vmem:[%s911 + $0x200] sm:$0xff]
      %v977 = vld [vmem:[%s911 + $0x208] sm:$0xff]
      %v978 = vld [vmem:[%s911 + $0x210] sm:$0xff]
      %v979 = vld [vmem:[%s911 + $0x218] sm:$0xff]
      %v980 = vld [vmem:[%s911 + $0x220] sm:$0xff]
      %v981 = vld [vmem:[%s911 + $0x228] sm:$0xff]
      %v982 = vld [vmem:[%s911 + $0x230] sm:$0xff]
      %v983 = vld [vmem:[%s911 + $0x238] sm:$0xff]
      %v984 = vld [vmem:[%s911 + $0x240] sm:$0xff]
      %v985 = vld [vmem:[%s911 + $0x248] sm:$0xff]
      %v986 = vld [vmem:[%s911 + $0x250] sm:$0xff]
      %v987 = vld [vmem:[%s911 + $0x258] sm:$0xff]
      %v988 = vld [vmem:[%s911 + $0x260] sm:$0xff]
      %v989 = vld [vmem:[%s911 + $0x268] sm:$0xff]
      %v990 = vld [vmem:[%s911 + $0x270] sm:$0xff]
      %v991 = vld [vmem:[%s911 + $0x278] sm:$0xff]
      %v992 = vld [vmem:[%s911 + $0x280] sm:$0xff]
      %v993 = vld [vmem:[%s911 + $0x288] sm:$0xff]
      %v994 = vld [vmem:[%s911 + $0x290] sm:$0xff]
      %v995 = vld [vmem:[%s911 + $0x298] sm:$0xff]
      %v996 = vld [vmem:[%s911 + $0x2a0] sm:$0xff]
      %v997 = vld [vmem:[%s911 + $0x2a8] sm:$0xff]
      %v998 = vld [vmem:[%s911 + $0x2b0] sm:$0xff]
      %v999 = vld [vmem:[%s911 + $0x2b8] sm:$0xff]
      %v1000 = vld [vmem:[%s911 + $0x2c0] sm:$0xff]
      %v1001 = vld [vmem:[%s911 + $0x2c8] sm:$0xff]
      %v1002 = vld [vmem:[%s911 + $0x2d0] sm:$0xff]
      %v1003 = vld [vmem:[%s911 + $0x2d8] sm:$0xff]
      %v1004 = vld [vmem:[%s911 + $0x2e0] sm:$0xff]
      %v1005 = vld [vmem:[%s911 + $0x2e8] sm:$0xff]
      %v1006 = vld [vmem:[%s911 + $0x2f0] sm:$0xff]
      %v1007 = vld [vmem:[%s911 + $0x2f8] sm:$0xff]
      %v1008 = vld [vmem:[%s911 + $0x300] sm:$0xff]
      %v1009 = vld [vmem:[%s911 + $0x308] sm:$0xff]
      %v1010 = vld [vmem:[%s911 + $0x310] sm:$0xff]
      %v1011 = vld [vmem:[%s911 + $0x318] sm:$0xff]
      %v1012 = vld [vmem:[%s911 + $0x320] sm:$0xff]
      %v1013 = vld [vmem:[%s911 + $0x328] sm:$0xff]
      %v1014 = vld [vmem:[%s911 + $0x330] sm:$0xff]
      %v1015 = vld [vmem:[%s911 + $0x338] sm:$0xff]
      %v1016 = vld [vmem:[%s911 + $0x340] sm:$0xff]
      %v1017 = vld [vmem:[%s911 + $0x348] sm:$0xff]
      %v1018 = vld [vmem:[%s911 + $0x350] sm:$0xff]
      %v1019 = vld [vmem:[%s911 + $0x358] sm:$0xff]
      %v1020 = vld [vmem:[%s911 + $0x360] sm:$0xff]
      %v1021 = vld [vmem:[%s911 + $0x368] sm:$0xff]
      %v1022 = vld [vmem:[%s911 + $0x370] sm:$0xff]
      %v1023 = vld [vmem:[%s911 + $0x378] sm:$0xff]
      %v1024 = vld [vmem:[%s911 + $0x380] sm:$0xff]
      %v1025 = vld [vmem:[%s911 + $0x388] sm:$0xff]
      %v1026 = vld [vmem:[%s911 + $0x390] sm:$0xff]
      %v1027 = vld [vmem:[%s911 + $0x398] sm:$0xff]
      %v1028 = vld [vmem:[%s911 + $0x3a0] sm:$0xff]
      %v1029 = vld [vmem:[%s911 + $0x3a8] sm:$0xff]
      %v1030 = vld [vmem:[%s911 + $0x3b0] sm:$0xff]
      %v1031 = vld [vmem:[%s911 + $0x3b8] sm:$0xff]
      %v1032 = vld [vmem:[%s911 + $0x3c0] sm:$0xff]
      %v1033 = vld [vmem:[%s911 + $0x3c8] sm:$0xff]
      %v1034 = vld [vmem:[%s911 + $0x3d0] sm:$0xff]
      %v1035 = vld [vmem:[%s911 + $0x3d8] sm:$0xff]
      %v1036 = vld [vmem:[%s911 + $0x3e0] sm:$0xff]
      %v1037 = vld [vmem:[%s911 + $0x3e8] sm:$0xff]
      %v1038 = vld [vmem:[%s911 + $0x3f0] sm:$0xff]
      %v1039 = vld [vmem:[%s911 + $0x3f8] sm:$0xff]
      %v1040 = vld [vmem:[%s911 + $0x400] sm:$0xff]
      %v1041 = vld [vmem:[%s911 + $0x408] sm:$0xff]
      %v1042 = vld [vmem:[%s911 + $0x410] sm:$0xff]
      %v1043 = vld [vmem:[%s911 + $0x418] sm:$0xff]
      %v1044 = vld [vmem:[%s911 + $0x420] sm:$0xff]
      %v1045 = vld [vmem:[%s911 + $0x428] sm:$0xff]
      %v1046 = vld [vmem:[%s911 + $0x430] sm:$0xff]
      %v1047 = vld [vmem:[%s911 + $0x438] sm:$0xff]
      %v1048 = vld [vmem:[%s911 + $0x440] sm:$0xff]
      %v1049 = vld [vmem:[%s911 + $0x448] sm:$0xff]
      %v1050 = vld [vmem:[%s911 + $0x450] sm:$0xff]
      %v1051 = vld [vmem:[%s911 + $0x458] sm:$0xff]
      %v1052 = vld [vmem:[%s911 + $0x460] sm:$0xff]
      %v1053 = vld [vmem:[%s911 + $0x468] sm:$0xff]
      %v1054 = vld [vmem:[%s911 + $0x470] sm:$0xff]
      %v1055 = vld [vmem:[%s911 + $0x478] sm:$0xff]
      %v1056 = vld [vmem:[%s911 + $0x480] sm:$0xff]
      %v1057 = vld [vmem:[%s911 + $0x488] sm:$0xff]
      %v1058 = vld [vmem:[%s911 + $0x490] sm:$0xff]
      %v1059 = vld [vmem:[%s911 + $0x498] sm:$0xff]
      %v1060 = vld [vmem:[%s911 + $0x4a0] sm:$0xff]
      %v1061 = vld [vmem:[%s911 + $0x4a8] sm:$0xff]
      %v1062 = vld [vmem:[%s911 + $0x4b0] sm:$0xff]
      %v1063 = vld [vmem:[%s911 + $0x4b8] sm:$0xff]
      %v1064 = vld [vmem:[%s911 + $0x4c0] sm:$0xff]
      %v1065 = vld [vmem:[%s911 + $0x4c8] sm:$0xff]
      %v1066 = vld [vmem:[%s911 + $0x4d0] sm:$0xff]
      %v1067 = vld [vmem:[%s911 + $0x4d8] sm:$0xff]
      %v1068 = vld [vmem:[%s911 + $0x4e0] sm:$0xff]
      %v1069 = vld [vmem:[%s911 + $0x4e8] sm:$0xff]
      %v1070 = vld [vmem:[%s911 + $0x4f0] sm:$0xff]
      %v1071 = vld [vmem:[%s911 + $0x4f8] sm:$0xff]
      %v1072 = vld [vmem:[%s911 + $0x500] sm:$0xff]
      %v1073 = vld [vmem:[%s911 + $0x508] sm:$0xff]
      %v1074 = vld [vmem:[%s911 + $0x510] sm:$0xff]
      %v1075 = vld [vmem:[%s911 + $0x518] sm:$0xff]
      %v1076 = vld [vmem:[%s911 + $0x520] sm:$0xff]
      %v1077 = vld [vmem:[%s911 + $0x528] sm:$0xff]
      %v1078 = vld [vmem:[%s911 + $0x530] sm:$0xff]
      %v1079 = vld [vmem:[%s911 + $0x538] sm:$0xff]
      %v1080 = vld [vmem:[%s911 + $0x540] sm:$0xff]
      %v1081 = vld [vmem:[%s911 + $0x548] sm:$0xff]
      %v1082 = vld [vmem:[%s911 + $0x550] sm:$0xff]
      %v1083 = vld [vmem:[%s911 + $0x558] sm:$0xff]
      %v1084 = vld [vmem:[%s911 + $0x560] sm:$0xff]
      %v1085 = vld [vmem:[%s911 + $0x568] sm:$0xff]
      %v1086 = vld [vmem:[%s911 + $0x570] sm:$0xff]
      %v1087 = vld [vmem:[%s911 + $0x578] sm:$0xff]
      %v1088 = vld [vmem:[%s911 + $0x580] sm:$0xff]
      %v1089 = vld [vmem:[%s911 + $0x588] sm:$0xff]
      %v1090 = vld [vmem:[%s911 + $0x590] sm:$0xff]
      %v1091 = vld [vmem:[%s911 + $0x598] sm:$0xff]
      %v1092 = vld [vmem:[%s911 + $0x5a0] sm:$0xff]
      %v1093 = vld [vmem:[%s911 + $0x5a8] sm:$0xff]
      %v1094 = vld [vmem:[%s911 + $0x5b0] sm:$0xff]
      %v1095 = vld [vmem:[%s911 + $0x5b8] sm:$0xff]
      %v1096 = vld [vmem:[%s911 + $0x5c0] sm:$0xff]
      %v1097 = vld [vmem:[%s911 + $0x5c8] sm:$0xff]
      %v1098 = vld [vmem:[%s911 + $0x5d0] sm:$0xff]
      %v1099 = vld [vmem:[%s911 + $0x5d8] sm:$0xff]
      %v1100 = vld [vmem:[%s911 + $0x5e0] sm:$0xff]
      %v1101 = vld [vmem:[%s911 + $0x5e8] sm:$0xff]
      %v1102 = vld [vmem:[%s911 + $0x5f0] sm:$0xff]
      %v1103 = vld [vmem:[%s911 + $0x5f8] sm:$0xff]
      %v1104 = vld [vmem:[%s911 + $0x600] sm:$0xff]
      %v1105 = vld [vmem:[%s911 + $0x608] sm:$0xff]
      %v1106 = vld [vmem:[%s911 + $0x610] sm:$0xff]
      %v1107 = vld [vmem:[%s911 + $0x618] sm:$0xff]
      %v1108 = vld [vmem:[%s911 + $0x620] sm:$0xff]
      %v1109 = vld [vmem:[%s911 + $0x628] sm:$0xff]
      %v1110 = vld [vmem:[%s911 + $0x630] sm:$0xff]
      %v1111 = vld [vmem:[%s911 + $0x638] sm:$0xff]
      %v1112 = vld [vmem:[%s911 + $0x640] sm:$0xff]
      %v1113 = vld [vmem:[%s911 + $0x648] sm:$0xff]
      %v1114 = vld [vmem:[%s911 + $0x650] sm:$0xff]
      %v1115 = vld [vmem:[%s911 + $0x658] sm:$0xff]
      %v1116 = vld [vmem:[%s911 + $0x660] sm:$0xff]
      %v1117 = vld [vmem:[%s911 + $0x668] sm:$0xff]
      %v1118 = vld [vmem:[%s911 + $0x670] sm:$0xff]
      %v1119 = vld [vmem:[%s911 + $0x678] sm:$0xff]
      %v1120 = vld [vmem:[%s911 + $0x680] sm:$0xff]
      %v1121 = vld [vmem:[%s911 + $0x688] sm:$0xff]
      %v1122 = vld [vmem:[%s911 + $0x690] sm:$0xff]
      %v1123 = vld [vmem:[%s911 + $0x698] sm:$0xff]
      %v1124 = vld [vmem:[%s911 + $0x6a0] sm:$0xff]
      %v1125 = vld [vmem:[%s911 + $0x6a8] sm:$0xff]
      %v1126 = vld [vmem:[%s911 + $0x6b0] sm:$0xff]
      %v1127 = vld [vmem:[%s911 + $0x6b8] sm:$0xff]
      %v1128 = vld [vmem:[%s911 + $0x6c0] sm:$0xff]
      %v1129 = vld [vmem:[%s911 + $0x6c8] sm:$0xff]
      %v1130 = vld [vmem:[%s911 + $0x6d0] sm:$0xff]
      %v1131 = vld [vmem:[%s911 + $0x6d8] sm:$0xff]
      %v1132 = vld [vmem:[%s911 + $0x6e0] sm:$0xff]
      %v1133 = vld [vmem:[%s911 + $0x6e8] sm:$0xff]
      %v1134 = vld [vmem:[%s911 + $0x6f0] sm:$0xff]
      %v1135 = vld [vmem:[%s911 + $0x6f8] sm:$0xff]
      %v1136 = vld [vmem:[%s911 + $0x700] sm:$0xff]
      %v1137 = vld [vmem:[%s911 + $0x708] sm:$0xff]
      %v1138 = vld [vmem:[%s911 + $0x710] sm:$0xff]
      %v1139 = vld [vmem:[%s911 + $0x718] sm:$0xff]
      %v1140 = vld [vmem:[%s911 + $0x720] sm:$0xff]
      %v1141 = vld [vmem:[%s911 + $0x728] sm:$0xff]
      %v1142 = vld [vmem:[%s911 + $0x730] sm:$0xff]
      %v1143 = vld [vmem:[%s911 + $0x738] sm:$0xff]
      %v1144 = vld [vmem:[%s911 + $0x740] sm:$0xff]
      %v1145 = vld [vmem:[%s911 + $0x748] sm:$0xff]
      %v1146 = vld [vmem:[%s911 + $0x750] sm:$0xff]
      %v1147 = vld [vmem:[%s911 + $0x758] sm:$0xff]
      %v1148 = vld [vmem:[%s911 + $0x760] sm:$0xff]
      %v1149 = vld [vmem:[%s911 + $0x768] sm:$0xff]
      %v1150 = vld [vmem:[%s911 + $0x770] sm:$0xff]
      %v1151 = vld [vmem:[%s911 + $0x778] sm:$0xff]
      %v1152 = vld [vmem:[%s911 + $0x780] sm:$0xff]
      %v1153 = vld [vmem:[%s911 + $0x788] sm:$0xff]
      %v1154 = vld [vmem:[%s911 + $0x790] sm:$0xff]
      %v1155 = vld [vmem:[%s911 + $0x798] sm:$0xff]
      %v1156 = vld [vmem:[%s911 + $0x7a0] sm:$0xff]
      %v1157 = vld [vmem:[%s911 + $0x7a8] sm:$0xff]
      %v1158 = vld [vmem:[%s911 + $0x7b0] sm:$0xff]
      %v1159 = vld [vmem:[%s911 + $0x7b8] sm:$0xff]
      %v1160 = vld [vmem:[%s911 + $0x7c0] sm:$0xff]
      %v1161 = vld [vmem:[%s911 + $0x7c8] sm:$0xff]
      %v1162 = vld [vmem:[%s911 + $0x7d0] sm:$0xff]
      %v1163 = vld [vmem:[%s911 + $0x7d8] sm:$0xff]
      %v1164 = vld [vmem:[%s911 + $0x7e0] sm:$0xff]
      %v1165 = vld [vmem:[%s911 + $0x7e8] sm:$0xff]
      %v1166 = vld [vmem:[%s911 + $0x7f0] sm:$0xff]
      %v1167 = vld [vmem:[%s911 + $0x7f8] sm:$0xff]
      %v1170 = vrot.slane %v645, 4
      %v1171 = vrot.slane %v647, 4
      %1174 = vmatprep.subr.mxu0 %v913
      %1175 = vmatpush1.msra.mxu0 %v912
      %1176 = vmatprep.subr.mxu0 %v921
      %1177 = vmatpush1.msra.mxu0 %v920
      %1178 = vmatprep.subr.mxu0 %v929
      %1179 = vmatpush1.msra.mxu0 %v928
      %1180 = vmatprep.subr.mxu0 %v937
      %1181 = vmatpush1.msra.mxu0 %v936
      %1182 = vmatprep.subr.mxu0 %v945
      %1183 = vmatpush1.msra.mxu0 %v944
      %1184 = vmatprep.subr.mxu0 %v953
      %1185 = vmatpush1.msra.mxu0 %v952
      %1186 = vmatprep.subr.mxu0 %v961
      %1187 = vmatpush1.msra.mxu0 %v960
      %1188 = vmatprep.subr.mxu0 %v969
      %1189 = vmatpush1.msra.mxu0 %v968
      %1190 = vmatprep.subr.mxu0 %v977
      %1191 = vmatpush1.msra.mxu0 %v976
      %1192 = vmatprep.subr.mxu0 %v985
      %1193 = vmatpush1.msra.mxu0 %v984
      %1194 = vmatprep.subr.mxu0 %v993
      %1195 = vmatpush1.msra.mxu0 %v992
      %1196 = vmatprep.subr.mxu0 %v1001
      %1197 = vmatpush1.msra.mxu0 %v1000
      %1198 = vmatprep.subr.mxu0 %v1009
      %1199 = vmatpush1.msra.mxu0 %v1008
      %1200 = vmatprep.subr.mxu0 %v1017
      %1201 = vmatpush1.msra.mxu0 %v1016
      %1202 = vmatprep.subr.mxu0 %v1025
      %1203 = vmatpush1.msra.mxu0 %v1024
      %1204 = vmatprep.subr.mxu0 %v1033
      %1205 = vmatpush1.msra.mxu0 %v1032
      %1206 = vmatprep.subr.mxu0 %v1041
      %1207 = vmatpush1.msra.mxu0 %v1040
      %1208 = vmatprep.subr.mxu0 %v1049
      %1209 = vmatpush1.msra.mxu0 %v1048
      %1210 = vmatprep.subr.mxu0 %v1057
      %1211 = vmatpush1.msra.mxu0 %v1056
      %1212 = vmatprep.subr.mxu0 %v1065
      %1213 = vmatpush1.msra.mxu0 %v1064
      %1214 = vmatprep.subr.mxu0 %v1073
      %1215 = vmatpush1.msra.mxu0 %v1072
      %1216 = vmatprep.subr.mxu0 %v1081
      %1217 = vmatpush1.msra.mxu0 %v1080
      %1218 = vmatprep.subr.mxu0 %v1089
      %1219 = vmatpush1.msra.mxu0 %v1088
      %1220 = vmatprep.subr.mxu0 %v1097
      %1221 = vmatpush1.msra.mxu0 %v1096
      %1222 = vmatprep.subr.mxu0 %v1105
      %1223 = vmatpush1.msra.mxu0 %v1104
      %1224 = vmatprep.subr.mxu0 %v1113
      %1225 = vmatpush1.msra.mxu0 %v1112
      %1226 = vmatprep.subr.mxu0 %v1121
      %1227 = vmatpush1.msra.mxu0 %v1120
      %1228 = vmatprep.subr.mxu0 %v1129
      %1229 = vmatpush1.msra.mxu0 %v1128
      %1230 = vmatprep.subr.mxu0 %v1137
      %1231 = vmatpush1.msra.mxu0 %v1136
      %1232 = vmatprep.subr.mxu0 %v1145
      %1233 = vmatpush1.msra.mxu0 %v1144
      %1234 = vmatprep.subr.mxu0 %v1153
      %1235 = vmatpush1.msra.mxu0 %v1152
      %1236 = vmatprep.subr.mxu0 %v1161
      %1237 = vmatpush1.msra.mxu0 %v1160
      %1238 = vmatprep.mubr.f32.mxu0 %v1171
      %1239 = vmatmul.mubr.f32.gmra.mrb[0].mxu0 %v1170
      %v1240 = vpop.f32.mrb[0].mxu0
      %v1241 = vadd.f32 0.0, %v1240
      %v1242 = vpop.f32.mrb[0].mxu0
      %v1243 = vadd.f32 0.0, %v1242
      %1244 = vdwg.mxu0
      %1245 = vmatprep.subr.mxu0 %v915
      %1246 = vmatpush1.msra.mxu0 %v914
      %1247 = vmatprep.subr.mxu0 %v923
      %1248 = vmatpush1.msra.mxu0 %v922
      %1249 = vmatprep.subr.mxu0 %v931
      %1250 = vmatpush1.msra.mxu0 %v930
      %1251 = vmatprep.subr.mxu0 %v939
      %1252 = vmatpush1.msra.mxu0 %v938
      %1253 = vmatprep.subr.mxu0 %v947
      %1254 = vmatpush1.msra.mxu0 %v946
      %1255 = vmatprep.subr.mxu0 %v955
      %1256 = vmatpush1.msra.mxu0 %v954
      %1257 = vmatprep.subr.mxu0 %v963
      %1258 = vmatpush1.msra.mxu0 %v962
      %1259 = vmatprep.subr.mxu0 %v971
      %1260 = vmatpush1.msra.mxu0 %v970
      %1261 = vmatprep.subr.mxu0 %v979
      %1262 = vmatpush1.msra.mxu0 %v978
      %1263 = vmatprep.subr.mxu0 %v987
      %1264 = vmatpush1.msra.mxu0 %v986
      %1265 = vmatprep.subr.mxu0 %v995
      %1266 = vmatpush1.msra.mxu0 %v994
      %1267 = vmatprep.subr.mxu0 %v1003
      %1268 = vmatpush1.msra.mxu0 %v1002
      %1269 = vmatprep.subr.mxu0 %v1011
      %1270 = vmatpush1.msra.mxu0 %v1010
      %1271 = vmatprep.subr.mxu0 %v1019
      %1272 = vmatpush1.msra.mxu0 %v1018
      %1273 = vmatprep.subr.mxu0 %v1027
      %1274 = vmatpush1.msra.mxu0 %v1026
      %1275 = vmatprep.subr.mxu0 %v1035
      %1276 = vmatpush1.msra.mxu0 %v1034
      %1277 = vmatprep.subr.mxu0 %v1043
      %1278 = vmatpush1.msra.mxu0 %v1042
      %1279 = vmatprep.subr.mxu0 %v1051
      %1280 = vmatpush1.msra.mxu0 %v1050
      %1281 = vmatprep.subr.mxu0 %v1059
      %1282 = vmatpush1.msra.mxu0 %v1058
      %1283 = vmatprep.subr.mxu0 %v1067
      %1284 = vmatpush1.msra.mxu0 %v1066
      %1285 = vmatprep.subr.mxu0 %v1075
      %1286 = vmatpush1.msra.mxu0 %v1074
      %1287 = vmatprep.subr.mxu0 %v1083
      %1288 = vmatpush1.msra.mxu0 %v1082
      %1289 = vmatprep.subr.mxu0 %v1091
      %1290 = vmatpush1.msra.mxu0 %v1090
      %1291 = vmatprep.subr.mxu0 %v1099
      %1292 = vmatpush1.msra.mxu0 %v1098
      %1293 = vmatprep.subr.mxu0 %v1107
      %1294 = vmatpush1.msra.mxu0 %v1106
      %1295 = vmatprep.subr.mxu0 %v1115
      %1296 = vmatpush1.msra.mxu0 %v1114
      %1297 = vmatprep.subr.mxu0 %v1123
      %1298 = vmatpush1.msra.mxu0 %v1122
      %1299 = vmatprep.subr.mxu0 %v1131
      %1300 = vmatpush1.msra.mxu0 %v1130
      %1301 = vmatprep.subr.mxu0 %v1139
      %1302 = vmatpush1.msra.mxu0 %v1138
      %1303 = vmatprep.subr.mxu0 %v1147
      %1304 = vmatpush1.msra.mxu0 %v1146
      %1305 = vmatprep.subr.mxu0 %v1155
      %1306 = vmatpush1.msra.mxu0 %v1154
      %1307 = vmatprep.subr.mxu0 %v1163
      %1308 = vmatpush1.msra.mxu0 %v1162
      %1309 = vmatprep.mubr.f32.mxu0 %v1171
      %1310 = vmatmul.mubr.f32.gmra.mrb[0].mxu0 %v1170
      %v1311 = vpop.f32.mrb[0].mxu0
      %v1312 = vadd.f32 0.0, %v1311
      %v1313 = vpop.f32.mrb[0].mxu0
      %v1314 = vadd.f32 0.0, %v1313
      %1315 = vdwg.mxu0
      %1316 = vmatprep.subr.mxu0 %v917
      %1317 = vmatpush1.msra.mxu0 %v916
      %1318 = vmatprep.subr.mxu0 %v925
      %1319 = vmatpush1.msra.mxu0 %v924
      %1320 = vmatprep.subr.mxu0 %v933
      %1321 = vmatpush1.msra.mxu0 %v932
      %1322 = vmatprep.subr.mxu0 %v941
      %1323 = vmatpush1.msra.mxu0 %v940
      %1324 = vmatprep.subr.mxu0 %v949
      %1325 = vmatpush1.msra.mxu0 %v948
      %1326 = vmatprep.subr.mxu0 %v957
      %1327 = vmatpush1.msra.mxu0 %v956
      %1328 = vmatprep.subr.mxu0 %v965
      %1329 = vmatpush1.msra.mxu0 %v964
      %1330 = vmatprep.subr.mxu0 %v973
      %1331 = vmatpush1.msra.mxu0 %v972
      %1332 = vmatprep.subr.mxu0 %v981
      %1333 = vmatpush1.msra.mxu0 %v980
      %1334 = vmatprep.subr.mxu0 %v989
      %1335 = vmatpush1.msra.mxu0 %v988
      %1336 = vmatprep.subr.mxu0 %v997
      %1337 = vmatpush1.msra.mxu0 %v996
      %1338 = vmatprep.subr.mxu0 %v1005
      %1339 = vmatpush1.msra.mxu0 %v1004
      %1340 = vmatprep.subr.mxu0 %v1013
      %1341 = vmatpush1.msra.mxu0 %v1012
      %1342 = vmatprep.subr.mxu0 %v1021
      %1343 = vmatpush1.msra.mxu0 %v1020
      %1344 = vmatprep.subr.mxu0 %v1029
      %1345 = vmatpush1.msra.mxu0 %v1028
      %1346 = vmatprep.subr.mxu0 %v1037
      %1347 = vmatpush1.msra.mxu0 %v1036
      %1348 = vmatprep.subr.mxu0 %v1045
      %1349 = vmatpush1.msra.mxu0 %v1044
      %1350 = vmatprep.subr.mxu0 %v1053
      %1351 = vmatpush1.msra.mxu0 %v1052
      %1352 = vmatprep.subr.mxu0 %v1061
      %1353 = vmatpush1.msra.mxu0 %v1060
      %1354 = vmatprep.subr.mxu0 %v1069
      %1355 = vmatpush1.msra.mxu0 %v1068
      %1356 = vmatprep.subr.mxu0 %v1077
      %1357 = vmatpush1.msra.mxu0 %v1076
      %1358 = vmatprep.subr.mxu0 %v1085
      %1359 = vmatpush1.msra.mxu0 %v1084
      %1360 = vmatprep.subr.mxu0 %v1093
      %1361 = vmatpush1.msra.mxu0 %v1092
      %1362 = vmatprep.subr.mxu0 %v1101
      %1363 = vmatpush1.msra.mxu0 %v1100
      %1364 = vmatprep.subr.mxu0 %v1109
      %1365 = vmatpush1.msra.mxu0 %v1108
      %1366 = vmatprep.subr.mxu0 %v1117
      %1367 = vmatpush1.msra.mxu0 %v1116
      %1368 = vmatprep.subr.mxu0 %v1125
      %1369 = vmatpush1.msra.mxu0 %v1124
      %1370 = vmatprep.subr.mxu0 %v1133
      %1371 = vmatpush1.msra.mxu0 %v1132
      %1372 = vmatprep.subr.mxu0 %v1141
      %1373 = vmatpush1.msra.mxu0 %v1140
      %1374 = vmatprep.subr.mxu0 %v1149
      %1375 = vmatpush1.msra.mxu0 %v1148
      %1376 = vmatprep.subr.mxu0 %v1157
      %1377 = vmatpush1.msra.mxu0 %v1156
      %1378 = vmatprep.subr.mxu0 %v1165
      %1379 = vmatpush1.msra.mxu0 %v1164
      %1380 = vmatprep.mubr.f32.mxu0 %v1171
      %1381 = vmatmul.mubr.f32.gmra.mrb[0].mxu0 %v1170
      %v1382 = vpop.f32.mrb[0].mxu0
      %v1383 = vadd.f32 0.0, %v1382
      %v1384 = vpop.f32.mrb[0].mxu0
      %v1385 = vadd.f32 0.0, %v1384
      %1386 = vdwg.mxu0
      %1387 = vmatprep.subr.mxu0 %v919
      %1388 = vmatpush1.msra.mxu0 %v918
      %1389 = vmatprep.subr.mxu0 %v927
      %1390 = vmatpush1.msra.mxu0 %v926
      %1391 = vmatprep.subr.mxu0 %v935
      %1392 = vmatpush1.msra.mxu0 %v934
      %1393 = vmatprep.subr.mxu0 %v943
      %1394 = vmatpush1.msra.mxu0 %v942
      %1395 = vmatprep.subr.mxu0 %v951
      %1396 = vmatpush1.msra.mxu0 %v950
      %1397 = vmatprep.subr.mxu0 %v959
      %1398 = vmatpush1.msra.mxu0 %v958
      %1399 = vmatprep.subr.mxu0 %v967
      %1400 = vmatpush1.msra.mxu0 %v966
      %1401 = vmatprep.subr.mxu0 %v975
      %1402 = vmatpush1.msra.mxu0 %v974
      %1403 = vmatprep.subr.mxu0 %v983
      %1404 = vmatpush1.msra.mxu0 %v982
      %1405 = vmatprep.subr.mxu0 %v991
      %1406 = vmatpush1.msra.mxu0 %v990
      %1407 = vmatprep.subr.mxu0 %v999
      %1408 = vmatpush1.msra.mxu0 %v998
      %1409 = vmatprep.subr.mxu0 %v1007
      %1410 = vmatpush1.msra.mxu0 %v1006
      %1411 = vmatprep.subr.mxu0 %v1015
      %1412 = vmatpush1.msra.mxu0 %v1014
      %1413 = vmatprep.subr.mxu0 %v1023
      %1414 = vmatpush1.msra.mxu0 %v1022
      %1415 = vmatprep.subr.mxu0 %v1031
      %1416 = vmatpush1.msra.mxu0 %v1030
      %1417 = vmatprep.subr.mxu0 %v1039
      %1418 = vmatpush1.msra.mxu0 %v1038
      %1419 = vmatprep.subr.mxu0 %v1047
      %1420 = vmatpush1.msra.mxu0 %v1046
      %1421 = vmatprep.subr.mxu0 %v1055
      %1422 = vmatpush1.msra.mxu0 %v1054
      %1423 = vmatprep.subr.mxu0 %v1063
      %1424 = vmatpush1.msra.mxu0 %v1062
      %1425 = vmatprep.subr.mxu0 %v1071
      %1426 = vmatpush1.msra.mxu0 %v1070
      %1427 = vmatprep.subr.mxu0 %v1079
      %1428 = vmatpush1.msra.mxu0 %v1078
      %1429 = vmatprep.subr.mxu0 %v1087
      %1430 = vmatpush1.msra.mxu0 %v1086
      %1431 = vmatprep.subr.mxu0 %v1095
      %1432 = vmatpush1.msra.mxu0 %v1094
      %1433 = vmatprep.subr.mxu0 %v1103
      %1434 = vmatpush1.msra.mxu0 %v1102
      %1435 = vmatprep.subr.mxu0 %v1111
      %1436 = vmatpush1.msra.mxu0 %v1110
      %1437 = vmatprep.subr.mxu0 %v1119
      %1438 = vmatpush1.msra.mxu0 %v1118
      %1439 = vmatprep.subr.mxu0 %v1127
      %1440 = vmatpush1.msra.mxu0 %v1126
      %1441 = vmatprep.subr.mxu0 %v1135
      %1442 = vmatpush1.msra.mxu0 %v1134
      %1443 = vmatprep.subr.mxu0 %v1143
      %1444 = vmatpush1.msra.mxu0 %v1142
      %1445 = vmatprep.subr.mxu0 %v1151
      %1446 = vmatpush1.msra.mxu0 %v1150
      %1447 = vmatprep.subr.mxu0 %v1159
      %1448 = vmatpush1.msra.mxu0 %v1158
      %1449 = vmatprep.subr.mxu0 %v1167
      %1450 = vmatpush1.msra.mxu0 %v1166
      %1451 = vmatprep.mubr.f32.mxu0 %v1171
      %1452 = vmatmul.mubr.f32.gmra.mrb[0].mxu0 %v1170
      %v1453 = vpop.f32.mrb[0].mxu0
      %v1454 = vadd.f32 0.0, %v1453
      %v1455 = vpop.f32.mrb[0].mxu0
      %v1456 = vadd.f32 0.0, %v1455
      %1457 = vdwg.mxu0
      %1458 = vmatprep.subr.mxu0 %v656
      %1459 = vmatpush1.msra.mxu0 %v655
      %1460 = vmatprep.subr.mxu0 %v664
      %1461 = vmatpush1.msra.mxu0 %v663
      %1462 = vmatprep.subr.mxu0 %v672
      %1463 = vmatpush1.msra.mxu0 %v671
      %1464 = vmatprep.subr.mxu0 %v680
      %1465 = vmatpush1.msra.mxu0 %v679
      %1466 = vmatprep.subr.mxu0 %v688
      %1467 = vmatpush1.msra.mxu0 %v687
      %1468 = vmatprep.subr.mxu0 %v696
      %1469 = vmatpush1.msra.mxu0 %v695
      %1470 = vmatprep.subr.mxu0 %v704
      %1471 = vmatpush1.msra.mxu0 %v703
      %1472 = vmatprep.subr.mxu0 %v712
      %1473 = vmatpush1.msra.mxu0 %v711
      %1474 = vmatprep.subr.mxu0 %v720
      %1475 = vmatpush1.msra.mxu0 %v719
      %1476 = vmatprep.subr.mxu0 %v728
      %1477 = vmatpush1.msra.mxu0 %v727
      %1478 = vmatprep.subr.mxu0 %v736
      %1479 = vmatpush1.msra.mxu0 %v735
      %1480 = vmatprep.subr.mxu0 %v744
      %1481 = vmatpush1.msra.mxu0 %v743
      %1482 = vmatprep.subr.mxu0 %v752
      %1483 = vmatpush1.msra.mxu0 %v751
      %1484 = vmatprep.subr.mxu0 %v760
      %1485 = vmatpush1.msra.mxu0 %v759
      %1486 = vmatprep.subr.mxu0 %v768
      %1487 = vmatpush1.msra.mxu0 %v767
      %1488 = vmatprep.subr.mxu0 %v776
      %1489 = vmatpush1.msra.mxu0 %v775
      %1490 = vmatprep.subr.mxu0 %v784
      %1491 = vmatpush1.msra.mxu0 %v783
      %1492 = vmatprep.subr.mxu0 %v792
      %1493 = vmatpush1.msra.mxu0 %v791
      %1494 = vmatprep.subr.mxu0 %v800
      %1495 = vmatpush1.msra.mxu0 %v799
      %1496 = vmatprep.subr.mxu0 %v808
      %1497 = vmatpush1.msra.mxu0 %v807
      %1498 = vmatprep.subr.mxu0 %v816
      %1499 = vmatpush1.msra.mxu0 %v815
      %1500 = vmatprep.subr.mxu0 %v824
      %1501 = vmatpush1.msra.mxu0 %v823
      %1502 = vmatprep.subr.mxu0 %v832
      %1503 = vmatpush1.msra.mxu0 %v831
      %1504 = vmatprep.subr.mxu0 %v840
      %1505 = vmatpush1.msra.mxu0 %v839
      %1506 = vmatprep.subr.mxu0 %v848
      %1507 = vmatpush1.msra.mxu0 %v847
      %1508 = vmatprep.subr.mxu0 %v856
      %1509 = vmatpush1.msra.mxu0 %v855
      %1510 = vmatprep.subr.mxu0 %v864
      %1511 = vmatpush1.msra.mxu0 %v863
      %1512 = vmatprep.subr.mxu0 %v872
      %1513 = vmatpush1.msra.mxu0 %v871
      %1514 = vmatprep.subr.mxu0 %v880
      %1515 = vmatpush1.msra.mxu0 %v879
      %1516 = vmatprep.subr.mxu0 %v888
      %1517 = vmatpush1.msra.mxu0 %v887
      %1518 = vmatprep.subr.mxu0 %v896
      %1519 = vmatpush1.msra.mxu0 %v895
      %1520 = vmatprep.subr.mxu0 %v904
      %1521 = vmatpush1.msra.mxu0 %v903
      %1522 = vmatprep.mubr.f32.mxu0 %v647
      %1523 = vmatmul.mubr.f32.gmra.mrb[0].mxu0 %v645
      %v1524 = vpop.f32.mrb[0].mxu0
      %v1525 = vadd.f32 %v1241, %v1524
      %v1526 = vpop.f32.mrb[0].mxu0
      %v1527 = vadd.f32 %v1243, %v1526
      %1528 = vdwg.mxu0
      %1529 = vmatprep.subr.mxu0 %v658
      %1530 = vmatpush1.msra.mxu0 %v657
      %1531 = vmatprep.subr.mxu0 %v666
      %1532 = vmatpush1.msra.mxu0 %v665
      %1533 = vmatprep.subr.mxu0 %v674
      %1534 = vmatpush1.msra.mxu0 %v673
      %1535 = vmatprep.subr.mxu0 %v682
      %1536 = vmatpush1.msra.mxu0 %v681
      %1537 = vmatprep.subr.mxu0 %v690
      %1538 = vmatpush1.msra.mxu0 %v689
      %1539 = vmatprep.subr.mxu0 %v698
      %1540 = vmatpush1.msra.mxu0 %v697
      %1541 = vmatprep.subr.mxu0 %v706
      %1542 = vmatpush1.msra.mxu0 %v705
      %1543 = vmatprep.subr.mxu0 %v714
      %1544 = vmatpush1.msra.mxu0 %v713
      %1545 = vmatprep.subr.mxu0 %v722
      %1546 = vmatpush1.msra.mxu0 %v721
      %1547 = vmatprep.subr.mxu0 %v730
      %1548 = vmatpush1.msra.mxu0 %v729
      %1549 = vmatprep.subr.mxu0 %v738
      %1550 = vmatpush1.msra.mxu0 %v737
      %1551 = vmatprep.subr.mxu0 %v746
      %1552 = vmatpush1.msra.mxu0 %v745
      %1553 = vmatprep.subr.mxu0 %v754
      %1554 = vmatpush1.msra.mxu0 %v753
      %1555 = vmatprep.subr.mxu0 %v762
      %1556 = vmatpush1.msra.mxu0 %v761
      %1557 = vmatprep.subr.mxu0 %v770
      %1558 = vmatpush1.msra.mxu0 %v769
      %1559 = vmatprep.subr.mxu0 %v778
      %1560 = vmatpush1.msra.mxu0 %v777
      %1561 = vmatprep.subr.mxu0 %v786
      %1562 = vmatpush1.msra.mxu0 %v785
      %1563 = vmatprep.subr.mxu0 %v794
      %1564 = vmatpush1.msra.mxu0 %v793
      %1565 = vmatprep.subr.mxu0 %v802
      %1566 = vmatpush1.msra.mxu0 %v801
      %1567 = vmatprep.subr.mxu0 %v810
      %1568 = vmatpush1.msra.mxu0 %v809
      %1569 = vmatprep.subr.mxu0 %v818
      %1570 = vmatpush1.msra.mxu0 %v817
      %1571 = vmatprep.subr.mxu0 %v826
      %1572 = vmatpush1.msra.mxu0 %v825
      %1573 = vmatprep.subr.mxu0 %v834
      %1574 = vmatpush1.msra.mxu0 %v833
      %1575 = vmatprep.subr.mxu0 %v842
      %1576 = vmatpush1.msra.mxu0 %v841
      %1577 = vmatprep.subr.mxu0 %v850
      %1578 = vmatpush1.msra.mxu0 %v849
      %1579 = vmatprep.subr.mxu0 %v858
      %1580 = vmatpush1.msra.mxu0 %v857
      %1581 = vmatprep.subr.mxu0 %v866
      %1582 = vmatpush1.msra.mxu0 %v865
      %1583 = vmatprep.subr.mxu0 %v874
      %1584 = vmatpush1.msra.mxu0 %v873
      %1585 = vmatprep.subr.mxu0 %v882
      %1586 = vmatpush1.msra.mxu0 %v881
      %1587 = vmatprep.subr.mxu0 %v890
      %1588 = vmatpush1.msra.mxu0 %v889
      %1589 = vmatprep.subr.mxu0 %v898
      %1590 = vmatpush1.msra.mxu0 %v897
      %1591 = vmatprep.subr.mxu0 %v906
      %1592 = vmatpush1.msra.mxu0 %v905
      %1593 = vmatprep.mubr.f32.mxu0 %v647
      %1594 = vmatmul.mubr.f32.gmra.mrb[0].mxu0 %v645
      %v1595 = vpop.f32.mrb[0].mxu0
      %v1596 = vadd.f32 %v1312, %v1595
      %v1597 = vpop.f32.mrb[0].mxu0
      %v1598 = vadd.f32 %v1314, %v1597
      %1599 = vdwg.mxu0
      %1600 = vmatprep.subr.mxu0 %v660
      %1601 = vmatpush1.msra.mxu0 %v659
      %1602 = vmatprep.subr.mxu0 %v668
      %1603 = vmatpush1.msra.mxu0 %v667
      %1604 = vmatprep.subr.mxu0 %v676
      %1605 = vmatpush1.msra.mxu0 %v675
      %1606 = vmatprep.subr.mxu0 %v684
      %1607 = vmatpush1.msra.mxu0 %v683
      %1608 = vmatprep.subr.mxu0 %v692
      %1609 = vmatpush1.msra.mxu0 %v691
      %1610 = vmatprep.subr.mxu0 %v700
      %1611 = vmatpush1.msra.mxu0 %v699
      %1612 = vmatprep.subr.mxu0 %v708
      %1613 = vmatpush1.msra.mxu0 %v707
      %1614 = vmatprep.subr.mxu0 %v716
      %1615 = vmatpush1.msra.mxu0 %v715
      %1616 = vmatprep.subr.mxu0 %v724
      %1617 = vmatpush1.msra.mxu0 %v723
      %1618 = vmatprep.subr.mxu0 %v732
      %1619 = vmatpush1.msra.mxu0 %v731
      %1620 = vmatprep.subr.mxu0 %v740
      %1621 = vmatpush1.msra.mxu0 %v739
      %1622 = vmatprep.subr.mxu0 %v748
      %1623 = vmatpush1.msra.mxu0 %v747
      %1624 = vmatprep.subr.mxu0 %v756
      %1625 = vmatpush1.msra.mxu0 %v755
      %1626 = vmatprep.subr.mxu0 %v764
      %1627 = vmatpush1.msra.mxu0 %v763
      %1628 = vmatprep.subr.mxu0 %v772
      %1629 = vmatpush1.msra.mxu0 %v771
      %1630 = vmatprep.subr.mxu0 %v780
      %1631 = vmatpush1.msra.mxu0 %v779
      %1632 = vmatprep.subr.mxu0 %v788
      %1633 = vmatpush1.msra.mxu0 %v787
      %1634 = vmatprep.subr.mxu0 %v796
      %1635 = vmatpush1.msra.mxu0 %v795
      %1636 = vmatprep.subr.mxu0 %v804
      %1637 = vmatpush1.msra.mxu0 %v803
      %1638 = vmatprep.subr.mxu0 %v812
      %1639 = vmatpush1.msra.mxu0 %v811
      %1640 = vmatprep.subr.mxu0 %v820
      %1641 = vmatpush1.msra.mxu0 %v819
      %1642 = vmatprep.subr.mxu0 %v828
      %1643 = vmatpush1.msra.mxu0 %v827
      %1644 = vmatprep.subr.mxu0 %v836
      %1645 = vmatpush1.msra.mxu0 %v835
      %1646 = vmatprep.subr.mxu0 %v844
      %1647 = vmatpush1.msra.mxu0 %v843
      %1648 = vmatprep.subr.mxu0 %v852
      %1649 = vmatpush1.msra.mxu0 %v851
      %1650 = vmatprep.subr.mxu0 %v860
      %1651 = vmatpush1.msra.mxu0 %v859
      %1652 = vmatprep.subr.mxu0 %v868
      %1653 = vmatpush1.msra.mxu0 %v867
      %1654 = vmatprep.subr.mxu0 %v876
      %1655 = vmatpush1.msra.mxu0 %v875
      %1656 = vmatprep.subr.mxu0 %v884
      %1657 = vmatpush1.msra.mxu0 %v883
      %1658 = vmatprep.subr.mxu0 %v892
      %1659 = vmatpush1.msra.mxu0 %v891
      %1660 = vmatprep.subr.mxu0 %v900
      %1661 = vmatpush1.msra.mxu0 %v899
      %1662 = vmatprep.subr.mxu0 %v908
      %1663 = vmatpush1.msra.mxu0 %v907
      %1664 = vmatprep.mubr.f32.mxu0 %v647
      %1665 = vmatmul.mubr.f32.gmra.mrb[0].mxu0 %v645
      %v1666 = vpop.f32.mrb[0].mxu0
      %v1667 = vadd.f32 %v1383, %v1666
      %v1668 = vpop.f32.mrb[0].mxu0
      %v1669 = vadd.f32 %v1385, %v1668
      %1670 = vdwg.mxu0
      %1671 = vmatprep.subr.mxu0 %v662
      %1672 = vmatpush1.msra.mxu0 %v661
      %1673 = vmatprep.subr.mxu0 %v670
      %1674 = vmatpush1.msra.mxu0 %v669
      %1675 = vmatprep.subr.mxu0 %v678
      %1676 = vmatpush1.msra.mxu0 %v677
      %1677 = vmatprep.subr.mxu0 %v686
      %1678 = vmatpush1.msra.mxu0 %v685
      %1679 = vmatprep.subr.mxu0 %v694
      %1680 = vmatpush1.msra.mxu0 %v693
      %1681 = vmatprep.subr.mxu0 %v702
      %1682 = vmatpush1.msra.mxu0 %v701
      %1683 = vmatprep.subr.mxu0 %v710
      %1684 = vmatpush1.msra.mxu0 %v709
      %1685 = vmatprep.subr.mxu0 %v718
      %1686 = vmatpush1.msra.mxu0 %v717
      %1687 = vmatprep.subr.mxu0 %v726
      %1688 = vmatpush1.msra.mxu0 %v725
      %1689 = vmatprep.subr.mxu0 %v734
      %1690 = vmatpush1.msra.mxu0 %v733
      %1691 = vmatprep.subr.mxu0 %v742
      %1692 = vmatpush1.msra.mxu0 %v741
      %1693 = vmatprep.subr.mxu0 %v750
      %1694 = vmatpush1.msra.mxu0 %v749
      %1695 = vmatprep.subr.mxu0 %v758
      %1696 = vmatpush1.msra.mxu0 %v757
      %1697 = vmatprep.subr.mxu0 %v766
      %1698 = vmatpush1.msra.mxu0 %v765
      %1699 = vmatprep.subr.mxu0 %v774
      %1700 = vmatpush1.msra.mxu0 %v773
      %1701 = vmatprep.subr.mxu0 %v782
      %1702 = vmatpush1.msra.mxu0 %v781
      %1703 = vmatprep.subr.mxu0 %v790
      %1704 = vmatpush1.msra.mxu0 %v789
      %1705 = vmatprep.subr.mxu0 %v798
      %1706 = vmatpush1.msra.mxu0 %v797
      %1707 = vmatprep.subr.mxu0 %v806
      %1708 = vmatpush1.msra.mxu0 %v805
      %1709 = vmatprep.subr.mxu0 %v814
      %1710 = vmatpush1.msra.mxu0 %v813
      %1711 = vmatprep.subr.mxu0 %v822
      %1712 = vmatpush1.msra.mxu0 %v821
      %1713 = vmatprep.subr.mxu0 %v830
      %1714 = vmatpush1.msra.mxu0 %v829
      %1715 = vmatprep.subr.mxu0 %v838
      %1716 = vmatpush1.msra.mxu0 %v837
      %1717 = vmatprep.subr.mxu0 %v846
      %1718 = vmatpush1.msra.mxu0 %v845
      %1719 = vmatprep.subr.mxu0 %v854
      %1720 = vmatpush1.msra.mxu0 %v853
      %1721 = vmatprep.subr.mxu0 %v862
      %1722 = vmatpush1.msra.mxu0 %v861
      %1723 = vmatprep.subr.mxu0 %v870
      %1724 = vmatpush1.msra.mxu0 %v869
      %1725 = vmatprep.subr.mxu0 %v878
      %1726 = vmatpush1.msra.mxu0 %v877
      %1727 = vmatprep.subr.mxu0 %v886
      %1728 = vmatpush1.msra.mxu0 %v885
      %1729 = vmatprep.subr.mxu0 %v894
      %1730 = vmatpush1.msra.mxu0 %v893
      %1731 = vmatprep.subr.mxu0 %v902
      %1732 = vmatpush1.msra.mxu0 %v901
      %1733 = vmatprep.subr.mxu0 %v910
      %1734 = vmatpush1.msra.mxu0 %v909
      %1735 = vmatprep.mubr.f32.mxu0 %v647
      %1736 = vmatmul.mubr.f32.gmra.mrb[0].mxu0 %v645
      %v1737 = vpop.f32.mrb[0].mxu0
      %v1738 = vadd.f32 %v1454, %v1737
      %v1739 = vpop.f32.mrb[0].mxu0
      %v1740 = vadd.f32 %v1456, %v1739
      %1741 = vdwg.mxu0
      %s1742 = scalar_lea.vmem %s4, 4096
      %v1743 = vld [vmem:[%s1742] sm:$0xff]
      %v1744 = vld [vmem:[%s1742 + $0x8] sm:$0xff]
      %v1745 = vld [vmem:[%s1742 + $0x10] sm:$0xff]
      %v1746 = vld [vmem:[%s1742 + $0x18] sm:$0xff]
      %v1747 = vld [vmem:[%s1742 + $0x20] sm:$0xff]
      %v1748 = vld [vmem:[%s1742 + $0x28] sm:$0xff]
      %v1749 = vld [vmem:[%s1742 + $0x30] sm:$0xff]
      %v1750 = vld [vmem:[%s1742 + $0x38] sm:$0xff]
      %v1751 = vld [vmem:[%s1742 + $0x40] sm:$0xff]
      %v1752 = vld [vmem:[%s1742 + $0x48] sm:$0xff]
      %v1753 = vld [vmem:[%s1742 + $0x50] sm:$0xff]
      %v1754 = vld [vmem:[%s1742 + $0x58] sm:$0xff]
      %v1755 = vld [vmem:[%s1742 + $0x60] sm:$0xff]
      %v1756 = vld [vmem:[%s1742 + $0x68] sm:$0xff]
      %v1757 = vld [vmem:[%s1742 + $0x70] sm:$0xff]
      %v1758 = vld [vmem:[%s1742 + $0x78] sm:$0xff]
      %v1759 = vld [vmem:[%s1742 + $0x80] sm:$0xff]
      %v1760 = vld [vmem:[%s1742 + $0x88] sm:$0xff]
      %v1761 = vld [vmem:[%s1742 + $0x90] sm:$0xff]
      %v1762 = vld [vmem:[%s1742 + $0x98] sm:$0xff]
      %v1763 = vld [vmem:[%s1742 + $0xa0] sm:$0xff]
      %v1764 = vld [vmem:[%s1742 + $0xa8] sm:$0xff]
      %v1765 = vld [vmem:[%s1742 + $0xb0] sm:$0xff]
      %v1766 = vld [vmem:[%s1742 + $0xb8] sm:$0xff]
      %v1767 = vld [vmem:[%s1742 + $0xc0] sm:$0xff]
      %v1768 = vld [vmem:[%s1742 + $0xc8] sm:$0xff]
      %v1769 = vld [vmem:[%s1742 + $0xd0] sm:$0xff]
      %v1770 = vld [vmem:[%s1742 + $0xd8] sm:$0xff]
      %v1771 = vld [vmem:[%s1742 + $0xe0] sm:$0xff]
      %v1772 = vld [vmem:[%s1742 + $0xe8] sm:$0xff]
      %v1773 = vld [vmem:[%s1742 + $0xf0] sm:$0xff]
      %v1774 = vld [vmem:[%s1742 + $0xf8] sm:$0xff]
      %v1775 = vld [vmem:[%s1742 + $0x100] sm:$0xff]
      %v1776 = vld [vmem:[%s1742 + $0x108] sm:$0xff]
      %v1777 = vld [vmem:[%s1742 + $0x110] sm:$0xff]
      %v1778 = vld [vmem:[%s1742 + $0x118] sm:$0xff]
      %v1779 = vld [vmem:[%s1742 + $0x120] sm:$0xff]
      %v1780 = vld [vmem:[%s1742 + $0x128] sm:$0xff]
      %v1781 = vld [vmem:[%s1742 + $0x130] sm:$0xff]
      %v1782 = vld [vmem:[%s1742 + $0x138] sm:$0xff]
      %v1783 = vld [vmem:[%s1742 + $0x140] sm:$0xff]
      %v1784 = vld [vmem:[%s1742 + $0x148] sm:$0xff]
      %v1785 = vld [vmem:[%s1742 + $0x150] sm:$0xff]
      %v1786 = vld [vmem:[%s1742 + $0x158] sm:$0xff]
      %v1787 = vld [vmem:[%s1742 + $0x160] sm:$0xff]
      %v1788 = vld [vmem:[%s1742 + $0x168] sm:$0xff]
      %v1789 = vld [vmem:[%s1742 + $0x170] sm:$0xff]
      %v1790 = vld [vmem:[%s1742 + $0x178] sm:$0xff]
      %v1791 = vld [vmem:[%s1742 + $0x180] sm:$0xff]
      %v1792 = vld [vmem:[%s1742 + $0x188] sm:$0xff]
      %v1793 = vld [vmem:[%s1742 + $0x190] sm:$0xff]
      %v1794 = vld [vmem:[%s1742 + $0x198] sm:$0xff]
      %v1795 = vld [vmem:[%s1742 + $0x1a0] sm:$0xff]
      %v1796 = vld [vmem:[%s1742 + $0x1a8] sm:$0xff]
      %v1797 = vld [vmem:[%s1742 + $0x1b0] sm:$0xff]
      %v1798 = vld [vmem:[%s1742 + $0x1b8] sm:$0xff]
      %v1799 = vld [vmem:[%s1742 + $0x1c0] sm:$0xff]
      %v1800 = vld [vmem:[%s1742 + $0x1c8] sm:$0xff]
      %v1801 = vld [vmem:[%s1742 + $0x1d0] sm:$0xff]
      %v1802 = vld [vmem:[%s1742 + $0x1d8] sm:$0xff]
      %v1803 = vld [vmem:[%s1742 + $0x1e0] sm:$0xff]
      %v1804 = vld [vmem:[%s1742 + $0x1e8] sm:$0xff]
      %v1805 = vld [vmem:[%s1742 + $0x1f0] sm:$0xff]
      %v1806 = vld [vmem:[%s1742 + $0x1f8] sm:$0xff]
      %v1807 = vld [vmem:[%s1742 + $0x200] sm:$0xff]
      %v1808 = vld [vmem:[%s1742 + $0x208] sm:$0xff]
      %v1809 = vld [vmem:[%s1742 + $0x210] sm:$0xff]
      %v1810 = vld [vmem:[%s1742 + $0x218] sm:$0xff]
      %v1811 = vld [vmem:[%s1742 + $0x220] sm:$0xff]
      %v1812 = vld [vmem:[%s1742 + $0x228] sm:$0xff]
      %v1813 = vld [vmem:[%s1742 + $0x230] sm:$0xff]
      %v1814 = vld [vmem:[%s1742 + $0x238] sm:$0xff]
      %v1815 = vld [vmem:[%s1742 + $0x240] sm:$0xff]
      %v1816 = vld [vmem:[%s1742 + $0x248] sm:$0xff]
      %v1817 = vld [vmem:[%s1742 + $0x250] sm:$0xff]
      %v1818 = vld [vmem:[%s1742 + $0x258] sm:$0xff]
      %v1819 = vld [vmem:[%s1742 + $0x260] sm:$0xff]
      %v1820 = vld [vmem:[%s1742 + $0x268] sm:$0xff]
      %v1821 = vld [vmem:[%s1742 + $0x270] sm:$0xff]
      %v1822 = vld [vmem:[%s1742 + $0x278] sm:$0xff]
      %v1823 = vld [vmem:[%s1742 + $0x280] sm:$0xff]
      %v1824 = vld [vmem:[%s1742 + $0x288] sm:$0xff]
      %v1825 = vld [vmem:[%s1742 + $0x290] sm:$0xff]
      %v1826 = vld [vmem:[%s1742 + $0x298] sm:$0xff]
      %v1827 = vld [vmem:[%s1742 + $0x2a0] sm:$0xff]
      %v1828 = vld [vmem:[%s1742 + $0x2a8] sm:$0xff]
      %v1829 = vld [vmem:[%s1742 + $0x2b0] sm:$0xff]
      %v1830 = vld [vmem:[%s1742 + $0x2b8] sm:$0xff]
      %v1831 = vld [vmem:[%s1742 + $0x2c0] sm:$0xff]
      %v1832 = vld [vmem:[%s1742 + $0x2c8] sm:$0xff]
      %v1833 = vld [vmem:[%s1742 + $0x2d0] sm:$0xff]
      %v1834 = vld [vmem:[%s1742 + $0x2d8] sm:$0xff]
      %v1835 = vld [vmem:[%s1742 + $0x2e0] sm:$0xff]
      %v1836 = vld [vmem:[%s1742 + $0x2e8] sm:$0xff]
      %v1837 = vld [vmem:[%s1742 + $0x2f0] sm:$0xff]
      %v1838 = vld [vmem:[%s1742 + $0x2f8] sm:$0xff]
      %v1839 = vld [vmem:[%s1742 + $0x300] sm:$0xff]
      %v1840 = vld [vmem:[%s1742 + $0x308] sm:$0xff]
      %v1841 = vld [vmem:[%s1742 + $0x310] sm:$0xff]
      %v1842 = vld [vmem:[%s1742 + $0x318] sm:$0xff]
      %v1843 = vld [vmem:[%s1742 + $0x320] sm:$0xff]
      %v1844 = vld [vmem:[%s1742 + $0x328] sm:$0xff]
      %v1845 = vld [vmem:[%s1742 + $0x330] sm:$0xff]
      %v1846 = vld [vmem:[%s1742 + $0x338] sm:$0xff]
      %v1847 = vld [vmem:[%s1742 + $0x340] sm:$0xff]
      %v1848 = vld [vmem:[%s1742 + $0x348] sm:$0xff]
      %v1849 = vld [vmem:[%s1742 + $0x350] sm:$0xff]
      %v1850 = vld [vmem:[%s1742 + $0x358] sm:$0xff]
      %v1851 = vld [vmem:[%s1742 + $0x360] sm:$0xff]
      %v1852 = vld [vmem:[%s1742 + $0x368] sm:$0xff]
      %v1853 = vld [vmem:[%s1742 + $0x370] sm:$0xff]
      %v1854 = vld [vmem:[%s1742 + $0x378] sm:$0xff]
      %v1855 = vld [vmem:[%s1742 + $0x380] sm:$0xff]
      %v1856 = vld [vmem:[%s1742 + $0x388] sm:$0xff]
      %v1857 = vld [vmem:[%s1742 + $0x390] sm:$0xff]
      %v1858 = vld [vmem:[%s1742 + $0x398] sm:$0xff]
      %v1859 = vld [vmem:[%s1742 + $0x3a0] sm:$0xff]
      %v1860 = vld [vmem:[%s1742 + $0x3a8] sm:$0xff]
      %v1861 = vld [vmem:[%s1742 + $0x3b0] sm:$0xff]
      %v1862 = vld [vmem:[%s1742 + $0x3b8] sm:$0xff]
      %v1863 = vld [vmem:[%s1742 + $0x3c0] sm:$0xff]
      %v1864 = vld [vmem:[%s1742 + $0x3c8] sm:$0xff]
      %v1865 = vld [vmem:[%s1742 + $0x3d0] sm:$0xff]
      %v1866 = vld [vmem:[%s1742 + $0x3d8] sm:$0xff]
      %v1867 = vld [vmem:[%s1742 + $0x3e0] sm:$0xff]
      %v1868 = vld [vmem:[%s1742 + $0x3e8] sm:$0xff]
      %v1869 = vld [vmem:[%s1742 + $0x3f0] sm:$0xff]
      %v1870 = vld [vmem:[%s1742 + $0x3f8] sm:$0xff]
      %v1871 = vld [vmem:[%s1742 + $0x400] sm:$0xff]
      %v1872 = vld [vmem:[%s1742 + $0x408] sm:$0xff]
      %v1873 = vld [vmem:[%s1742 + $0x410] sm:$0xff]
      %v1874 = vld [vmem:[%s1742 + $0x418] sm:$0xff]
      %v1875 = vld [vmem:[%s1742 + $0x420] sm:$0xff]
      %v1876 = vld [vmem:[%s1742 + $0x428] sm:$0xff]
      %v1877 = vld [vmem:[%s1742 + $0x430] sm:$0xff]
      %v1878 = vld [vmem:[%s1742 + $0x438] sm:$0xff]
      %v1879 = vld [vmem:[%s1742 + $0x440] sm:$0xff]
      %v1880 = vld [vmem:[%s1742 + $0x448] sm:$0xff]
      %v1881 = vld [vmem:[%s1742 + $0x450] sm:$0xff]
      %v1882 = vld [vmem:[%s1742 + $0x458] sm:$0xff]
      %v1883 = vld [vmem:[%s1742 + $0x460] sm:$0xff]
      %v1884 = vld [vmem:[%s1742 + $0x468] sm:$0xff]
      %v1885 = vld [vmem:[%s1742 + $0x470] sm:$0xff]
      %v1886 = vld [vmem:[%s1742 + $0x478] sm:$0xff]
      %v1887 = vld [vmem:[%s1742 + $0x480] sm:$0xff]
      %v1888 = vld [vmem:[%s1742 + $0x488] sm:$0xff]
      %v1889 = vld [vmem:[%s1742 + $0x490] sm:$0xff]
      %v1890 = vld [vmem:[%s1742 + $0x498] sm:$0xff]
      %v1891 = vld [vmem:[%s1742 + $0x4a0] sm:$0xff]
      %v1892 = vld [vmem:[%s1742 + $0x4a8] sm:$0xff]
      %v1893 = vld [vmem:[%s1742 + $0x4b0] sm:$0xff]
      %v1894 = vld [vmem:[%s1742 + $0x4b8] sm:$0xff]
      %v1895 = vld [vmem:[%s1742 + $0x4c0] sm:$0xff]
      %v1896 = vld [vmem:[%s1742 + $0x4c8] sm:$0xff]
      %v1897 = vld [vmem:[%s1742 + $0x4d0] sm:$0xff]
      %v1898 = vld [vmem:[%s1742 + $0x4d8] sm:$0xff]
      %v1899 = vld [vmem:[%s1742 + $0x4e0] sm:$0xff]
      %v1900 = vld [vmem:[%s1742 + $0x4e8] sm:$0xff]
      %v1901 = vld [vmem:[%s1742 + $0x4f0] sm:$0xff]
      %v1902 = vld [vmem:[%s1742 + $0x4f8] sm:$0xff]
      %v1903 = vld [vmem:[%s1742 + $0x500] sm:$0xff]
      %v1904 = vld [vmem:[%s1742 + $0x508] sm:$0xff]
      %v1905 = vld [vmem:[%s1742 + $0x510] sm:$0xff]
      %v1906 = vld [vmem:[%s1742 + $0x518] sm:$0xff]
      %v1907 = vld [vmem:[%s1742 + $0x520] sm:$0xff]
      %v1908 = vld [vmem:[%s1742 + $0x528] sm:$0xff]
      %v1909 = vld [vmem:[%s1742 + $0x530] sm:$0xff]
      %v1910 = vld [vmem:[%s1742 + $0x538] sm:$0xff]
      %v1911 = vld [vmem:[%s1742 + $0x540] sm:$0xff]
      %v1912 = vld [vmem:[%s1742 + $0x548] sm:$0xff]
      %v1913 = vld [vmem:[%s1742 + $0x550] sm:$0xff]
      %v1914 = vld [vmem:[%s1742 + $0x558] sm:$0xff]
      %v1915 = vld [vmem:[%s1742 + $0x560] sm:$0xff]
      %v1916 = vld [vmem:[%s1742 + $0x568] sm:$0xff]
      %v1917 = vld [vmem:[%s1742 + $0x570] sm:$0xff]
      %v1918 = vld [vmem:[%s1742 + $0x578] sm:$0xff]
      %v1919 = vld [vmem:[%s1742 + $0x580] sm:$0xff]
      %v1920 = vld [vmem:[%s1742 + $0x588] sm:$0xff]
      %v1921 = vld [vmem:[%s1742 + $0x590] sm:$0xff]
      %v1922 = vld [vmem:[%s1742 + $0x598] sm:$0xff]
      %v1923 = vld [vmem:[%s1742 + $0x5a0] sm:$0xff]
      %v1924 = vld [vmem:[%s1742 + $0x5a8] sm:$0xff]
      %v1925 = vld [vmem:[%s1742 + $0x5b0] sm:$0xff]
      %v1926 = vld [vmem:[%s1742 + $0x5b8] sm:$0xff]
      %v1927 = vld [vmem:[%s1742 + $0x5c0] sm:$0xff]
      %v1928 = vld [vmem:[%s1742 + $0x5c8] sm:$0xff]
      %v1929 = vld [vmem:[%s1742 + $0x5d0] sm:$0xff]
      %v1930 = vld [vmem:[%s1742 + $0x5d8] sm:$0xff]
      %v1931 = vld [vmem:[%s1742 + $0x5e0] sm:$0xff]
      %v1932 = vld [vmem:[%s1742 + $0x5e8] sm:$0xff]
      %v1933 = vld [vmem:[%s1742 + $0x5f0] sm:$0xff]
      %v1934 = vld [vmem:[%s1742 + $0x5f8] sm:$0xff]
      %v1935 = vld [vmem:[%s1742 + $0x600] sm:$0xff]
      %v1936 = vld [vmem:[%s1742 + $0x608] sm:$0xff]
      %v1937 = vld [vmem:[%s1742 + $0x610] sm:$0xff]
      %v1938 = vld [vmem:[%s1742 + $0x618] sm:$0xff]
      %v1939 = vld [vmem:[%s1742 + $0x620] sm:$0xff]
      %v1940 = vld [vmem:[%s1742 + $0x628] sm:$0xff]
      %v1941 = vld [vmem:[%s1742 + $0x630] sm:$0xff]
      %v1942 = vld [vmem:[%s1742 + $0x638] sm:$0xff]
      %v1943 = vld [vmem:[%s1742 + $0x640] sm:$0xff]
      %v1944 = vld [vmem:[%s1742 + $0x648] sm:$0xff]
      %v1945 = vld [vmem:[%s1742 + $0x650] sm:$0xff]
      %v1946 = vld [vmem:[%s1742 + $0x658] sm:$0xff]
      %v1947 = vld [vmem:[%s1742 + $0x660] sm:$0xff]
      %v1948 = vld [vmem:[%s1742 + $0x668] sm:$0xff]
      %v1949 = vld [vmem:[%s1742 + $0x670] sm:$0xff]
      %v1950 = vld [vmem:[%s1742 + $0x678] sm:$0xff]
      %v1951 = vld [vmem:[%s1742 + $0x680] sm:$0xff]
      %v1952 = vld [vmem:[%s1742 + $0x688] sm:$0xff]
      %v1953 = vld [vmem:[%s1742 + $0x690] sm:$0xff]
      %v1954 = vld [vmem:[%s1742 + $0x698] sm:$0xff]
      %v1955 = vld [vmem:[%s1742 + $0x6a0] sm:$0xff]
      %v1956 = vld [vmem:[%s1742 + $0x6a8] sm:$0xff]
      %v1957 = vld [vmem:[%s1742 + $0x6b0] sm:$0xff]
      %v1958 = vld [vmem:[%s1742 + $0x6b8] sm:$0xff]
      %v1959 = vld [vmem:[%s1742 + $0x6c0] sm:$0xff]
      %v1960 = vld [vmem:[%s1742 + $0x6c8] sm:$0xff]
      %v1961 = vld [vmem:[%s1742 + $0x6d0] sm:$0xff]
      %v1962 = vld [vmem:[%s1742 + $0x6d8] sm:$0xff]
      %v1963 = vld [vmem:[%s1742 + $0x6e0] sm:$0xff]
      %v1964 = vld [vmem:[%s1742 + $0x6e8] sm:$0xff]
      %v1965 = vld [vmem:[%s1742 + $0x6f0] sm:$0xff]
      %v1966 = vld [vmem:[%s1742 + $0x6f8] sm:$0xff]
      %v1967 = vld [vmem:[%s1742 + $0x700] sm:$0xff]
      %v1968 = vld [vmem:[%s1742 + $0x708] sm:$0xff]
      %v1969 = vld [vmem:[%s1742 + $0x710] sm:$0xff]
      %v1970 = vld [vmem:[%s1742 + $0x718] sm:$0xff]
      %v1971 = vld [vmem:[%s1742 + $0x720] sm:$0xff]
      %v1972 = vld [vmem:[%s1742 + $0x728] sm:$0xff]
      %v1973 = vld [vmem:[%s1742 + $0x730] sm:$0xff]
      %v1974 = vld [vmem:[%s1742 + $0x738] sm:$0xff]
      %v1975 = vld [vmem:[%s1742 + $0x740] sm:$0xff]
      %v1976 = vld [vmem:[%s1742 + $0x748] sm:$0xff]
      %v1977 = vld [vmem:[%s1742 + $0x750] sm:$0xff]
      %v1978 = vld [vmem:[%s1742 + $0x758] sm:$0xff]
      %v1979 = vld [vmem:[%s1742 + $0x760] sm:$0xff]
      %v1980 = vld [vmem:[%s1742 + $0x768] sm:$0xff]
      %v1981 = vld [vmem:[%s1742 + $0x770] sm:$0xff]
      %v1982 = vld [vmem:[%s1742 + $0x778] sm:$0xff]
      %v1983 = vld [vmem:[%s1742 + $0x780] sm:$0xff]
      %v1984 = vld [vmem:[%s1742 + $0x788] sm:$0xff]
      %v1985 = vld [vmem:[%s1742 + $0x790] sm:$0xff]
      %v1986 = vld [vmem:[%s1742 + $0x798] sm:$0xff]
      %v1987 = vld [vmem:[%s1742 + $0x7a0] sm:$0xff]
      %v1988 = vld [vmem:[%s1742 + $0x7a8] sm:$0xff]
      %v1989 = vld [vmem:[%s1742 + $0x7b0] sm:$0xff]
      %v1990 = vld [vmem:[%s1742 + $0x7b8] sm:$0xff]
      %v1991 = vld [vmem:[%s1742 + $0x7c0] sm:$0xff]
      %v1992 = vld [vmem:[%s1742 + $0x7c8] sm:$0xff]
      %v1993 = vld [vmem:[%s1742 + $0x7d0] sm:$0xff]
      %v1994 = vld [vmem:[%s1742 + $0x7d8] sm:$0xff]
      %v1995 = vld [vmem:[%s1742 + $0x7e0] sm:$0xff]
      %v1996 = vld [vmem:[%s1742 + $0x7e8] sm:$0xff]
      %v1997 = vld [vmem:[%s1742 + $0x7f0] sm:$0xff]
      %v1998 = vld [vmem:[%s1742 + $0x7f8] sm:$0xff]
      %1999 = vmatprep.subr.mxu0 %v1744
      %2000 = vmatpush1.msra.mxu0 %v1743
      %2001 = vmatprep.subr.mxu0 %v1752
      %2002 = vmatpush1.msra.mxu0 %v1751
      %2003 = vmatprep.subr.mxu0 %v1760
      %2004 = vmatpush1.msra.mxu0 %v1759
      %2005 = vmatprep.subr.mxu0 %v1768
      %2006 = vmatpush1.msra.mxu0 %v1767
      %2007 = vmatprep.subr.mxu0 %v1776
      %2008 = vmatpush1.msra.mxu0 %v1775
      %2009 = vmatprep.subr.mxu0 %v1784
      %2010 = vmatpush1.msra.mxu0 %v1783
      %2011 = vmatprep.subr.mxu0 %v1792
      %2012 = vmatpush1.msra.mxu0 %v1791
      %2013 = vmatprep.subr.mxu0 %v1800
      %2014 = vmatpush1.msra.mxu0 %v1799
      %2015 = vmatprep.subr.mxu0 %v1808
      %2016 = vmatpush1.msra.mxu0 %v1807
      %2017 = vmatprep.subr.mxu0 %v1816
      %2018 = vmatpush1.msra.mxu0 %v1815
      %2019 = vmatprep.subr.mxu0 %v1824
      %2020 = vmatpush1.msra.mxu0 %v1823
      %2021 = vmatprep.subr.mxu0 %v1832
      %2022 = vmatpush1.msra.mxu0 %v1831
      %2023 = vmatprep.subr.mxu0 %v1840
      %2024 = vmatpush1.msra.mxu0 %v1839
      %2025 = vmatprep.subr.mxu0 %v1848
      %2026 = vmatpush1.msra.mxu0 %v1847
      %2027 = vmatprep.subr.mxu0 %v1856
      %2028 = vmatpush1.msra.mxu0 %v1855
      %2029 = vmatprep.subr.mxu0 %v1864
      %2030 = vmatpush1.msra.mxu0 %v1863
      %2031 = vmatprep.subr.mxu0 %v1872
      %2032 = vmatpush1.msra.mxu0 %v1871
      %2033 = vmatprep.subr.mxu0 %v1880
      %2034 = vmatpush1.msra.mxu0 %v1879
      %2035 = vmatprep.subr.mxu0 %v1888
      %2036 = vmatpush1.msra.mxu0 %v1887
      %2037 = vmatprep.subr.mxu0 %v1896
      %2038 = vmatpush1.msra.mxu0 %v1895
      %2039 = vmatprep.subr.mxu0 %v1904
      %2040 = vmatpush1.msra.mxu0 %v1903
      %2041 = vmatprep.subr.mxu0 %v1912
      %2042 = vmatpush1.msra.mxu0 %v1911
      %2043 = vmatprep.subr.mxu0 %v1920
      %2044 = vmatpush1.msra.mxu0 %v1919
      %2045 = vmatprep.subr.mxu0 %v1928
      %2046 = vmatpush1.msra.mxu0 %v1927
      %2047 = vmatprep.subr.mxu0 %v1936
      %2048 = vmatpush1.msra.mxu0 %v1935
      %2049 = vmatprep.subr.mxu0 %v1944
      %2050 = vmatpush1.msra.mxu0 %v1943
      %2051 = vmatprep.subr.mxu0 %v1952
      %2052 = vmatpush1.msra.mxu0 %v1951
      %2053 = vmatprep.subr.mxu0 %v1960
      %2054 = vmatpush1.msra.mxu0 %v1959
      %2055 = vmatprep.subr.mxu0 %v1968
      %2056 = vmatpush1.msra.mxu0 %v1967
      %2057 = vmatprep.subr.mxu0 %v1976
      %2058 = vmatpush1.msra.mxu0 %v1975
      %2059 = vmatprep.subr.mxu0 %v1984
      %2060 = vmatpush1.msra.mxu0 %v1983
      %2061 = vmatprep.subr.mxu0 %v1992
      %2062 = vmatpush1.msra.mxu0 %v1991
      %2063 = vmatprep.mubr.f32.mxu0 %v653
      %2064 = vmatmul.mubr.f32.gmra.mrb[0].mxu0 %v651
      %v2065 = vpop.f32.mrb[0].mxu0
      %v2066 = vadd.f32 0.0, %v2065
      %v2067 = vpop.f32.mrb[0].mxu0
      %v2068 = vadd.f32 0.0, %v2067
      %2069 = vdwg.mxu0
      %2070 = vmatprep.subr.mxu0 %v1746
      %2071 = vmatpush1.msra.mxu0 %v1745
      %2072 = vmatprep.subr.mxu0 %v1754
      %2073 = vmatpush1.msra.mxu0 %v1753
      %2074 = vmatprep.subr.mxu0 %v1762
      %2075 = vmatpush1.msra.mxu0 %v1761
      %2076 = vmatprep.subr.mxu0 %v1770
      %2077 = vmatpush1.msra.mxu0 %v1769
      %2078 = vmatprep.subr.mxu0 %v1778
      %2079 = vmatpush1.msra.mxu0 %v1777
      %2080 = vmatprep.subr.mxu0 %v1786
      %2081 = vmatpush1.msra.mxu0 %v1785
      %2082 = vmatprep.subr.mxu0 %v1794
      %2083 = vmatpush1.msra.mxu0 %v1793
      %2084 = vmatprep.subr.mxu0 %v1802
      %2085 = vmatpush1.msra.mxu0 %v1801
      %2086 = vmatprep.subr.mxu0 %v1810
      %2087 = vmatpush1.msra.mxu0 %v1809
      %2088 = vmatprep.subr.mxu0 %v1818
      %2089 = vmatpush1.msra.mxu0 %v1817
      %2090 = vmatprep.subr.mxu0 %v1826
      %2091 = vmatpush1.msra.mxu0 %v1825
      %2092 = vmatprep.subr.mxu0 %v1834
      %2093 = vmatpush1.msra.mxu0 %v1833
      %2094 = vmatprep.subr.mxu0 %v1842
      %2095 = vmatpush1.msra.mxu0 %v1841
      %2096 = vmatprep.subr.mxu0 %v1850
      %2097 = vmatpush1.msra.mxu0 %v1849
      %2098 = vmatprep.subr.mxu0 %v1858
      %2099 = vmatpush1.msra.mxu0 %v1857
      %2100 = vmatprep.subr.mxu0 %v1866
      %2101 = vmatpush1.msra.mxu0 %v1865
      %2102 = vmatprep.subr.mxu0 %v1874
      %2103 = vmatpush1.msra.mxu0 %v1873
      %2104 = vmatprep.subr.mxu0 %v1882
      %2105 = vmatpush1.msra.mxu0 %v1881
      %2106 = vmatprep.subr.mxu0 %v1890
      %2107 = vmatpush1.msra.mxu0 %v1889
      %2108 = vmatprep.subr.mxu0 %v1898
      %2109 = vmatpush1.msra.mxu0 %v1897
      %2110 = vmatprep.subr.mxu0 %v1906
      %2111 = vmatpush1.msra.mxu0 %v1905
      %2112 = vmatprep.subr.mxu0 %v1914
      %2113 = vmatpush1.msra.mxu0 %v1913
      %2114 = vmatprep.subr.mxu0 %v1922
      %2115 = vmatpush1.msra.mxu0 %v1921
      %2116 = vmatprep.subr.mxu0 %v1930
      %2117 = vmatpush1.msra.mxu0 %v1929
      %2118 = vmatprep.subr.mxu0 %v1938
      %2119 = vmatpush1.msra.mxu0 %v1937
      %2120 = vmatprep.subr.mxu0 %v1946
      %2121 = vmatpush1.msra.mxu0 %v1945
      %2122 = vmatprep.subr.mxu0 %v1954
      %2123 = vmatpush1.msra.mxu0 %v1953
      %2124 = vmatprep.subr.mxu0 %v1962
      %2125 = vmatpush1.msra.mxu0 %v1961
      %2126 = vmatprep.subr.mxu0 %v1970
      %2127 = vmatpush1.msra.mxu0 %v1969
      %2128 = vmatprep.subr.mxu0 %v1978
      %2129 = vmatpush1.msra.mxu0 %v1977
      %2130 = vmatprep.subr.mxu0 %v1986
      %2131 = vmatpush1.msra.mxu0 %v1985
      %2132 = vmatprep.subr.mxu0 %v1994
      %2133 = vmatpush1.msra.mxu0 %v1993
      %2134 = vmatprep.mubr.f32.mxu0 %v653
      %2135 = vmatmul.mubr.f32.gmra.mrb[0].mxu0 %v651
      %v2136 = vpop.f32.mrb[0].mxu0
      %v2137 = vadd.f32 0.0, %v2136
      %v2138 = vpop.f32.mrb[0].mxu0
      %v2139 = vadd.f32 0.0, %v2138
      %2140 = vdwg.mxu0
      %2141 = vmatprep.subr.mxu0 %v1748
      %2142 = vmatpush1.msra.mxu0 %v1747
      %2143 = vmatprep.subr.mxu0 %v1756
      %2144 = vmatpush1.msra.mxu0 %v1755
      %2145 = vmatprep.subr.mxu0 %v1764
      %2146 = vmatpush1.msra.mxu0 %v1763
      %2147 = vmatprep.subr.mxu0 %v1772
      %2148 = vmatpush1.msra.mxu0 %v1771
      %2149 = vmatprep.subr.mxu0 %v1780
      %2150 = vmatpush1.msra.mxu0 %v1779
      %2151 = vmatprep.subr.mxu0 %v1788
      %2152 = vmatpush1.msra.mxu0 %v1787
      %2153 = vmatprep.subr.mxu0 %v1796
      %2154 = vmatpush1.msra.mxu0 %v1795
      %2155 = vmatprep.subr.mxu0 %v1804
      %2156 = vmatpush1.msra.mxu0 %v1803
      %2157 = vmatprep.subr.mxu0 %v1812
      %2158 = vmatpush1.msra.mxu0 %v1811
      %2159 = vmatprep.subr.mxu0 %v1820
      %2160 = vmatpush1.msra.mxu0 %v1819
      %2161 = vmatprep.subr.mxu0 %v1828
      %2162 = vmatpush1.msra.mxu0 %v1827
      %2163 = vmatprep.subr.mxu0 %v1836
      %2164 = vmatpush1.msra.mxu0 %v1835
      %2165 = vmatprep.subr.mxu0 %v1844
      %2166 = vmatpush1.msra.mxu0 %v1843
      %2167 = vmatprep.subr.mxu0 %v1852
      %2168 = vmatpush1.msra.mxu0 %v1851
      %2169 = vmatprep.subr.mxu0 %v1860
      %2170 = vmatpush1.msra.mxu0 %v1859
      %2171 = vmatprep.subr.mxu0 %v1868
      %2172 = vmatpush1.msra.mxu0 %v1867
      %2173 = vmatprep.subr.mxu0 %v1876
      %2174 = vmatpush1.msra.mxu0 %v1875
      %2175 = vmatprep.subr.mxu0 %v1884
      %2176 = vmatpush1.msra.mxu0 %v1883
      %2177 = vmatprep.subr.mxu0 %v1892
      %2178 = vmatpush1.msra.mxu0 %v1891
      %2179 = vmatprep.subr.mxu0 %v1900
      %2180 = vmatpush1.msra.mxu0 %v1899
      %2181 = vmatprep.subr.mxu0 %v1908
      %2182 = vmatpush1.msra.mxu0 %v1907
      %2183 = vmatprep.subr.mxu0 %v1916
      %2184 = vmatpush1.msra.mxu0 %v1915
      %2185 = vmatprep.subr.mxu0 %v1924
      %2186 = vmatpush1.msra.mxu0 %v1923
      %2187 = vmatprep.subr.mxu0 %v1932
      %2188 = vmatpush1.msra.mxu0 %v1931
      %2189 = vmatprep.subr.mxu0 %v1940
      %2190 = vmatpush1.msra.mxu0 %v1939
      %2191 = vmatprep.subr.mxu0 %v1948
      %2192 = vmatpush1.msra.mxu0 %v1947
      %2193 = vmatprep.subr.mxu0 %v1956
      %2194 = vmatpush1.msra.mxu0 %v1955
      %2195 = vmatprep.subr.mxu0 %v1964
      %2196 = vmatpush1.msra.mxu0 %v1963
      %2197 = vmatprep.subr.mxu0 %v1972
      %2198 = vmatpush1.msra.mxu0 %v1971
      %2199 = vmatprep.subr.mxu0 %v1980
      %2200 = vmatpush1.msra.mxu0 %v1979
      %2201 = vmatprep.subr.mxu0 %v1988
      %2202 = vmatpush1.msra.mxu0 %v1987
      %2203 = vmatprep.subr.mxu0 %v1996
      %2204 = vmatpush1.msra.mxu0 %v1995
      %2205 = vmatprep.mubr.f32.mxu0 %v653
      %2206 = vmatmul.mubr.f32.gmra.mrb[0].mxu0 %v651
      %v2207 = vpop.f32.mrb[0].mxu0
      %v2208 = vadd.f32 0.0, %v2207
      %v2209 = vpop.f32.mrb[0].mxu0
      %v2210 = vadd.f32 0.0, %v2209
      %2211 = vdwg.mxu0
      %2212 = vmatprep.subr.mxu0 %v1750
      %2213 = vmatpush1.msra.mxu0 %v1749
      %2214 = vmatprep.subr.mxu0 %v1758
      %2215 = vmatpush1.msra.mxu0 %v1757
      %2216 = vmatprep.subr.mxu0 %v1766
      %2217 = vmatpush1.msra.mxu0 %v1765
      %2218 = vmatprep.subr.mxu0 %v1774
      %2219 = vmatpush1.msra.mxu0 %v1773
      %2220 = vmatprep.subr.mxu0 %v1782
      %2221 = vmatpush1.msra.mxu0 %v1781
      %2222 = vmatprep.subr.mxu0 %v1790
      %2223 = vmatpush1.msra.mxu0 %v1789
      %2224 = vmatprep.subr.mxu0 %v1798
      %2225 = vmatpush1.msra.mxu0 %v1797
      %2226 = vmatprep.subr.mxu0 %v1806
      %2227 = vmatpush1.msra.mxu0 %v1805
      %2228 = vmatprep.subr.mxu0 %v1814
      %2229 = vmatpush1.msra.mxu0 %v1813
      %2230 = vmatprep.subr.mxu0 %v1822
      %2231 = vmatpush1.msra.mxu0 %v1821
      %2232 = vmatprep.subr.mxu0 %v1830
      %2233 = vmatpush1.msra.mxu0 %v1829
      %2234 = vmatprep.subr.mxu0 %v1838
      %2235 = vmatpush1.msra.mxu0 %v1837
      %2236 = vmatprep.subr.mxu0 %v1846
      %2237 = vmatpush1.msra.mxu0 %v1845
      %2238 = vmatprep.subr.mxu0 %v1854
      %2239 = vmatpush1.msra.mxu0 %v1853
      %2240 = vmatprep.subr.mxu0 %v1862
      %2241 = vmatpush1.msra.mxu0 %v1861
      %2242 = vmatprep.subr.mxu0 %v1870
      %2243 = vmatpush1.msra.mxu0 %v1869
      %2244 = vmatprep.subr.mxu0 %v1878
      %2245 = vmatpush1.msra.mxu0 %v1877
      %2246 = vmatprep.subr.mxu0 %v1886
      %2247 = vmatpush1.msra.mxu0 %v1885
      %2248 = vmatprep.subr.mxu0 %v1894
      %2249 = vmatpush1.msra.mxu0 %v1893
      %2250 = vmatprep.subr.mxu0 %v1902
      %2251 = vmatpush1.msra.mxu0 %v1901
      %2252 = vmatprep.subr.mxu0 %v1910
      %2253 = vmatpush1.msra.mxu0 %v1909
      %2254 = vmatprep.subr.mxu0 %v1918
      %2255 = vmatpush1.msra.mxu0 %v1917
      %2256 = vmatprep.subr.mxu0 %v1926
      %2257 = vmatpush1.msra.mxu0 %v1925
      %2258 = vmatprep.subr.mxu0 %v1934
      %2259 = vmatpush1.msra.mxu0 %v1933
      %2260 = vmatprep.subr.mxu0 %v1942
      %2261 = vmatpush1.msra.mxu0 %v1941
      %2262 = vmatprep.subr.mxu0 %v1950
      %2263 = vmatpush1.msra.mxu0 %v1949
      %2264 = vmatprep.subr.mxu0 %v1958
      %2265 = vmatpush1.msra.mxu0 %v1957
      %2266 = vmatprep.subr.mxu0 %v1966
      %2267 = vmatpush1.msra.mxu0 %v1965
      %2268 = vmatprep.subr.mxu0 %v1974
      %2269 = vmatpush1.msra.mxu0 %v1973
      %2270 = vmatprep.subr.mxu0 %v1982
      %2271 = vmatpush1.msra.mxu0 %v1981
      %2272 = vmatprep.subr.mxu0 %v1990
      %2273 = vmatpush1.msra.mxu0 %v1989
      %2274 = vmatprep.subr.mxu0 %v1998
      %2275 = vmatpush1.msra.mxu0 %v1997
      %2276 = vmatprep.mubr.f32.mxu0 %v653
      %2277 = vmatmul.mubr.f32.gmra.mrb[0].mxu0 %v651
      %v2278 = vpop.f32.mrb[0].mxu0
      %v2279 = vadd.f32 0.0, %v2278
      %v2280 = vpop.f32.mrb[0].mxu0
      %v2281 = vadd.f32 0.0, %v2280
      %2282 = vdwg.mxu0
      %v2283 = vadd.f32 %v1525, %v2066
      %v2284 = vadd.f32 %v1527, %v2068
      %v2285 = vadd.f32 %v1596, %v2137
      %v2286 = vadd.f32 %v1598, %v2139
      %v2287 = vadd.f32 %v1667, %v2208
      %v2288 = vadd.f32 %v1669, %v2210
      %v2289 = vadd.f32 %v1738, %v2279
      %v2290 = vadd.f32 %v1740, %v2281
      %s2291 = scalar_lea.vmem %s4, 6144
      %v2292 = vld [vmem:[%s2291] sm:$0xff]
      %v2293 = vld [vmem:[%s2291 + $0x8] sm:$0xff]
      %v2294 = vld [vmem:[%s2291 + $0x10] sm:$0xff]
      %v2295 = vld [vmem:[%s2291 + $0x18] sm:$0xff]
      %v2296 = vld [vmem:[%s2291 + $0x20] sm:$0xff]
      %v2297 = vld [vmem:[%s2291 + $0x28] sm:$0xff]
      %v2298 = vld [vmem:[%s2291 + $0x30] sm:$0xff]
      %v2299 = vld [vmem:[%s2291 + $0x38] sm:$0xff]
      %v2300 = vld [vmem:[%s2291 + $0x40] sm:$0xff]
      %v2301 = vld [vmem:[%s2291 + $0x48] sm:$0xff]
      %v2302 = vld [vmem:[%s2291 + $0x50] sm:$0xff]
      %v2303 = vld [vmem:[%s2291 + $0x58] sm:$0xff]
      %v2304 = vld [vmem:[%s2291 + $0x60] sm:$0xff]
      %v2305 = vld [vmem:[%s2291 + $0x68] sm:$0xff]
      %v2306 = vld [vmem:[%s2291 + $0x70] sm:$0xff]
      %v2307 = vld [vmem:[%s2291 + $0x78] sm:$0xff]
      %v2308 = vld [vmem:[%s2291 + $0x80] sm:$0xff]
      %v2309 = vld [vmem:[%s2291 + $0x88] sm:$0xff]
      %v2310 = vld [vmem:[%s2291 + $0x90] sm:$0xff]
      %v2311 = vld [vmem:[%s2291 + $0x98] sm:$0xff]
      %v2312 = vld [vmem:[%s2291 + $0xa0] sm:$0xff]
      %v2313 = vld [vmem:[%s2291 + $0xa8] sm:$0xff]
      %v2314 = vld [vmem:[%s2291 + $0xb0] sm:$0xff]
      %v2315 = vld [vmem:[%s2291 + $0xb8] sm:$0xff]
      %v2316 = vld [vmem:[%s2291 + $0xc0] sm:$0xff]
      %v2317 = vld [vmem:[%s2291 + $0xc8] sm:$0xff]
      %v2318 = vld [vmem:[%s2291 + $0xd0] sm:$0xff]
      %v2319 = vld [vmem:[%s2291 + $0xd8] sm:$0xff]
      %v2320 = vld [vmem:[%s2291 + $0xe0] sm:$0xff]
      %v2321 = vld [vmem:[%s2291 + $0xe8] sm:$0xff]
      %v2322 = vld [vmem:[%s2291 + $0xf0] sm:$0xff]
      %v2323 = vld [vmem:[%s2291 + $0xf8] sm:$0xff]
      %v2324 = vld [vmem:[%s2291 + $0x100] sm:$0xff]
      %v2325 = vld [vmem:[%s2291 + $0x108] sm:$0xff]
      %v2326 = vld [vmem:[%s2291 + $0x110] sm:$0xff]
      %v2327 = vld [vmem:[%s2291 + $0x118] sm:$0xff]
      %v2328 = vld [vmem:[%s2291 + $0x120] sm:$0xff]
      %v2329 = vld [vmem:[%s2291 + $0x128] sm:$0xff]
      %v2330 = vld [vmem:[%s2291 + $0x130] sm:$0xff]
      %v2331 = vld [vmem:[%s2291 + $0x138] sm:$0xff]
      %v2332 = vld [vmem:[%s2291 + $0x140] sm:$0xff]
      %v2333 = vld [vmem:[%s2291 + $0x148] sm:$0xff]
      %v2334 = vld [vmem:[%s2291 + $0x150] sm:$0xff]
      %v2335 = vld [vmem:[%s2291 + $0x158] sm:$0xff]
      %v2336 = vld [vmem:[%s2291 + $0x160] sm:$0xff]
      %v2337 = vld [vmem:[%s2291 + $0x168] sm:$0xff]
      %v2338 = vld [vmem:[%s2291 + $0x170] sm:$0xff]
      %v2339 = vld [vmem:[%s2291 + $0x178] sm:$0xff]
      %v2340 = vld [vmem:[%s2291 + $0x180] sm:$0xff]
      %v2341 = vld [vmem:[%s2291 + $0x188] sm:$0xff]
      %v2342 = vld [vmem:[%s2291 + $0x190] sm:$0xff]
      %v2343 = vld [vmem:[%s2291 + $0x198] sm:$0xff]
      %v2344 = vld [vmem:[%s2291 + $0x1a0] sm:$0xff]
      %v2345 = vld [vmem:[%s2291 + $0x1a8] sm:$0xff]
      %v2346 = vld [vmem:[%s2291 + $0x1b0] sm:$0xff]
      %v2347 = vld [vmem:[%s2291 + $0x1b8] sm:$0xff]
      %v2348 = vld [vmem:[%s2291 + $0x1c0] sm:$0xff]
      %v2349 = vld [vmem:[%s2291 + $0x1c8] sm:$0xff]
      %v2350 = vld [vmem:[%s2291 + $0x1d0] sm:$0xff]
      %v2351 = vld [vmem:[%s2291 + $0x1d8] sm:$0xff]
      %v2352 = vld [vmem:[%s2291 + $0x1e0] sm:$0xff]
      %v2353 = vld [vmem:[%s2291 + $0x1e8] sm:$0xff]
      %v2354 = vld [vmem:[%s2291 + $0x1f0] sm:$0xff]
      %v2355 = vld [vmem:[%s2291 + $0x1f8] sm:$0xff]
      %v2356 = vld [vmem:[%s2291 + $0x200] sm:$0xff]
      %v2357 = vld [vmem:[%s2291 + $0x208] sm:$0xff]
      %v2358 = vld [vmem:[%s2291 + $0x210] sm:$0xff]
      %v2359 = vld [vmem:[%s2291 + $0x218] sm:$0xff]
      %v2360 = vld [vmem:[%s2291 + $0x220] sm:$0xff]
      %v2361 = vld [vmem:[%s2291 + $0x228] sm:$0xff]
      %v2362 = vld [vmem:[%s2291 + $0x230] sm:$0xff]
      %v2363 = vld [vmem:[%s2291 + $0x238] sm:$0xff]
      %v2364 = vld [vmem:[%s2291 + $0x240] sm:$0xff]
      %v2365 = vld [vmem:[%s2291 + $0x248] sm:$0xff]
      %v2366 = vld [vmem:[%s2291 + $0x250] sm:$0xff]
      %v2367 = vld [vmem:[%s2291 + $0x258] sm:$0xff]
      %v2368 = vld [vmem:[%s2291 + $0x260] sm:$0xff]
      %v2369 = vld [vmem:[%s2291 + $0x268] sm:$0xff]
      %v2370 = vld [vmem:[%s2291 + $0x270] sm:$0xff]
      %v2371 = vld [vmem:[%s2291 + $0x278] sm:$0xff]
      %v2372 = vld [vmem:[%s2291 + $0x280] sm:$0xff]
      %v2373 = vld [vmem:[%s2291 + $0x288] sm:$0xff]
      %v2374 = vld [vmem:[%s2291 + $0x290] sm:$0xff]
      %v2375 = vld [vmem:[%s2291 + $0x298] sm:$0xff]
      %v2376 = vld [vmem:[%s2291 + $0x2a0] sm:$0xff]
      %v2377 = vld [vmem:[%s2291 + $0x2a8] sm:$0xff]
      %v2378 = vld [vmem:[%s2291 + $0x2b0] sm:$0xff]
      %v2379 = vld [vmem:[%s2291 + $0x2b8] sm:$0xff]
      %v2380 = vld [vmem:[%s2291 + $0x2c0] sm:$0xff]
      %v2381 = vld [vmem:[%s2291 + $0x2c8] sm:$0xff]
      %v2382 = vld [vmem:[%s2291 + $0x2d0] sm:$0xff]
      %v2383 = vld [vmem:[%s2291 + $0x2d8] sm:$0xff]
      %v2384 = vld [vmem:[%s2291 + $0x2e0] sm:$0xff]
      %v2385 = vld [vmem:[%s2291 + $0x2e8] sm:$0xff]
      %v2386 = vld [vmem:[%s2291 + $0x2f0] sm:$0xff]
      %v2387 = vld [vmem:[%s2291 + $0x2f8] sm:$0xff]
      %v2388 = vld [vmem:[%s2291 + $0x300] sm:$0xff]
      %v2389 = vld [vmem:[%s2291 + $0x308] sm:$0xff]
      %v2390 = vld [vmem:[%s2291 + $0x310] sm:$0xff]
      %v2391 = vld [vmem:[%s2291 + $0x318] sm:$0xff]
      %v2392 = vld [vmem:[%s2291 + $0x320] sm:$0xff]
      %v2393 = vld [vmem:[%s2291 + $0x328] sm:$0xff]
      %v2394 = vld [vmem:[%s2291 + $0x330] sm:$0xff]
      %v2395 = vld [vmem:[%s2291 + $0x338] sm:$0xff]
      %v2396 = vld [vmem:[%s2291 + $0x340] sm:$0xff]
      %v2397 = vld [vmem:[%s2291 + $0x348] sm:$0xff]
      %v2398 = vld [vmem:[%s2291 + $0x350] sm:$0xff]
      %v2399 = vld [vmem:[%s2291 + $0x358] sm:$0xff]
      %v2400 = vld [vmem:[%s2291 + $0x360] sm:$0xff]
      %v2401 = vld [vmem:[%s2291 + $0x368] sm:$0xff]
      %v2402 = vld [vmem:[%s2291 + $0x370] sm:$0xff]
      %v2403 = vld [vmem:[%s2291 + $0x378] sm:$0xff]
      %v2404 = vld [vmem:[%s2291 + $0x380] sm:$0xff]
      %v2405 = vld [vmem:[%s2291 + $0x388] sm:$0xff]
      %v2406 = vld [vmem:[%s2291 + $0x390] sm:$0xff]
      %v2407 = vld [vmem:[%s2291 + $0x398] sm:$0xff]
      %v2408 = vld [vmem:[%s2291 + $0x3a0] sm:$0xff]
      %v2409 = vld [vmem:[%s2291 + $0x3a8] sm:$0xff]
      %v2410 = vld [vmem:[%s2291 + $0x3b0] sm:$0xff]
      %v2411 = vld [vmem:[%s2291 + $0x3b8] sm:$0xff]
      %v2412 = vld [vmem:[%s2291 + $0x3c0] sm:$0xff]
      %v2413 = vld [vmem:[%s2291 + $0x3c8] sm:$0xff]
      %v2414 = vld [vmem:[%s2291 + $0x3d0] sm:$0xff]
      %v2415 = vld [vmem:[%s2291 + $0x3d8] sm:$0xff]
      %v2416 = vld [vmem:[%s2291 + $0x3e0] sm:$0xff]
      %v2417 = vld [vmem:[%s2291 + $0x3e8] sm:$0xff]
      %v2418 = vld [vmem:[%s2291 + $0x3f0] sm:$0xff]
      %v2419 = vld [vmem:[%s2291 + $0x3f8] sm:$0xff]
      %v2420 = vld [vmem:[%s2291 + $0x400] sm:$0xff]
      %v2421 = vld [vmem:[%s2291 + $0x408] sm:$0xff]
      %v2422 = vld [vmem:[%s2291 + $0x410] sm:$0xff]
      %v2423 = vld [vmem:[%s2291 + $0x418] sm:$0xff]
      %v2424 = vld [vmem:[%s2291 + $0x420] sm:$0xff]
      %v2425 = vld [vmem:[%s2291 + $0x428] sm:$0xff]
      %v2426 = vld [vmem:[%s2291 + $0x430] sm:$0xff]
      %v2427 = vld [vmem:[%s2291 + $0x438] sm:$0xff]
      %v2428 = vld [vmem:[%s2291 + $0x440] sm:$0xff]
      %v2429 = vld [vmem:[%s2291 + $0x448] sm:$0xff]
      %v2430 = vld [vmem:[%s2291 + $0x450] sm:$0xff]
      %v2431 = vld [vmem:[%s2291 + $0x458] sm:$0xff]
      %v2432 = vld [vmem:[%s2291 + $0x460] sm:$0xff]
      %v2433 = vld [vmem:[%s2291 + $0x468] sm:$0xff]
      %v2434 = vld [vmem:[%s2291 + $0x470] sm:$0xff]
      %v2435 = vld [vmem:[%s2291 + $0x478] sm:$0xff]
      %v2436 = vld [vmem:[%s2291 + $0x480] sm:$0xff]
      %v2437 = vld [vmem:[%s2291 + $0x488] sm:$0xff]
      %v2438 = vld [vmem:[%s2291 + $0x490] sm:$0xff]
      %v2439 = vld [vmem:[%s2291 + $0x498] sm:$0xff]
      %v2440 = vld [vmem:[%s2291 + $0x4a0] sm:$0xff]
      %v2441 = vld [vmem:[%s2291 + $0x4a8] sm:$0xff]
      %v2442 = vld [vmem:[%s2291 + $0x4b0] sm:$0xff]
      %v2443 = vld [vmem:[%s2291 + $0x4b8] sm:$0xff]
      %v2444 = vld [vmem:[%s2291 + $0x4c0] sm:$0xff]
      %v2445 = vld [vmem:[%s2291 + $0x4c8] sm:$0xff]
      %v2446 = vld [vmem:[%s2291 + $0x4d0] sm:$0xff]
      %v2447 = vld [vmem:[%s2291 + $0x4d8] sm:$0xff]
      %v2448 = vld [vmem:[%s2291 + $0x4e0] sm:$0xff]
      %v2449 = vld [vmem:[%s2291 + $0x4e8] sm:$0xff]
      %v2450 = vld [vmem:[%s2291 + $0x4f0] sm:$0xff]
      %v2451 = vld [vmem:[%s2291 + $0x4f8] sm:$0xff]
      %v2452 = vld [vmem:[%s2291 + $0x500] sm:$0xff]
      %v2453 = vld [vmem:[%s2291 + $0x508] sm:$0xff]
      %v2454 = vld [vmem:[%s2291 + $0x510] sm:$0xff]
      %v2455 = vld [vmem:[%s2291 + $0x518] sm:$0xff]
      %v2456 = vld [vmem:[%s2291 + $0x520] sm:$0xff]
      %v2457 = vld [vmem:[%s2291 + $0x528] sm:$0xff]
      %v2458 = vld [vmem:[%s2291 + $0x530] sm:$0xff]
      %v2459 = vld [vmem:[%s2291 + $0x538] sm:$0xff]
      %v2460 = vld [vmem:[%s2291 + $0x540] sm:$0xff]
      %v2461 = vld [vmem:[%s2291 + $0x548] sm:$0xff]
      %v2462 = vld [vmem:[%s2291 + $0x550] sm:$0xff]
      %v2463 = vld [vmem:[%s2291 + $0x558] sm:$0xff]
      %v2464 = vld [vmem:[%s2291 + $0x560] sm:$0xff]
      %v2465 = vld [vmem:[%s2291 + $0x568] sm:$0xff]
      %v2466 = vld [vmem:[%s2291 + $0x570] sm:$0xff]
      %v2467 = vld [vmem:[%s2291 + $0x578] sm:$0xff]
      %v2468 = vld [vmem:[%s2291 + $0x580] sm:$0xff]
      %v2469 = vld [vmem:[%s2291 + $0x588] sm:$0xff]
      %v2470 = vld [vmem:[%s2291 + $0x590] sm:$0xff]
      %v2471 = vld [vmem:[%s2291 + $0x598] sm:$0xff]
      %v2472 = vld [vmem:[%s2291 + $0x5a0] sm:$0xff]
      %v2473 = vld [vmem:[%s2291 + $0x5a8] sm:$0xff]
      %v2474 = vld [vmem:[%s2291 + $0x5b0] sm:$0xff]
      %v2475 = vld [vmem:[%s2291 + $0x5b8] sm:$0xff]
      %v2476 = vld [vmem:[%s2291 + $0x5c0] sm:$0xff]
      %v2477 = vld [vmem:[%s2291 + $0x5c8] sm:$0xff]
      %v2478 = vld [vmem:[%s2291 + $0x5d0] sm:$0xff]
      %v2479 = vld [vmem:[%s2291 + $0x5d8] sm:$0xff]
      %v2480 = vld [vmem:[%s2291 + $0x5e0] sm:$0xff]
      %v2481 = vld [vmem:[%s2291 + $0x5e8] sm:$0xff]
      %v2482 = vld [vmem:[%s2291 + $0x5f0] sm:$0xff]
      %v2483 = vld [vmem:[%s2291 + $0x5f8] sm:$0xff]
      %v2484 = vld [vmem:[%s2291 + $0x600] sm:$0xff]
      %v2485 = vld [vmem:[%s2291 + $0x608] sm:$0xff]
      %v2486 = vld [vmem:[%s2291 + $0x610] sm:$0xff]
      %v2487 = vld [vmem:[%s2291 + $0x618] sm:$0xff]
      %v2488 = vld [vmem:[%s2291 + $0x620] sm:$0xff]
      %v2489 = vld [vmem:[%s2291 + $0x628] sm:$0xff]
      %v2490 = vld [vmem:[%s2291 + $0x630] sm:$0xff]
      %v2491 = vld [vmem:[%s2291 + $0x638] sm:$0xff]
      %v2492 = vld [vmem:[%s2291 + $0x640] sm:$0xff]
      %v2493 = vld [vmem:[%s2291 + $0x648] sm:$0xff]
      %v2494 = vld [vmem:[%s2291 + $0x650] sm:$0xff]
      %v2495 = vld [vmem:[%s2291 + $0x658] sm:$0xff]
      %v2496 = vld [vmem:[%s2291 + $0x660] sm:$0xff]
      %v2497 = vld [vmem:[%s2291 + $0x668] sm:$0xff]
      %v2498 = vld [vmem:[%s2291 + $0x670] sm:$0xff]
      %v2499 = vld [vmem:[%s2291 + $0x678] sm:$0xff]
      %v2500 = vld [vmem:[%s2291 + $0x680] sm:$0xff]
      %v2501 = vld [vmem:[%s2291 + $0x688] sm:$0xff]
      %v2502 = vld [vmem:[%s2291 + $0x690] sm:$0xff]
      %v2503 = vld [vmem:[%s2291 + $0x698] sm:$0xff]
      %v2504 = vld [vmem:[%s2291 + $0x6a0] sm:$0xff]
      %v2505 = vld [vmem:[%s2291 + $0x6a8] sm:$0xff]
      %v2506 = vld [vmem:[%s2291 + $0x6b0] sm:$0xff]
      %v2507 = vld [vmem:[%s2291 + $0x6b8] sm:$0xff]
      %v2508 = vld [vmem:[%s2291 + $0x6c0] sm:$0xff]
      %v2509 = vld [vmem:[%s2291 + $0x6c8] sm:$0xff]
      %v2510 = vld [vmem:[%s2291 + $0x6d0] sm:$0xff]
      %v2511 = vld [vmem:[%s2291 + $0x6d8] sm:$0xff]
      %v2512 = vld [vmem:[%s2291 + $0x6e0] sm:$0xff]
      %v2513 = vld [vmem:[%s2291 + $0x6e8] sm:$0xff]
      %v2514 = vld [vmem:[%s2291 + $0x6f0] sm:$0xff]
      %v2515 = vld [vmem:[%s2291 + $0x6f8] sm:$0xff]
      %v2516 = vld [vmem:[%s2291 + $0x700] sm:$0xff]
      %v2517 = vld [vmem:[%s2291 + $0x708] sm:$0xff]
      %v2518 = vld [vmem:[%s2291 + $0x710] sm:$0xff]
      %v2519 = vld [vmem:[%s2291 + $0x718] sm:$0xff]
      %v2520 = vld [vmem:[%s2291 + $0x720] sm:$0xff]
      %v2521 = vld [vmem:[%s2291 + $0x728] sm:$0xff]
      %v2522 = vld [vmem:[%s2291 + $0x730] sm:$0xff]
      %v2523 = vld [vmem:[%s2291 + $0x738] sm:$0xff]
      %v2524 = vld [vmem:[%s2291 + $0x740] sm:$0xff]
      %v2525 = vld [vmem:[%s2291 + $0x748] sm:$0xff]
      %v2526 = vld [vmem:[%s2291 + $0x750] sm:$0xff]
      %v2527 = vld [vmem:[%s2291 + $0x758] sm:$0xff]
      %v2528 = vld [vmem:[%s2291 + $0x760] sm:$0xff]
      %v2529 = vld [vmem:[%s2291 + $0x768] sm:$0xff]
      %v2530 = vld [vmem:[%s2291 + $0x770] sm:$0xff]
      %v2531 = vld [vmem:[%s2291 + $0x778] sm:$0xff]
      %v2532 = vld [vmem:[%s2291 + $0x780] sm:$0xff]
      %v2533 = vld [vmem:[%s2291 + $0x788] sm:$0xff]
      %v2534 = vld [vmem:[%s2291 + $0x790] sm:$0xff]
      %v2535 = vld [vmem:[%s2291 + $0x798] sm:$0xff]
      %v2536 = vld [vmem:[%s2291 + $0x7a0] sm:$0xff]
      %v2537 = vld [vmem:[%s2291 + $0x7a8] sm:$0xff]
      %v2538 = vld [vmem:[%s2291 + $0x7b0] sm:$0xff]
      %v2539 = vld [vmem:[%s2291 + $0x7b8] sm:$0xff]
      %v2540 = vld [vmem:[%s2291 + $0x7c0] sm:$0xff]
      %v2541 = vld [vmem:[%s2291 + $0x7c8] sm:$0xff]
      %v2542 = vld [vmem:[%s2291 + $0x7d0] sm:$0xff]
      %v2543 = vld [vmem:[%s2291 + $0x7d8] sm:$0xff]
      %v2544 = vld [vmem:[%s2291 + $0x7e0] sm:$0xff]
      %v2545 = vld [vmem:[%s2291 + $0x7e8] sm:$0xff]
      %v2546 = vld [vmem:[%s2291 + $0x7f0] sm:$0xff]
      %v2547 = vld [vmem:[%s2291 + $0x7f8] sm:$0xff]
      %v2550 = vrot.slane %v651, 4
      %v2551 = vrot.slane %v653, 4
      %2554 = vmatprep.subr.mxu0 %v2293
      %2555 = vmatpush1.msra.mxu0 %v2292
      %2556 = vmatprep.subr.mxu0 %v2301
      %2557 = vmatpush1.msra.mxu0 %v2300
      %2558 = vmatprep.subr.mxu0 %v2309
      %2559 = vmatpush1.msra.mxu0 %v2308
      %2560 = vmatprep.subr.mxu0 %v2317
      %2561 = vmatpush1.msra.mxu0 %v2316
      %2562 = vmatprep.subr.mxu0 %v2325
      %2563 = vmatpush1.msra.mxu0 %v2324
      %2564 = vmatprep.subr.mxu0 %v2333
      %2565 = vmatpush1.msra.mxu0 %v2332
      %2566 = vmatprep.subr.mxu0 %v2341
      %2567 = vmatpush1.msra.mxu0 %v2340
      %2568 = vmatprep.subr.mxu0 %v2349
      %2569 = vmatpush1.msra.mxu0 %v2348
      %2570 = vmatprep.subr.mxu0 %v2357
      %2571 = vmatpush1.msra.mxu0 %v2356
      %2572 = vmatprep.subr.mxu0 %v2365
      %2573 = vmatpush1.msra.mxu0 %v2364
      %2574 = vmatprep.subr.mxu0 %v2373
      %2575 = vmatpush1.msra.mxu0 %v2372
      %2576 = vmatprep.subr.mxu0 %v2381
      %2577 = vmatpush1.msra.mxu0 %v2380
      %2578 = vmatprep.subr.mxu0 %v2389
      %2579 = vmatpush1.msra.mxu0 %v2388
      %2580 = vmatprep.subr.mxu0 %v2397
      %2581 = vmatpush1.msra.mxu0 %v2396
      %2582 = vmatprep.subr.mxu0 %v2405
      %2583 = vmatpush1.msra.mxu0 %v2404
      %2584 = vmatprep.subr.mxu0 %v2413
      %2585 = vmatpush1.msra.mxu0 %v2412
      %2586 = vmatprep.subr.mxu0 %v2421
      %2587 = vmatpush1.msra.mxu0 %v2420
      %2588 = vmatprep.subr.mxu0 %v2429
      %2589 = vmatpush1.msra.mxu0 %v2428
      %2590 = vmatprep.subr.mxu0 %v2437
      %2591 = vmatpush1.msra.mxu0 %v2436
      %2592 = vmatprep.subr.mxu0 %v2445
      %2593 = vmatpush1.msra.mxu0 %v2444
      %2594 = vmatprep.subr.mxu0 %v2453
      %2595 = vmatpush1.msra.mxu0 %v2452
      %2596 = vmatprep.subr.mxu0 %v2461
      %2597 = vmatpush1.msra.mxu0 %v2460
      %2598 = vmatprep.subr.mxu0 %v2469
      %2599 = vmatpush1.msra.mxu0 %v2468
      %2600 = vmatprep.subr.mxu0 %v2477
      %2601 = vmatpush1.msra.mxu0 %v2476
      %2602 = vmatprep.subr.mxu0 %v2485
      %2603 = vmatpush1.msra.mxu0 %v2484
      %2604 = vmatprep.subr.mxu0 %v2493
      %2605 = vmatpush1.msra.mxu0 %v2492
      %2606 = vmatprep.subr.mxu0 %v2501
      %2607 = vmatpush1.msra.mxu0 %v2500
      %2608 = vmatprep.subr.mxu0 %v2509
      %2609 = vmatpush1.msra.mxu0 %v2508
      %2610 = vmatprep.subr.mxu0 %v2517
      %2611 = vmatpush1.msra.mxu0 %v2516
      %2612 = vmatprep.subr.mxu0 %v2525
      %2613 = vmatpush1.msra.mxu0 %v2524
      %2614 = vmatprep.subr.mxu0 %v2533
      %2615 = vmatpush1.msra.mxu0 %v2532
      %2616 = vmatprep.subr.mxu0 %v2541
      %2617 = vmatpush1.msra.mxu0 %v2540
      %2618 = vmatprep.mubr.f32.mxu0 %v2551
      %2619 = vmatmul.mubr.f32.gmra.mrb[0].mxu0 %v2550
      %v2620 = vpop.f32.mrb[0].mxu0
      %v2621 = vadd.f32 0.0, %v2620
      %v2622 = vpop.f32.mrb[0].mxu0
      %v2623 = vadd.f32 0.0, %v2622
      %2624 = vdwg.mxu0
      %2625 = vmatprep.subr.mxu0 %v2295
      %2626 = vmatpush1.msra.mxu0 %v2294
      %2627 = vmatprep.subr.mxu0 %v2303
      %2628 = vmatpush1.msra.mxu0 %v2302
      %2629 = vmatprep.subr.mxu0 %v2311
      %2630 = vmatpush1.msra.mxu0 %v2310
      %2631 = vmatprep.subr.mxu0 %v2319
      %2632 = vmatpush1.msra.mxu0 %v2318
      %2633 = vmatprep.subr.mxu0 %v2327
      %2634 = vmatpush1.msra.mxu0 %v2326
      %2635 = vmatprep.subr.mxu0 %v2335
      %2636 = vmatpush1.msra.mxu0 %v2334
      %2637 = vmatprep.subr.mxu0 %v2343
      %2638 = vmatpush1.msra.mxu0 %v2342
      %2639 = vmatprep.subr.mxu0 %v2351
      %2640 = vmatpush1.msra.mxu0 %v2350
      %2641 = vmatprep.subr.mxu0 %v2359
      %2642 = vmatpush1.msra.mxu0 %v2358
      %2643 = vmatprep.subr.mxu0 %v2367
      %2644 = vmatpush1.msra.mxu0 %v2366
      %2645 = vmatprep.subr.mxu0 %v2375
      %2646 = vmatpush1.msra.mxu0 %v2374
      %2647 = vmatprep.subr.mxu0 %v2383
      %2648 = vmatpush1.msra.mxu0 %v2382
      %2649 = vmatprep.subr.mxu0 %v2391
      %2650 = vmatpush1.msra.mxu0 %v2390
      %2651 = vmatprep.subr.mxu0 %v2399
      %2652 = vmatpush1.msra.mxu0 %v2398
      %2653 = vmatprep.subr.mxu0 %v2407
      %2654 = vmatpush1.msra.mxu0 %v2406
      %2655 = vmatprep.subr.mxu0 %v2415
      %2656 = vmatpush1.msra.mxu0 %v2414
      %2657 = vmatprep.subr.mxu0 %v2423
      %2658 = vmatpush1.msra.mxu0 %v2422
      %2659 = vmatprep.subr.mxu0 %v2431
      %2660 = vmatpush1.msra.mxu0 %v2430
      %2661 = vmatprep.subr.mxu0 %v2439
      %2662 = vmatpush1.msra.mxu0 %v2438
      %2663 = vmatprep.subr.mxu0 %v2447
      %2664 = vmatpush1.msra.mxu0 %v2446
      %2665 = vmatprep.subr.mxu0 %v2455
      %2666 = vmatpush1.msra.mxu0 %v2454
      %2667 = vmatprep.subr.mxu0 %v2463
      %2668 = vmatpush1.msra.mxu0 %v2462
      %2669 = vmatprep.subr.mxu0 %v2471
      %2670 = vmatpush1.msra.mxu0 %v2470
      %2671 = vmatprep.subr.mxu0 %v2479
      %2672 = vmatpush1.msra.mxu0 %v2478
      %2673 = vmatprep.subr.mxu0 %v2487
      %2674 = vmatpush1.msra.mxu0 %v2486
      %2675 = vmatprep.subr.mxu0 %v2495
      %2676 = vmatpush1.msra.mxu0 %v2494
      %2677 = vmatprep.subr.mxu0 %v2503
      %2678 = vmatpush1.msra.mxu0 %v2502
      %2679 = vmatprep.subr.mxu0 %v2511
      %2680 = vmatpush1.msra.mxu0 %v2510
      %2681 = vmatprep.subr.mxu0 %v2519
      %2682 = vmatpush1.msra.mxu0 %v2518
      %2683 = vmatprep.subr.mxu0 %v2527
      %2684 = vmatpush1.msra.mxu0 %v2526
      %2685 = vmatprep.subr.mxu0 %v2535
      %2686 = vmatpush1.msra.mxu0 %v2534
      %2687 = vmatprep.subr.mxu0 %v2543
      %2688 = vmatpush1.msra.mxu0 %v2542
      %2689 = vmatprep.mubr.f32.mxu0 %v2551
      %2690 = vmatmul.mubr.f32.gmra.mrb[0].mxu0 %v2550
      %v2691 = vpop.f32.mrb[0].mxu0
      %v2692 = vadd.f32 0.0, %v2691
      %v2693 = vpop.f32.mrb[0].mxu0
      %v2694 = vadd.f32 0.0, %v2693
      %2695 = vdwg.mxu0
      %2696 = vmatprep.subr.mxu0 %v2297
      %2697 = vmatpush1.msra.mxu0 %v2296
      %2698 = vmatprep.subr.mxu0 %v2305
      %2699 = vmatpush1.msra.mxu0 %v2304
      %2700 = vmatprep.subr.mxu0 %v2313
      %2701 = vmatpush1.msra.mxu0 %v2312
      %2702 = vmatprep.subr.mxu0 %v2321
      %2703 = vmatpush1.msra.mxu0 %v2320
      %2704 = vmatprep.subr.mxu0 %v2329
      %2705 = vmatpush1.msra.mxu0 %v2328
      %2706 = vmatprep.subr.mxu0 %v2337
      %2707 = vmatpush1.msra.mxu0 %v2336
      %2708 = vmatprep.subr.mxu0 %v2345
      %2709 = vmatpush1.msra.mxu0 %v2344
      %2710 = vmatprep.subr.mxu0 %v2353
      %2711 = vmatpush1.msra.mxu0 %v2352
      %2712 = vmatprep.subr.mxu0 %v2361
      %2713 = vmatpush1.msra.mxu0 %v2360
      %2714 = vmatprep.subr.mxu0 %v2369
      %2715 = vmatpush1.msra.mxu0 %v2368
      %2716 = vmatprep.subr.mxu0 %v2377
      %2717 = vmatpush1.msra.mxu0 %v2376
      %2718 = vmatprep.subr.mxu0 %v2385
      %2719 = vmatpush1.msra.mxu0 %v2384
      %2720 = vmatprep.subr.mxu0 %v2393
      %2721 = vmatpush1.msra.mxu0 %v2392
      %2722 = vmatprep.subr.mxu0 %v2401
      %2723 = vmatpush1.msra.mxu0 %v2400
      %2724 = vmatprep.subr.mxu0 %v2409
      %2725 = vmatpush1.msra.mxu0 %v2408
      %2726 = vmatprep.subr.mxu0 %v2417
      %2727 = vmatpush1.msra.mxu0 %v2416
      %2728 = vmatprep.subr.mxu0 %v2425
      %2729 = vmatpush1.msra.mxu0 %v2424
      %2730 = vmatprep.subr.mxu0 %v2433
      %2731 = vmatpush1.msra.mxu0 %v2432
      %2732 = vmatprep.subr.mxu0 %v2441
      %2733 = vmatpush1.msra.mxu0 %v2440
      %2734 = vmatprep.subr.mxu0 %v2449
      %2735 = vmatpush1.msra.mxu0 %v2448
      %2736 = vmatprep.subr.mxu0 %v2457
      %2737 = vmatpush1.msra.mxu0 %v2456
      %2738 = vmatprep.subr.mxu0 %v2465
      %2739 = vmatpush1.msra.mxu0 %v2464
      %2740 = vmatprep.subr.mxu0 %v2473
      %2741 = vmatpush1.msra.mxu0 %v2472
      %2742 = vmatprep.subr.mxu0 %v2481
      %2743 = vmatpush1.msra.mxu0 %v2480
      %2744 = vmatprep.subr.mxu0 %v2489
      %2745 = vmatpush1.msra.mxu0 %v2488
      %2746 = vmatprep.subr.mxu0 %v2497
      %2747 = vmatpush1.msra.mxu0 %v2496
      %2748 = vmatprep.subr.mxu0 %v2505
      %2749 = vmatpush1.msra.mxu0 %v2504
      %2750 = vmatprep.subr.mxu0 %v2513
      %2751 = vmatpush1.msra.mxu0 %v2512
      %2752 = vmatprep.subr.mxu0 %v2521
      %2753 = vmatpush1.msra.mxu0 %v2520
      %2754 = vmatprep.subr.mxu0 %v2529
      %2755 = vmatpush1.msra.mxu0 %v2528
      %2756 = vmatprep.subr.mxu0 %v2537
      %2757 = vmatpush1.msra.mxu0 %v2536
      %2758 = vmatprep.subr.mxu0 %v2545
      %2759 = vmatpush1.msra.mxu0 %v2544
      %2760 = vmatprep.mubr.f32.mxu0 %v2551
      %2761 = vmatmul.mubr.f32.gmra.mrb[0].mxu0 %v2550
      %v2762 = vpop.f32.mrb[0].mxu0
      %v2763 = vadd.f32 0.0, %v2762
      %v2764 = vpop.f32.mrb[0].mxu0
      %v2765 = vadd.f32 0.0, %v2764
      %2766 = vdwg.mxu0
      %2767 = vmatprep.subr.mxu0 %v2299
      %2768 = vmatpush1.msra.mxu0 %v2298
      %2769 = vmatprep.subr.mxu0 %v2307
      %2770 = vmatpush1.msra.mxu0 %v2306
      %2771 = vmatprep.subr.mxu0 %v2315
      %2772 = vmatpush1.msra.mxu0 %v2314
      %2773 = vmatprep.subr.mxu0 %v2323
      %2774 = vmatpush1.msra.mxu0 %v2322
      %2775 = vmatprep.subr.mxu0 %v2331
      %2776 = vmatpush1.msra.mxu0 %v2330
      %2777 = vmatprep.subr.mxu0 %v2339
      %2778 = vmatpush1.msra.mxu0 %v2338
      %2779 = vmatprep.subr.mxu0 %v2347
      %2780 = vmatpush1.msra.mxu0 %v2346
      %2781 = vmatprep.subr.mxu0 %v2355
      %2782 = vmatpush1.msra.mxu0 %v2354
      %2783 = vmatprep.subr.mxu0 %v2363
      %2784 = vmatpush1.msra.mxu0 %v2362
      %2785 = vmatprep.subr.mxu0 %v2371
      %2786 = vmatpush1.msra.mxu0 %v2370
      %2787 = vmatprep.subr.mxu0 %v2379
      %2788 = vmatpush1.msra.mxu0 %v2378
      %2789 = vmatprep.subr.mxu0 %v2387
      %2790 = vmatpush1.msra.mxu0 %v2386
      %2791 = vmatprep.subr.mxu0 %v2395
      %2792 = vmatpush1.msra.mxu0 %v2394
      %2793 = vmatprep.subr.mxu0 %v2403
      %2794 = vmatpush1.msra.mxu0 %v2402
      %2795 = vmatprep.subr.mxu0 %v2411
      %2796 = vmatpush1.msra.mxu0 %v2410
      %2797 = vmatprep.subr.mxu0 %v2419
      %2798 = vmatpush1.msra.mxu0 %v2418
      %2799 = vmatprep.subr.mxu0 %v2427
      %2800 = vmatpush1.msra.mxu0 %v2426
      %2801 = vmatprep.subr.mxu0 %v2435
      %2802 = vmatpush1.msra.mxu0 %v2434
      %2803 = vmatprep.subr.mxu0 %v2443
      %2804 = vmatpush1.msra.mxu0 %v2442
      %2805 = vmatprep.subr.mxu0 %v2451
      %2806 = vmatpush1.msra.mxu0 %v2450
      %2807 = vmatprep.subr.mxu0 %v2459
      %2808 = vmatpush1.msra.mxu0 %v2458
      %2809 = vmatprep.subr.mxu0 %v2467
      %2810 = vmatpush1.msra.mxu0 %v2466
      %2811 = vmatprep.subr.mxu0 %v2475
      %2812 = vmatpush1.msra.mxu0 %v2474
      %2813 = vmatprep.subr.mxu0 %v2483
      %2814 = vmatpush1.msra.mxu0 %v2482
      %2815 = vmatprep.subr.mxu0 %v2491
      %2816 = vmatpush1.msra.mxu0 %v2490
      %2817 = vmatprep.subr.mxu0 %v2499
      %2818 = vmatpush1.msra.mxu0 %v2498
      %2819 = vmatprep.subr.mxu0 %v2507
      %2820 = vmatpush1.msra.mxu0 %v2506
      %2821 = vmatprep.subr.mxu0 %v2515
      %2822 = vmatpush1.msra.mxu0 %v2514
      %2823 = vmatprep.subr.mxu0 %v2523
      %2824 = vmatpush1.msra.mxu0 %v2522
      %2825 = vmatprep.subr.mxu0 %v2531
      %2826 = vmatpush1.msra.mxu0 %v2530
      %2827 = vmatprep.subr.mxu0 %v2539
      %2828 = vmatpush1.msra.mxu0 %v2538
      %2829 = vmatprep.subr.mxu0 %v2547
      %2830 = vmatpush1.msra.mxu0 %v2546
      %2831 = vmatprep.mubr.f32.mxu0 %v2551
      %2832 = vmatmul.mubr.f32.gmra.mrb[0].mxu0 %v2550
      %v2833 = vpop.f32.mrb[0].mxu0
      %v2834 = vadd.f32 0.0, %v2833
      %v2835 = vpop.f32.mrb[0].mxu0
      %v2836 = vadd.f32 0.0, %v2835
      %2837 = vdwg.mxu0
      %v2838 = vadd.f32 %v2283, %v2621
      %v2839 = vadd.f32 %v2284, %v2623
      %v2840 = vadd.f32 %v2285, %v2692
      %v2841 = vadd.f32 %v2286, %v2694
      %v2842 = vadd.f32 %v2287, %v2763
      %v2843 = vadd.f32 %v2288, %v2765
      %v2844 = vadd.f32 %v2289, %v2834
      %v2845 = vadd.f32 %v2290, %v2836
      %2847 = vset.pattern.permute.xlu0 0
      %2848 = vperm.xlu0 %2847, %v283
      %v2849 = vpop.permute.xlu0 %2848
      %v2851 = vadd.f32 %v2838, %v2849
      %v2852 = vadd.f32 %v2839, %v2849
      %v2853 = vadd.f32 %v2840, %v2849
      %v2854 = vadd.f32 %v2841, %v2849
      %v2855 = vadd.f32 %v2842, %v2849
      %v2856 = vadd.f32 %v2843, %v2849
      %v2857 = vadd.f32 %v2844, %v2849
      %v2858 = vadd.f32 %v2845, %v2849
      %v2867 = vcombine.low %v2851, %v2852
      %v2868 = vcombine.low %v2853, %v2854
      %v2869 = vcombine.low %v2855, %v2856
      %v2870 = vcombine.low %v2857, %v2858
      %2875 = vst [vmem:[%s260] sm:$0xff] %v2867
      %2876 = vst [vmem:[%s260 + $0x8] sm:$0xff] %v2868
      %2877 = vst [vmem:[%s260 + $0x10] sm:$0xff] %v2869
      %2878 = vst [vmem:[%s260 + $0x18] sm:$0xff] %v2870
      %p2879 = scmp.lt.s32.totalorder %s21, 3
      %s2880 = scalar_select %p2879, %s21, 3
      %p2881 = scmp.lt.s32.totalorder %s20, 1
      %s2882 = scalar_select %p2881, %s20, 1
      %s2883 = smul.addr %s2882, 8
      %s2884 = smul.addr %s2880, 16
      %s2885 = sadd.s32 %s2883, %s2884
      %s2886 = smul.addr %s2885, 4
      %s2887 = scalar_lea.vmem %s5, %s2886
      // Predicated region
      $region45: #{_forward_impl.1} parent=39 // pred_check
        %p2888 = pneg %p160
      $region46: #{_forward_impl.1} parent=39 // pred_check_branch
        %2890 = sbr.rel (%p2888) target = $region48
      $region47: #{_forward_impl.1} parent=39 // pred_region
        _
      $region48: #{_forward_impl.1} parent=39 // pred_fallthru
        _
    $region40: #{_forward_impl.1} parent=5 // pred_fallthru
      _
    %p2891 = scmp.le.s32.totalorder 2, %s11
    // Predicated region
    $region49: #{_forward_impl.1} parent=5 // pred_check
      %p2892 = pneg %p2891
    $region50: #{_forward_impl.1} parent=5 // pred_check_branch
      %2894 = sbr.rel (%p2892) target = $region52
    $region51: #{_forward_impl.1} parent=5 // pred_region
      %s2895 = ssub.s32 %s11, 2
      // Predicated region
      $region53: #{_forward_impl.1} parent=51 // pred_check
        %p2896 = pneg %p166
      $region54: #{_forward_impl.1} parent=51 // pred_check_branch
        %2898 = sbr.rel (%p2896) target = $region56
      $region55: #{_forward_impl.1} parent=51 // pred_region
        %p2899 = scmp.lt.s32.totalorder %s23, 3
        %s2900 = scalar_select %p2899, %s23, 3
        %p2901 = scmp.lt.s32.totalorder %s22, 1
        %s2902 = scalar_select %p2901, %s22, 1
        %s2903 = smul.addr %s2902, 8
        %s2904 = smul.addr %s2900, 16
        %s2905 = sadd.s32 %s2903, %s2904
        %s2906 = smul.addr %s2905, 4
        %s2907 = scalar_lea.vmem %s5, %s2906
      $region56: #{_forward_impl.1} parent=51 // pred_fallthru
        _
    $region52: #{_forward_impl.1} parent=5 // pred_fallthru
      _
  $region6: #{_forward_impl.1} parent=0 // loop_footer
    %s15 = sadd.s32 1, %s11
  $region7: #{_forward_impl.1} parent=0 // loop_footer_branch
    %10 = sbr.rel target = $region3
  $region8: #{_forward_impl.1} parent=0 // loop_exit
    _

</llo_original>
